<compile_context>
chip_gen: v7x
topology: tpu7x:2x2x1
jax: 0.10.0
libtpu: 0.0.40
codegen_flags: <defaults>
</compile_context>

<pallas_src>
import jax
import jax.numpy as jnp
from jax.experimental import pallas as pl
from jax.experimental.pallas import tpu as pltpu

EPS = 1e-5

# Output rows per depthwise strip.  S=2 keeps the whole strip working set
# (padded input 8 vregs + 2 roll variants 16 vregs + acc 8 vregs) comfortably
# inside the 64-vreg file.  Must divide H.
STRIP_ROWS = 2

# Flip to jnp.bfloat16 on v6e/v7x for the pointwise matmul (bf16-native MXU,
# halves the VMEM read of y); costs ~1e-2 abs error vs the f32 reference, so
# loosen the verification tolerance if you do.  f32 keeps the 1e-3 check tight
# and the tiny 512x128x128 matmul is never the bottleneck here.
PW_MATMUL_DTYPE = jnp.float32


def dws_kernel(x_ref, wdw_ref, wpw_ref, out_ref, dw_ref, z_ref):
    # x_ref  : [N, H, W, C]      NHWC activations (unpadded; halo built per strip)
    # wdw_ref: [9, C]            depthwise 3x3 taps, k = ky*3 + kx
    # wpw_ref: [C, Cout]         pointwise (1x1) weights
    # out_ref: [N, H, W, Cout]
    # dw_ref : [M, C]   VMEM scratch for the depthwise output (strip-major rows)
    # z_ref  : [M, Cout] VMEM scratch for the pointwise output (strip-major rows)
    N, H, W, C = x_ref.shape
    Cout = out_ref.shape[-1]
    M = N * H * W

    S = STRIP_ROWS
    n_strips = H // S
    rows_per_strip = N * S * W
    inv_m = 1.0 / M

    # Hoisted loop invariants (don't rebuild per strip: JAX does not CSE these).
    col = jax.lax.broadcasted_iota(jnp.int32, (W, C), 0)          # col[x, c] = x
    w_taps = [wdw_ref[k, :].astype(jnp.float32) for k in range(9)]  # 9 x (C,)

    # ---- Pass A: depthwise 3x3 per H-strip, register-resident accumulation,
    #      fused BN1 partial sums, exactly one store per output element --------
    s1 = jnp.zeros((1, C), jnp.float32)
    s2 = jnp.zeros((1, C), jnp.float32)
    for si in range(n_strips):
        h0 = si * S
        lo = max(h0 - 1, 0)
        hi = min(h0 + S + 1, H)
        core = x_ref[:, lo:hi].astype(jnp.float32)                # (N, hi-lo, W, C)
        parts = []
        if h0 == 0:                                               # image top halo row
            parts.append(jnp.zeros((N, 1, W, C), jnp.float32))
        parts.append(core)
        if h0 + S == H:                                           # image bottom halo row
            parts.append(jnp.zeros((N, 1, W, C), jnp.float32))
        xs = parts[0] if len(parts) == 1 else jnp.concatenate(parts, axis=1)
        # xs: (N, S+2, W, C); xs[:, j] == input row (h0 - 1 + j), zero outside.

        # W halo as strip-sized sublane rotations (XLU) + edge masks.
        xs3 = xs.reshape(N * (S + 2), W, C)
        v_m1 = jnp.where(col == 0, 0.0,
                         pltpu.roll(xs3, shift=1, axis=1)).reshape(N, S + 2, W, C)
        v_p1 = jnp.where(col == W - 1, 0.0,
                         pltpu.roll(xs3, shift=W - 1, axis=1)).reshape(N, S + 2, W, C)
        variants = (v_m1, xs, v_p1)                               # indexed by dx

        # 9 aligned per-channel FMAs; acc (N, S, W, C) stays in registers.
        acc = None
        for dy in range(3):
            for dx in range(3):
                tap = variants[dx][:, dy:dy + S] * w_taps[dy * 3 + dx]
                acc = tap if acc is None else acc + tap

        flat = acc.reshape(rows_per_strip, C)
        # BN1 partial sums from registers (sublane reduce -> XLU, free slot).
        s1 = s1 + jnp.sum(flat, axis=0, keepdims=True)
        s2 = s2 + jnp.sum(flat * flat, axis=0, keepdims=True)
        dw_ref[si * rows_per_strip:(si + 1) * rows_per_strip, :] = flat

    mean1 = s1 * inv_m
    var1 = jnp.maximum(s2 * inv_m - mean1 * mean1, 0.0)           # guard cancellation
    inv_std1 = jax.lax.rsqrt(var1 + EPS)

    # ---- Pass B: BN1 + ReLU + pointwise 1x1 (MXU) per strip,
    #      fused BN2 partial sums ----------------------------------------------
    wpw = wpw_ref[...].astype(PW_MATMUL_DTYPE)                    # (C, Cout)
    t1 = jnp.zeros((1, Cout), jnp.float32)
    t2 = jnp.zeros((1, Cout), jnp.float32)
    for si in range(n_strips):
        r0 = si * rows_per_strip
        dws = dw_ref[r0:r0 + rows_per_strip, :]
        # relu((a - m) * s) = s * relu(a - m) since s > 0; lane-broadcast multiply,
        # no relayout, no extra matmul on the critical path.
        y = (jnp.maximum(dws - mean1, 0.0) * inv_std1).astype(PW_MATMUL_DTYPE)
        z = jnp.dot(y, wpw, preferred_element_type=jnp.float32)
        t1 = t1 + jnp.sum(z, axis=0, keepdims=True)
        t2 = t2 + jnp.sum(z * z, axis=0, keepdims=True)
        z_ref[r0:r0 + rows_per_strip, :] = z

    mean2 = t1 * inv_m
    var2 = jnp.maximum(t2 * inv_m - mean2 * mean2, 0.0)
    inv_std2 = jax.lax.rsqrt(var2 + EPS)

    # ---- Pass C: BN2 + ReLU, lane-dense NHWC store ----------------------------
    for si in range(n_strips):
        r0 = si * rows_per_strip
        z = z_ref[r0:r0 + rows_per_strip, :]
        out = jnp.maximum(z - mean2, 0.0) * inv_std2
        out_ref[:, si * S:(si + 1) * S, :, :] = (
            out.reshape(N, S, W, Cout).astype(out_ref.dtype))


def depthwise_separable_forward_nhwc(x_nhwc, w_dw, w_pw):
    """Preferred entry point: NHWC in, NHWC out (no boundary transposes).

    x_nhwc: [N, H, W, C]; w_dw: [C, 1, 3, 3]; w_pw: [Cout, C, 1, 1]."""
    N, H, W, C = x_nhwc.shape
    Cout = w_pw.shape[0]
    assert H % STRIP_ROWS == 0, "H must be divisible by STRIP_ROWS"
    M = N * H * W

    # parameter layout glue (tiny, one-time)
    wdw = jnp.transpose(w_dw.reshape(C, 9), (1, 0)).astype(jnp.float32)    # [9, C]
    wpw = jnp.transpose(w_pw[:, :, 0, 0], (1, 0)).astype(jnp.float32)      # [C, Cout]

    # TODO(synk): for much larger N*H*W, switch to an H-strip grid (marked
    # "parallel") with a two-pass BN (per-strip partial sums) so both v7x
    # TensorCores are used, DMA is pipelined, and blocks are sized for v7x's
    # 64 MiB VMEM incl. double-buffering; a single gridless block is fastest
    # at this size.
    return pl.pallas_call(
        dws_kernel,
        out_shape=jax.ShapeDtypeStruct((N, H, W, Cout), jnp.float32),
        scratch_shapes=[pltpu.VMEM((M, C), jnp.float32),      # depthwise output
                        pltpu.VMEM((M, Cout), jnp.float32)],  # pointwise output
    )(x_nhwc, wdw, wpw)


def depthwise_separable_forward(x_nchw, w_dw, w_pw):
    """PyTorch-parity wrapper: NCHW in -> NCHW out.

    The two boundary transposes are XLA relayout passes over HBM; production
    code should call `depthwise_separable_forward_nhwc` directly."""
    # TODO(synk): fold the NCHW->NHWC relayout into the kernel (read (C, H*W)
    # tiles and transpose in VMEM via XLU) if the NCHW path becomes hot.
    x_nhwc = jnp.transpose(x_nchw, (0, 2, 3, 1))
    out_nhwc = depthwise_separable_forward_nhwc(x_nhwc, w_dw, w_pw)
    return jnp.transpose(out_nhwc, (0, 3, 1, 2))


# ------------------ pure-JAX reference for verification ------------------
def reference_forward(x_nchw, w_dw, w_pw):
    dw = jax.lax.conv_general_dilated(
        x_nchw, w_dw, window_strides=(1, 1), padding=((1, 1), (1, 1)),
        dimension_numbers=("NCHW", "OIHW", "NCHW"),
        feature_group_count=x_nchw.shape[1])
    mean = jnp.mean(dw, axis=(0, 2, 3), keepdims=True)
    var = jnp.var(dw, axis=(0, 2, 3), keepdims=True)
    dw = jnp.maximum((dw - mean) * jax.lax.rsqrt(var + EPS), 0.0)
    pw = jax.lax.conv_general_dilated(
        dw, w_pw, window_strides=(1, 1), padding=((0, 0), (0, 0)),
        dimension_numbers=("NCHW", "OIHW", "NCHW"))
    mean2 = jnp.mean(pw, axis=(0, 2, 3), keepdims=True)
    var2 = jnp.var(pw, axis=(0, 2, 3), keepdims=True)
    return jnp.maximum((pw - mean2) * jax.lax.rsqrt(var2 + EPS), 0.0)


if __name__ == "__main__":
    in_channels = 128
    out_channels = 128
    N, H, W = 2, 16, 16

    key = jax.random.PRNGKey(0)
    kx, kdw, kpw = jax.random.split(key, 3)

    # input in PyTorch NCHW convention
    x = jax.random.normal(kx, (N, in_channels, H, W), dtype=jnp.float32)
    # deterministic parameter init (shapes match nn.Conv2d weights, bias=False)
    w_dw = jax.random.normal(kdw, (in_channels, 1, 3, 3), dtype=jnp.float32) * 0.1
    w_pw = jax.random.normal(kpw, (out_channels, in_channels, 1, 1), dtype=jnp.float32) * 0.1

    fwd = jax.jit(depthwise_separable_forward)
    out = jax.block_until_ready(fwd(x, w_dw, w_pw))

    ref = reference_forward(x, w_dw, w_pw)
    assert out.shape == (N, out_channels, H, W)
    max_err = float(jnp.max(jnp.abs(out - ref)))
    assert jnp.allclose(out, ref, atol=1e-3, rtol=1e-3), max_err

    print("KERNEL_OK")
</pallas_src>

<mosaic_0001>
module attributes {stable_mosaic.version = 11 : i64} {
  func.func @dws_kernel(%arg0: memref<2x16x16x128xf32, #tpu.memory_space<vmem>>, %arg1: memref<9x128xf32, #tpu.memory_space<vmem>>, %arg2: memref<128x128xf32, #tpu.memory_space<vmem>>, %arg3: memref<2x16x16x128xf32, #tpu.memory_space<vmem>>, %arg4: memref<512x128xf32, #tpu.memory_space<vmem>>, %arg5: memref<512x128xf32, #tpu.memory_space<vmem>>) attributes {dimension_semantics = [], scalar_prefetch = 0 : i64, scratch_operands = 2 : i64, tpu.core_type = #tpu.core_type<tc>} {
    %0 = tpu.iota {dimensions = array<i32: 0>} : vector<16x128xi32>
    %c0 = arith.constant 0 : index
    %c0_0 = arith.constant 0 : index
    %1 = vector.load %arg1[%c0, %c0_0] : memref<9x128xf32, #tpu.memory_space<vmem>>, vector<1x128xf32>
    %2 = vector.shape_cast %1 : vector<1x128xf32> to vector<128xf32>
    %c1 = arith.constant 1 : index
    %c0_1 = arith.constant 0 : index
    %3 = vector.load %arg1[%c1, %c0_1] : memref<9x128xf32, #tpu.memory_space<vmem>>, vector<1x128xf32>
    %4 = vector.shape_cast %3 : vector<1x128xf32> to vector<128xf32>
    %c2 = arith.constant 2 : index
    %c0_2 = arith.constant 0 : index
    %5 = vector.load %arg1[%c2, %c0_2] : memref<9x128xf32, #tpu.memory_space<vmem>>, vector<1x128xf32>
    %6 = vector.shape_cast %5 : vector<1x128xf32> to vector<128xf32>
    %c3 = arith.constant 3 : index
    %c0_3 = arith.constant 0 : index
    %7 = vector.load %arg1[%c3, %c0_3] : memref<9x128xf32, #tpu.memory_space<vmem>>, vector<1x128xf32>
    %8 = vector.shape_cast %7 : vector<1x128xf32> to vector<128xf32>
    %c4 = arith.constant 4 : index
    %c0_4 = arith.constant 0 : index
    %9 = vector.load %arg1[%c4, %c0_4] : memref<9x128xf32, #tpu.memory_space<vmem>>, vector<1x128xf32>
    %10 = vector.shape_cast %9 : vector<1x128xf32> to vector<128xf32>
    %c5 = arith.constant 5 : index
    %c0_5 = arith.constant 0 : index
    %11 = vector.load %arg1[%c5, %c0_5] : memref<9x128xf32, #tpu.memory_space<vmem>>, vector<1x128xf32>
    %12 = vector.shape_cast %11 : vector<1x128xf32> to vector<128xf32>
    %c6 = arith.constant 6 : index
    %c0_6 = arith.constant 0 : index
    %13 = vector.load %arg1[%c6, %c0_6] : memref<9x128xf32, #tpu.memory_space<vmem>>, vector<1x128xf32>
    %14 = vector.shape_cast %13 : vector<1x128xf32> to vector<128xf32>
    %c7 = arith.constant 7 : index
    %c0_7 = arith.constant 0 : index
    %15 = vector.load %arg1[%c7, %c0_7] : memref<9x128xf32, #tpu.memory_space<vmem>>, vector<1x128xf32>
    %16 = vector.shape_cast %15 : vector<1x128xf32> to vector<128xf32>
    %c8 = arith.constant 8 : index
    %c0_8 = arith.constant 0 : index
    %17 = vector.load %arg1[%c8, %c0_8] : memref<9x128xf32, #tpu.memory_space<vmem>>, vector<1x128xf32>
    %18 = vector.shape_cast %17 : vector<1x128xf32> to vector<128xf32>
    %cst = arith.constant 0.000000e+00 : f32
    %19 = vector.broadcast %cst : f32 to vector<1x128xf32>
    %cst_9 = arith.constant 0.000000e+00 : f32
    %20 = vector.broadcast %cst_9 : f32 to vector<1x128xf32>
    %c0_10 = arith.constant 0 : index
    %c0_11 = arith.constant 0 : index
    %c0_12 = arith.constant 0 : index
    %c0_13 = arith.constant 0 : index
    %21 = vector.load %arg0[%c0_10, %c0_11, %c0_12, %c0_13] : memref<2x16x16x128xf32, #tpu.memory_space<vmem>>, vector<2x3x16x128xf32>
    %cst_14 = arith.constant 0.000000e+00 : f32
    %22 = vector.broadcast %cst_14 : f32 to vector<2x1x16x128xf32>
    %23 = tpu.concatenate %22, %21 in 1 : vector<2x1x16x128xf32>, vector<2x3x16x128xf32> -> vector<2x4x16x128xf32>
    %24 = vector.shape_cast %23 : vector<2x4x16x128xf32> to vector<8x16x128xf32>
    %c0_i32 = arith.constant 0 : i32
    %25 = vector.broadcast %c0_i32 : i32 to vector<16x128xi32>
    %26 = arith.cmpi eq, %0, %25 : vector<16x128xi32>
    %c1_i32 = arith.constant 1 : i32
    %27 = tpu.dynamic_rotate %24 by %c1_i32 dim 1 : vector<8x16x128xf32>, i32 -> vector<8x16x128xf32>
    %cst_15 = arith.constant 0.000000e+00 : f32
    %28 = vector.shape_cast %26 : vector<16x128xi1> to vector<1x16x128xi1>
    %29 = vector.broadcast %28 : vector<1x16x128xi1> to vector<8x16x128xi1>
    %30 = vector.broadcast %cst_15 : f32 to vector<8x16x128xf32>
    %31 = arith.select %29, %30, %27 : vector<8x16x128xi1>, vector<8x16x128xf32>
    %32 = vector.shape_cast %31 : vector<8x16x128xf32> to vector<2x4x16x128xf32>
    %c15_i32 = arith.constant 15 : i32
    %33 = vector.broadcast %c15_i32 : i32 to vector<16x128xi32>
    %34 = arith.cmpi eq, %0, %33 : vector<16x128xi32>
    %c15_i32_16 = arith.constant 15 : i32
    %35 = tpu.dynamic_rotate %24 by %c15_i32_16 dim 1 : vector<8x16x128xf32>, i32 -> vector<8x16x128xf32>
    %cst_17 = arith.constant 0.000000e+00 : f32
    %36 = vector.shape_cast %34 : vector<16x128xi1> to vector<1x16x128xi1>
    %37 = vector.broadcast %36 : vector<1x16x128xi1> to vector<8x16x128xi1>
    %38 = vector.broadcast %cst_17 : f32 to vector<8x16x128xf32>
    %39 = arith.select %37, %38, %35 : vector<8x16x128xi1>, vector<8x16x128xf32>
    %40 = vector.shape_cast %39 : vector<8x16x128xf32> to vector<2x4x16x128xf32>
    %41 = vector.extract_strided_slice %32 {offsets = [0, 0, 0, 0], sizes = [2, 2, 16, 128], strides = [1, 1, 1, 1]} : vector<2x4x16x128xf32> to vector<2x2x16x128xf32>
    %42 = vector.shape_cast %2 : vector<128xf32> to vector<1x1x1x128xf32>
    %43 = vector.broadcast %42 : vector<1x1x1x128xf32> to vector<2x2x16x128xf32>
    %44 = arith.mulf %41, %43 : vector<2x2x16x128xf32>
    %45 = vector.extract_strided_slice %23 {offsets = [0, 0, 0, 0], sizes = [2, 2, 16, 128], strides = [1, 1, 1, 1]} : vector<2x4x16x128xf32> to vector<2x2x16x128xf32>
    %46 = vector.shape_cast %4 : vector<128xf32> to vector<1x1x1x128xf32>
    %47 = vector.broadcast %46 : vector<1x1x1x128xf32> to vector<2x2x16x128xf32>
    %48 = arith.mulf %45, %47 : vector<2x2x16x128xf32>
    %49 = arith.addf %44, %48 : vector<2x2x16x128xf32>
    %50 = vector.extract_strided_slice %40 {offsets = [0, 0, 0, 0], sizes = [2, 2, 16, 128], strides = [1, 1, 1, 1]} : vector<2x4x16x128xf32> to vector<2x2x16x128xf32>
    %51 = vector.shape_cast %6 : vector<128xf32> to vector<1x1x1x128xf32>
    %52 = vector.broadcast %51 : vector<1x1x1x128xf32> to vector<2x2x16x128xf32>
    %53 = arith.mulf %50, %52 : vector<2x2x16x128xf32>
    %54 = arith.addf %49, %53 : vector<2x2x16x128xf32>
    %55 = vector.extract_strided_slice %32 {offsets = [0, 1, 0, 0], sizes = [2, 2, 16, 128], strides = [1, 1, 1, 1]} : vector<2x4x16x128xf32> to vector<2x2x16x128xf32>
    %56 = vector.shape_cast %8 : vector<128xf32> to vector<1x1x1x128xf32>
    %57 = vector.broadcast %56 : vector<1x1x1x128xf32> to vector<2x2x16x128xf32>
    %58 = arith.mulf %55, %57 : vector<2x2x16x128xf32>
    %59 = arith.addf %54, %58 : vector<2x2x16x128xf32>
    %60 = vector.extract_strided_slice %23 {offsets = [0, 1, 0, 0], sizes = [2, 2, 16, 128], strides = [1, 1, 1, 1]} : vector<2x4x16x128xf32> to vector<2x2x16x128xf32>
    %61 = vector.shape_cast %10 : vector<128xf32> to vector<1x1x1x128xf32>
    %62 = vector.broadcast %61 : vector<1x1x1x128xf32> to vector<2x2x16x128xf32>
    %63 = arith.mulf %60, %62 : vector<2x2x16x128xf32>
    %64 = arith.addf %59, %63 : vector<2x2x16x128xf32>
    %65 = vector.extract_strided_slice %40 {offsets = [0, 1, 0, 0], sizes = [2, 2, 16, 128], strides = [1, 1, 1, 1]} : vector<2x4x16x128xf32> to vector<2x2x16x128xf32>
    %66 = vector.shape_cast %12 : vector<128xf32> to vector<1x1x1x128xf32>
    %67 = vector.broadcast %66 : vector<1x1x1x128xf32> to vector<2x2x16x128xf32>
    %68 = arith.mulf %65, %67 : vector<2x2x16x128xf32>
    %69 = arith.addf %64, %68 : vector<2x2x16x128xf32>
    %70 = vector.extract_strided_slice %32 {offsets = [0, 2, 0, 0], sizes = [2, 2, 16, 128], strides = [1, 1, 1, 1]} : vector<2x4x16x128xf32> to vector<2x2x16x128xf32>
    %71 = vector.shape_cast %14 : vector<128xf32> to vector<1x1x1x128xf32>
    %72 = vector.broadcast %71 : vector<1x1x1x128xf32> to vector<2x2x16x128xf32>
    %73 = arith.mulf %70, %72 : vector<2x2x16x128xf32>
    %74 = arith.addf %69, %73 : vector<2x2x16x128xf32>
    %75 = vector.extract_strided_slice %23 {offsets = [0, 2, 0, 0], sizes = [2, 2, 16, 128], strides = [1, 1, 1, 1]} : vector<2x4x16x128xf32> to vector<2x2x16x128xf32>
    %76 = vector.shape_cast %16 : vector<128xf32> to vector<1x1x1x128xf32>
    %77 = vector.broadcast %76 : vector<1x1x1x128xf32> to vector<2x2x16x128xf32>
    %78 = arith.mulf %75, %77 : vector<2x2x16x128xf32>
    %79 = arith.addf %74, %78 : vector<2x2x16x128xf32>
    %80 = vector.extract_strided_slice %40 {offsets = [0, 2, 0, 0], sizes = [2, 2, 16, 128], strides = [1, 1, 1, 1]} : vector<2x4x16x128xf32> to vector<2x2x16x128xf32>
    %81 = vector.shape_cast %18 : vector<128xf32> to vector<1x1x1x128xf32>
    %82 = vector.broadcast %81 : vector<1x1x1x128xf32> to vector<2x2x16x128xf32>
    %83 = arith.mulf %80, %82 : vector<2x2x16x128xf32>
    %84 = arith.addf %79, %83 : vector<2x2x16x128xf32>
    %85 = vector.shape_cast %84 : vector<2x2x16x128xf32> to vector<64x128xf32>
    %cst_18 = arith.constant dense<0.000000e+00> : vector<128xf32>
    %86 = vector.multi_reduction <add>, %85, %cst_18 [0] : vector<64x128xf32> to vector<128xf32>
    %87 = vector.shape_cast %86 : vector<128xf32> to vector<1x128xf32>
    %88 = arith.addf %19, %87 : vector<1x128xf32>
    %89 = arith.mulf %85, %85 : vector<64x128xf32>
    %cst_19 = arith.constant dense<0.000000e+00> : vector<128xf32>
    %90 = vector.multi_reduction <add>, %89, %cst_19 [0] : vector<64x128xf32> to vector<128xf32>
    %91 = vector.shape_cast %90 : vector<128xf32> to vector<1x128xf32>
    %92 = arith.addf %20, %91 : vector<1x128xf32>
    %c0_20 = arith.constant 0 : index
    %c0_21 = arith.constant 0 : index
    %93 = vector.load %arg4[%c0_20, %c0_21] : memref<512x128xf32, #tpu.memory_space<vmem>>, vector<64x128xf32>
    tpu.vector_store %arg4[%c0_20, %c0_21], %85 {strides = array<i32>} : memref<512x128xf32, #tpu.memory_space<vmem>>, vector<64x128xf32>,
    %c0_22 = arith.constant 0 : index
    %c1_23 = arith.constant 1 : index
    %c0_24 = arith.constant 0 : index
    %c0_25 = arith.constant 0 : index
    %94 = vector.load %arg0[%c0_22, %c1_23, %c0_24, %c0_25] : memref<2x16x16x128xf32, #tpu.memory_space<vmem>>, vector<2x4x16x128xf32>
    %95 = vector.shape_cast %94 : vector<2x4x16x128xf32> to vector<8x16x128xf32>
    %c0_i32_26 = arith.constant 0 : i32
    %96 = vector.broadcast %c0_i32_26 : i32 to vector<16x128xi32>
    %97 = arith.cmpi eq, %0, %96 : vector<16x128xi32>
    %c1_i32_27 = arith.constant 1 : i32
    %98 = tpu.dynamic_rotate %95 by %c1_i32_27 dim 1 : vector<8x16x128xf32>, i32 -> vector<8x16x128xf32>
    %cst_28 = arith.constant 0.000000e+00 : f32
    %99 = vector.shape_cast %97 : vector<16x128xi1> to vector<1x16x128xi1>
    %100 = vector.broadcast %99 : vector<1x16x128xi1> to vector<8x16x128xi1>
    %101 = vector.broadcast %cst_28 : f32 to vector<8x16x128xf32>
    %102 = arith.select %100, %101, %98 : vector<8x16x128xi1>, vector<8x16x128xf32>
    %103 = vector.shape_cast %102 : vector<8x16x128xf32> to vector<2x4x16x128xf32>
    %c15_i32_29 = arith.constant 15 : i32
    %104 = vector.broadcast %c15_i32_29 : i32 to vector<16x128xi32>
    %105 = arith.cmpi eq, %0, %104 : vector<16x128xi32>
    %c15_i32_30 = arith.constant 15 : i32
    %106 = tpu.dynamic_rotate %95 by %c15_i32_30 dim 1 : vector<8x16x128xf32>, i32 -> vector<8x16x128xf32>
    %cst_31 = arith.constant 0.000000e+00 : f32
    %107 = vector.shape_cast %105 : vector<16x128xi1> to vector<1x16x128xi1>
    %108 = vector.broadcast %107 : vector<1x16x128xi1> to vector<8x16x128xi1>
    %109 = vector.broadcast %cst_31 : f32 to vector<8x16x128xf32>
    %110 = arith.select %108, %109, %106 : vector<8x16x128xi1>, vector<8x16x128xf32>
    %111 = vector.shape_cast %110 : vector<8x16x128xf32> to vector<2x4x16x128xf32>
    %112 = vector.extract_strided_slice %103 {offsets = [0, 0, 0, 0], sizes = [2, 2, 16, 128], strides = [1, 1, 1, 1]} : vector<2x4x16x128xf32> to vector<2x2x16x128xf32>
    %113 = vector.shape_cast %2 : vector<128xf32> to vector<1x1x1x128xf32>
    %114 = vector.broadcast %113 : vector<1x1x1x128xf32> to vector<2x2x16x128xf32>
    %115 = arith.mulf %112, %114 : vector<2x2x16x128xf32>
    %116 = vector.extract_strided_slice %94 {offsets = [0, 0, 0, 0], sizes = [2, 2, 16, 128], strides = [1, 1, 1, 1]} : vector<2x4x16x128xf32> to vector<2x2x16x128xf32>
    %117 = vector.shape_cast %4 : vector<128xf32> to vector<1x1x1x128xf32>
    %118 = vector.broadcast %117 : vector<1x1x1x128xf32> to vector<2x2x16x128xf32>
    %119 = arith.mulf %116, %118 : vector<2x2x16x128xf32>
    %120 = arith.addf %115, %119 : vector<2x2x16x128xf32>
    %121 = vector.extract_strided_slice %111 {offsets = [0, 0, 0, 0], sizes = [2, 2, 16, 128], strides = [1, 1, 1, 1]} : vector<2x4x16x128xf32> to vector<2x2x16x128xf32>
    %122 = vector.shape_cast %6 : vector<128xf32> to vector<1x1x1x128xf32>
    %123 = vector.broadcast %122 : vector<1x1x1x128xf32> to vector<2x2x16x128xf32>
    %124 = arith.mulf %121, %123 : vector<2x2x16x128xf32>
    %125 = arith.addf %120, %124 : vector<2x2x16x128xf32>
    %126 = vector.extract_strided_slice %103 {offsets = [0, 1, 0, 0], sizes = [2, 2, 16, 128], strides = [1, 1, 1, 1]} : vector<2x4x16x128xf32> to vector<2x2x16x128xf32>
    %127 = vector.shape_cast %8 : vector<128xf32> to vector<1x1x1x128xf32>
    %128 = vector.broadcast %127 : vector<1x1x1x128xf32> to vector<2x2x16x128xf32>
    %129 = arith.mulf %126, %128 : vector<2x2x16x128xf32>
    %130 = arith.addf %125, %129 : vector<2x2x16x128xf32>
    %131 = vector.extract_strided_slice %94 {offsets = [0, 1, 0, 0], sizes = [2, 2, 16, 128], strides = [1, 1, 1, 1]} : vector<2x4x16x128xf32> to vector<2x2x16x128xf32>
    %132 = vector.shape_cast %10 : vector<128xf32> to vector<1x1x1x128xf32>
    %133 = vector.broadcast %132 : vector<1x1x1x128xf32> to vector<2x2x16x128xf32>
    %134 = arith.mulf %131, %133 : vector<2x2x16x128xf32>
    %135 = arith.addf %130, %134 : vector<2x2x16x128xf32>
    %136 = vector.extract_strided_slice %111 {offsets = [0, 1, 0, 0], sizes = [2, 2, 16, 128], strides = [1, 1, 1, 1]} : vector<2x4x16x128xf32> to vector<2x2x16x128xf32>
    %137 = vector.shape_cast %12 : vector<128xf32> to vector<1x1x1x128xf32>
    %138 = vector.broadcast %137 : vector<1x1x1x128xf32> to vector<2x2x16x128xf32>
    %139 = arith.mulf %136, %138 : vector<2x2x16x128xf32>
    %140 = arith.addf %135, %139 : vector<2x2x16x128xf32>
    %141 = vector.extract_strided_slice %103 {offsets = [0, 2, 0, 0], sizes = [2, 2, 16, 128], strides = [1, 1, 1, 1]} : vector<2x4x16x128xf32> to vector<2x2x16x128xf32>
    %142 = vector.shape_cast %14 : vector<128xf32> to vector<1x1x1x128xf32>
    %143 = vector.broadcast %142 : vector<1x1x1x128xf32> to vector<2x2x16x128xf32>
    %144 = arith.mulf %141, %143 : vector<2x2x16x128xf32>
    %145 = arith.addf %140, %144 : vector<2x2x16x128xf32>
    %146 = vector.extract_strided_slice %94 {offsets = [0, 2, 0, 0], sizes = [2, 2, 16, 128], strides = [1, 1, 1, 1]} : vector<2x4x16x128xf32> to vector<2x2x16x128xf32>
    %147 = vector.shape_cast %16 : vector<128xf32> to vector<1x1x1x128xf32>
    %148 = vector.broadcast %147 : vector<1x1x1x128xf32> to vector<2x2x16x128xf32>
    %149 = arith.mulf %146, %148 : vector<2x2x16x128xf32>
    %150 = arith.addf %145, %149 : vector<2x2x16x128xf32>
    %151 = vector.extract_strided_slice %111 {offsets = [0, 2, 0, 0], sizes = [2, 2, 16, 128], strides = [1, 1, 1, 1]} : vector<2x4x16x128xf32> to vector<2x2x16x128xf32>
    %152 = vector.shape_cast %18 : vector<128xf32> to vector<1x1x1x128xf32>
    %153 = vector.broadcast %152 : vector<1x1x1x128xf32> to vector<2x2x16x128xf32>
    %154 = arith.mulf %151, %153 : vector<2x2x16x128xf32>
    %155 = arith.addf %150, %154 : vector<2x2x16x128xf32>
    %156 = vector.shape_cast %155 : vector<2x2x16x128xf32> to vector<64x128xf32>
    %cst_32 = arith.constant dense<0.000000e+00> : vector<128xf32>
    %157 = vector.multi_reduction <add>, %156, %cst_32 [0] : vector<64x128xf32> to vector<128xf32>
    %158 = vector.shape_cast %157 : vector<128xf32> to vector<1x128xf32>
    %159 = arith.addf %88, %158 : vector<1x128xf32>
    %160 = arith.mulf %156, %156 : vector<64x128xf32>
    %cst_33 = arith.constant dense<0.000000e+00> : vector<128xf32>
    %161 = vector.multi_reduction <add>, %160, %cst_33 [0] : vector<64x128xf32> to vector<128xf32>
    %162 = vector.shape_cast %161 : vector<128xf32> to vector<1x128xf32>
    %163 = arith.addf %92, %162 : vector<1x128xf32>
    %c64 = arith.constant 64 : index
    %c0_34 = arith.constant 0 : index
    %164 = vector.load %arg4[%c64, %c0_34] : memref<512x128xf32, #tpu.memory_space<vmem>>, vector<64x128xf32>
    tpu.vector_store %arg4[%c64, %c0_34], %156 {strides = array<i32>} : memref<512x128xf32, #tpu.memory_space<vmem>>, vector<64x128xf32>,
    %c0_35 = arith.constant 0 : index
    %c3_36 = arith.constant 3 : index
    %c0_37 = arith.constant 0 : index
    %c0_38 = arith.constant 0 : index
    %165 = vector.load %arg0[%c0_35, %c3_36, %c0_37, %c0_38] : memref<2x16x16x128xf32, #tpu.memory_space<vmem>>, vector<2x4x16x128xf32>
    %166 = vector.shape_cast %165 : vector<2x4x16x128xf32> to vector<8x16x128xf32>
    %c0_i32_39 = arith.constant 0 : i32
    %167 = vector.broadcast %c0_i32_39 : i32 to vector<16x128xi32>
    %168 = arith.cmpi eq, %0, %167 : vector<16x128xi32>
    %c1_i32_40 = arith.constant 1 : i32
    %169 = tpu.dynamic_rotate %166 by %c1_i32_40 dim 1 : vector<8x16x128xf32>, i32 -> vector<8x16x128xf32>
    %cst_41 = arith.constant 0.000000e+00 : f32
    %170 = vector.shape_cast %168 : vector<16x128xi1> to vector<1x16x128xi1>
    %171 = vector.broadcast %170 : vector<1x16x128xi1> to vector<8x16x128xi1>
    %172 = vector.broadcast %cst_41 : f32 to vector<8x16x128xf32>
    %173 = arith.select %171, %172, %169 : vector<8x16x128xi1>, vector<8x16x128xf32>
    %174 = vector.shape_cast %173 : vector<8x16x128xf32> to vector<2x4x16x128xf32>
    %c15_i32_42 = arith.constant 15 : i32
    %175 = vector.broadcast %c15_i32_42 : i32 to vector<16x128xi32>
    %176 = arith.cmpi eq, %0, %175 : vector<16x128xi32>
    %c15_i32_43 = arith.constant 15 : i32
    %177 = tpu.dynamic_rotate %166 by %c15_i32_43 dim 1 : vector<8x16x128xf32>, i32 -> vector<8x16x128xf32>
    %cst_44 = arith.constant 0.000000e+00 : f32
    %178 = vector.shape_cast %176 : vector<16x128xi1> to vector<1x16x128xi1>
    %179 = vector.broadcast %178 : vector<1x16x128xi1> to vector<8x16x128xi1>
    %180 = vector.broadcast %cst_44 : f32 to vector<8x16x128xf32>
    %181 = arith.select %179, %180, %177 : vector<8x16x128xi1>, vector<8x16x128xf32>
    %182 = vector.shape_cast %181 : vector<8x16x128xf32> to vector<2x4x16x128xf32>
    %183 = vector.extract_strided_slice %174 {offsets = [0, 0, 0, 0], sizes = [2, 2, 16, 128], strides = [1, 1, 1, 1]} : vector<2x4x16x128xf32> to vector<2x2x16x128xf32>
    %184 = vector.shape_cast %2 : vector<128xf32> to vector<1x1x1x128xf32>
    %185 = vector.broadcast %184 : vector<1x1x1x128xf32> to vector<2x2x16x128xf32>
    %186 = arith.mulf %183, %185 : vector<2x2x16x128xf32>
    %187 = vector.extract_strided_slice %165 {offsets = [0, 0, 0, 0], sizes = [2, 2, 16, 128], strides = [1, 1, 1, 1]} : vector<2x4x16x128xf32> to vector<2x2x16x128xf32>
    %188 = vector.shape_cast %4 : vector<128xf32> to vector<1x1x1x128xf32>
    %189 = vector.broadcast %188 : vector<1x1x1x128xf32> to vector<2x2x16x128xf32>
    %190 = arith.mulf %187, %189 : vector<2x2x16x128xf32>
    %191 = arith.addf %186, %190 : vector<2x2x16x128xf32>
    %192 = vector.extract_strided_slice %182 {offsets = [0, 0, 0, 0], sizes = [2, 2, 16, 128], strides = [1, 1, 1, 1]} : vector<2x4x16x128xf32> to vector<2x2x16x128xf32>
    %193 = vector.shape_cast %6 : vector<128xf32> to vector<1x1x1x128xf32>
    %194 = vector.broadcast %193 : vector<1x1x1x128xf32> to vector<2x2x16x128xf32>
    %195 = arith.mulf %192, %194 : vector<2x2x16x128xf32>
    %196 = arith.addf %191, %195 : vector<2x2x16x128xf32>
    %197 = vector.extract_strided_slice %174 {offsets = [0, 1, 0, 0], sizes = [2, 2, 16, 128], strides = [1, 1, 1, 1]} : vector<2x4x16x128xf32> to vector<2x2x16x128xf32>
    %198 = vector.shape_cast %8 : vector<128xf32> to vector<1x1x1x128xf32>
    %199 = vector.broadcast %198 : vector<1x1x1x128xf32> to vector<2x2x16x128xf32>
    %200 = arith.mulf %197, %199 : vector<2x2x16x128xf32>
    %201 = arith.addf %196, %200 : vector<2x2x16x128xf32>
    %202 = vector.extract_strided_slice %165 {offsets = [0, 1, 0, 0], sizes = [2, 2, 16, 128], strides = [1, 1, 1, 1]} : vector<2x4x16x128xf32> to vector<2x2x16x128xf32>
    %203 = vector.shape_cast %10 : vector<128xf32> to vector<1x1x1x128xf32>
    %204 = vector.broadcast %203 : vector<1x1x1x128xf32> to vector<2x2x16x128xf32>
    %205 = arith.mulf %202, %204 : vector<2x2x16x128xf32>
    %206 = arith.addf %201, %205 : vector<2x2x16x128xf32>
    %207 = vector.extract_strided_slice %182 {offsets = [0, 1, 0, 0], sizes = [2, 2, 16, 128], strides = [1, 1, 1, 1]} : vector<2x4x16x128xf32> to vector<2x2x16x128xf32>
    %208 = vector.shape_cast %12 : vector<128xf32> to vector<1x1x1x128xf32>
    %209 = vector.broadcast %208 : vector<1x1x1x128xf32> to vector<2x2x16x128xf32>
    %210 = arith.mulf %207, %209 : vector<2x2x16x128xf32>
    %211 = arith.addf %206, %210 : vector<2x2x16x128xf32>
    %212 = vector.extract_strided_slice %174 {offsets = [0, 2, 0, 0], sizes = [2, 2, 16, 128], strides = [1, 1, 1, 1]} : vector<2x4x16x128xf32> to vector<2x2x16x128xf32>
    %213 = vector.shape_cast %14 : vector<128xf32> to vector<1x1x1x128xf32>
    %214 = vector.broadcast %213 : vector<1x1x1x128xf32> to vector<2x2x16x128xf32>
    %215 = arith.mulf %212, %214 : vector<2x2x16x128xf32>
    %216 = arith.addf %211, %215 : vector<2x2x16x128xf32>
    %217 = vector.extract_strided_slice %165 {offsets = [0, 2, 0, 0], sizes = [2, 2, 16, 128], strides = [1, 1, 1, 1]} : vector<2x4x16x128xf32> to vector<2x2x16x128xf32>
    %218 = vector.shape_cast %16 : vector<128xf32> to vector<1x1x1x128xf32>
    %219 = vector.broadcast %218 : vector<1x1x1x128xf32> to vector<2x2x16x128xf32>
    %220 = arith.mulf %217, %219 : vector<2x2x16x128xf32>
    %221 = arith.addf %216, %220 : vector<2x2x16x128xf32>
    %222 = vector.extract_strided_slice %182 {offsets = [0, 2, 0, 0], sizes = [2, 2, 16, 128], strides = [1, 1, 1, 1]} : vector<2x4x16x128xf32> to vector<2x2x16x128xf32>
    %223 = vector.shape_cast %18 : vector<128xf32> to vector<1x1x1x128xf32>
    %224 = vector.broadcast %223 : vector<1x1x1x128xf32> to vector<2x2x16x128xf32>
    %225 = arith.mulf %222, %224 : vector<2x2x16x128xf32>
    %226 = arith.addf %221, %225 : vector<2x2x16x128xf32>
    %227 = vector.shape_cast %226 : vector<2x2x16x128xf32> to vector<64x128xf32>
    %cst_45 = arith.constant dense<0.000000e+00> : vector<128xf32>
    %228 = vector.multi_reduction <add>, %227, %cst_45 [0] : vector<64x128xf32> to vector<128xf32>
    %229 = vector.shape_cast %228 : vector<128xf32> to vector<1x128xf32>
    %230 = arith.addf %159, %229 : vector<1x128xf32>
    %231 = arith.mulf %227, %227 : vector<64x128xf32>
    %cst_46 = arith.constant dense<0.000000e+00> : vector<128xf32>
    %232 = vector.multi_reduction <add>, %231, %cst_46 [0] : vector<64x128xf32> to vector<128xf32>
    %233 = vector.shape_cast %232 : vector<128xf32> to vector<1x128xf32>
    %234 = arith.addf %163, %233 : vector<1x128xf32>
    %c128 = arith.constant 128 : index
    %c0_47 = arith.constant 0 : index
    %235 = vector.load %arg4[%c128, %c0_47] : memref<512x128xf32, #tpu.memory_space<vmem>>, vector<64x128xf32>
    tpu.vector_store %arg4[%c128, %c0_47], %227 {strides = array<i32>} : memref<512x128xf32, #tpu.memory_space<vmem>>, vector<64x128xf32>,
    %c0_48 = arith.constant 0 : index
    %c5_49 = arith.constant 5 : index
    %c0_50 = arith.constant 0 : index
    %c0_51 = arith.constant 0 : index
    %236 = vector.load %arg0[%c0_48, %c5_49, %c0_50, %c0_51] : memref<2x16x16x128xf32, #tpu.memory_space<vmem>>, vector<2x4x16x128xf32>
    %237 = vector.shape_cast %236 : vector<2x4x16x128xf32> to vector<8x16x128xf32>
    %c0_i32_52 = arith.constant 0 : i32
    %238 = vector.broadcast %c0_i32_52 : i32 to vector<16x128xi32>
    %239 = arith.cmpi eq, %0, %238 : vector<16x128xi32>
    %c1_i32_53 = arith.constant 1 : i32
    %240 = tpu.dynamic_rotate %237 by %c1_i32_53 dim 1 : vector<8x16x128xf32>, i32 -> vector<8x16x128xf32>
    %cst_54 = arith.constant 0.000000e+00 : f32
    %241 = vector.shape_cast %239 : vector<16x128xi1> to vector<1x16x128xi1>
    %242 = vector.broadcast %241 : vector<1x16x128xi1> to vector<8x16x128xi1>
    %243 = vector.broadcast %cst_54 : f32 to vector<8x16x128xf32>
    %244 = arith.select %242, %243, %240 : vector<8x16x128xi1>, vector<8x16x128xf32>
    %245 = vector.shape_cast %244 : vector<8x16x128xf32> to vector<2x4x16x128xf32>
    %c15_i32_55 = arith.constant 15 : i32
    %246 = vector.broadcast %c15_i32_55 : i32 to vector<16x128xi32>
    %247 = arith.cmpi eq, %0, %246 : vector<16x128xi32>
    %c15_i32_56 = arith.constant 15 : i32
    %248 = tpu.dynamic_rotate %237 by %c15_i32_56 dim 1 : vector<8x16x128xf32>, i32 -> vector<8x16x128xf32>
    %cst_57 = arith.constant 0.000000e+00 : f32
    %249 = vector.shape_cast %247 : vector<16x128xi1> to vector<1x16x128xi1>
    %250 = vector.broadcast %249 : vector<1x16x128xi1> to vector<8x16x128xi1>
    %251 = vector.broadcast %cst_57 : f32 to vector<8x16x128xf32>
    %252 = arith.select %250, %251, %248 : vector<8x16x128xi1>, vector<8x16x128xf32>
    %253 = vector.shape_cast %252 : vector<8x16x128xf32> to vector<2x4x16x128xf32>
    %254 = vector.extract_strided_slice %245 {offsets = [0, 0, 0, 0], sizes = [2, 2, 16, 128], strides = [1, 1, 1, 1]} : vector<2x4x16x128xf32> to vector<2x2x16x128xf32>
    %255 = vector.shape_cast %2 : vector<128xf32> to vector<1x1x1x128xf32>
    %256 = vector.broadcast %255 : vector<1x1x1x128xf32> to vector<2x2x16x128xf32>
    %257 = arith.mulf %254, %256 : vector<2x2x16x128xf32>
    %258 = vector.extract_strided_slice %236 {offsets = [0, 0, 0, 0], sizes = [2, 2, 16, 128], strides = [1, 1, 1, 1]} : vector<2x4x16x128xf32> to vector<2x2x16x128xf32>
    %259 = vector.shape_cast %4 : vector<128xf32> to vector<1x1x1x128xf32>
    %260 = vector.broadcast %259 : vector<1x1x1x128xf32> to vector<2x2x16x128xf32>
    %261 = arith.mulf %258, %260 : vector<2x2x16x128xf32>
    %262 = arith.addf %257, %261 : vector<2x2x16x128xf32>
    %263 = vector.extract_strided_slice %253 {offsets = [0, 0, 0, 0], sizes = [2, 2, 16, 128], strides = [1, 1, 1, 1]} : vector<2x4x16x128xf32> to vector<2x2x16x128xf32>
    %264 = vector.shape_cast %6 : vector<128xf32> to vector<1x1x1x128xf32>
    %265 = vector.broadcast %264 : vector<1x1x1x128xf32> to vector<2x2x16x128xf32>
    %266 = arith.mulf %263, %265 : vector<2x2x16x128xf32>
    %267 = arith.addf %262, %266 : vector<2x2x16x128xf32>
    %268 = vector.extract_strided_slice %245 {offsets = [0, 1, 0, 0], sizes = [2, 2, 16, 128], strides = [1, 1, 1, 1]} : vector<2x4x16x128xf32> to vector<2x2x16x128xf32>
    %269 = vector.shape_cast %8 : vector<128xf32> to vector<1x1x1x128xf32>
    %270 = vector.broadcast %269 : vector<1x1x1x128xf32> to vector<2x2x16x128xf32>
    %271 = arith.mulf %268, %270 : vector<2x2x16x128xf32>
    %272 = arith.addf %267, %271 : vector<2x2x16x128xf32>
    %273 = vector.extract_strided_slice %236 {offsets = [0, 1, 0, 0], sizes = [2, 2, 16, 128], strides = [1, 1, 1, 1]} : vector<2x4x16x128xf32> to vector<2x2x16x128xf32>
    %274 = vector.shape_cast %10 : vector<128xf32> to vector<1x1x1x128xf32>
    %275 = vector.broadcast %274 : vector<1x1x1x128xf32> to vector<2x2x16x128xf32>
    %276 = arith.mulf %273, %275 : vector<2x2x16x128xf32>
    %277 = arith.addf %272, %276 : vector<2x2x16x128xf32>
    %278 = vector.extract_strided_slice %253 {offsets = [0, 1, 0, 0], sizes = [2, 2, 16, 128], strides = [1, 1, 1, 1]} : vector<2x4x16x128xf32> to vector<2x2x16x128xf32>
    %279 = vector.shape_cast %12 : vector<128xf32> to vector<1x1x1x128xf32>
    %280 = vector.broadcast %279 : vector<1x1x1x128xf32> to vector<2x2x16x128xf32>
    %281 = arith.mulf %278, %280 : vector<2x2x16x128xf32>
    %282 = arith.addf %277, %281 : vector<2x2x16x128xf32>
    %283 = vector.extract_strided_slice %245 {offsets = [0, 2, 0, 0], sizes = [2, 2, 16, 128], strides = [1, 1, 1, 1]} : vector<2x4x16x128xf32> to vector<2x2x16x128xf32>
    %284 = vector.shape_cast %14 : vector<128xf32> to vector<1x1x1x128xf32>
    %285 = vector.broadcast %284 : vector<1x1x1x128xf32> to vector<2x2x16x128xf32>
    %286 = arith.mulf %283, %285 : vector<2x2x16x128xf32>
    %287 = arith.addf %282, %286 : vector<2x2x16x128xf32>
    %288 = vector.extract_strided_slice %236 {offsets = [0, 2, 0, 0], sizes = [2, 2, 16, 128], strides = [1, 1, 1, 1]} : vector<2x4x16x128xf32> to vector<2x2x16x128xf32>
    %289 = vector.shape_cast %16 : vector<128xf32> to vector<1x1x1x128xf32>
    %290 = vector.broadcast %289 : vector<1x1x1x128xf32> to vector<2x2x16x128xf32>
    %291 = arith.mulf %288, %290 : vector<2x2x16x128xf32>
    %292 = arith.addf %287, %291 : vector<2x2x16x128xf32>
    %293 = vector.extract_strided_slice %253 {offsets = [0, 2, 0, 0], sizes = [2, 2, 16, 128], strides = [1, 1, 1, 1]} : vector<2x4x16x128xf32> to vector<2x2x16x128xf32>
    %294 = vector.shape_cast %18 : vector<128xf32> to vector<1x1x1x128xf32>
    %295 = vector.broadcast %294 : vector<1x1x1x128xf32> to vector<2x2x16x128xf32>
    %296 = arith.mulf %293, %295 : vector<2x2x16x128xf32>
    %297 = arith.addf %292, %296 : vector<2x2x16x128xf32>
    %298 = vector.shape_cast %297 : vector<2x2x16x128xf32> to vector<64x128xf32>
    %cst_58 = arith.constant dense<0.000000e+00> : vector<128xf32>
    %299 = vector.multi_reduction <add>, %298, %cst_58 [0] : vector<64x128xf32> to vector<128xf32>
    %300 = vector.shape_cast %299 : vector<128xf32> to vector<1x128xf32>
    %301 = arith.addf %230, %300 : vector<1x128xf32>
    %302 = arith.mulf %298, %298 : vector<64x128xf32>
    %cst_59 = arith.constant dense<0.000000e+00> : vector<128xf32>
    %303 = vector.multi_reduction <add>, %302, %cst_59 [0] : vector<64x128xf32> to vector<128xf32>
    %304 = vector.shape_cast %303 : vector<128xf32> to vector<1x128xf32>
    %305 = arith.addf %234, %304 : vector<1x128xf32>
    %c192 = arith.constant 192 : index
    %c0_60 = arith.constant 0 : index
    %306 = vector.load %arg4[%c192, %c0_60] : memref<512x128xf32, #tpu.memory_space<vmem>>, vector<64x128xf32>
    tpu.vector_store %arg4[%c192, %c0_60], %298 {strides = array<i32>} : memref<512x128xf32, #tpu.memory_space<vmem>>, vector<64x128xf32>,
    %c0_61 = arith.constant 0 : index
    %c7_62 = arith.constant 7 : index
    %c0_63 = arith.constant 0 : index
    %c0_64 = arith.constant 0 : index
    %307 = vector.load %arg0[%c0_61, %c7_62, %c0_63, %c0_64] : memref<2x16x16x128xf32, #tpu.memory_space<vmem>>, vector<2x4x16x128xf32>
    %308 = vector.shape_cast %307 : vector<2x4x16x128xf32> to vector<8x16x128xf32>
    %c0_i32_65 = arith.constant 0 : i32
    %309 = vector.broadcast %c0_i32_65 : i32 to vector<16x128xi32>
    %310 = arith.cmpi eq, %0, %309 : vector<16x128xi32>
    %c1_i32_66 = arith.constant 1 : i32
    %311 = tpu.dynamic_rotate %308 by %c1_i32_66 dim 1 : vector<8x16x128xf32>, i32 -> vector<8x16x128xf32>
    %cst_67 = arith.constant 0.000000e+00 : f32
    %312 = vector.shape_cast %310 : vector<16x128xi1> to vector<1x16x128xi1>
    %313 = vector.broadcast %312 : vector<1x16x128xi1> to vector<8x16x128xi1>
    %314 = vector.broadcast %cst_67 : f32 to vector<8x16x128xf32>
    %315 = arith.select %313, %314, %311 : vector<8x16x128xi1>, vector<8x16x128xf32>
    %316 = vector.shape_cast %315 : vector<8x16x128xf32> to vector<2x4x16x128xf32>
    %c15_i32_68 = arith.constant 15 : i32
    %317 = vector.broadcast %c15_i32_68 : i32 to vector<16x128xi32>
    %318 = arith.cmpi eq, %0, %317 : vector<16x128xi32>
    %c15_i32_69 = arith.constant 15 : i32
    %319 = tpu.dynamic_rotate %308 by %c15_i32_69 dim 1 : vector<8x16x128xf32>, i32 -> vector<8x16x128xf32>
    %cst_70 = arith.constant 0.000000e+00 : f32
    %320 = vector.shape_cast %318 : vector<16x128xi1> to vector<1x16x128xi1>
    %321 = vector.broadcast %320 : vector<1x16x128xi1> to vector<8x16x128xi1>
    %322 = vector.broadcast %cst_70 : f32 to vector<8x16x128xf32>
    %323 = arith.select %321, %322, %319 : vector<8x16x128xi1>, vector<8x16x128xf32>
    %324 = vector.shape_cast %323 : vector<8x16x128xf32> to vector<2x4x16x128xf32>
    %325 = vector.extract_strided_slice %316 {offsets = [0, 0, 0, 0], sizes = [2, 2, 16, 128], strides = [1, 1, 1, 1]} : vector<2x4x16x128xf32> to vector<2x2x16x128xf32>
    %326 = vector.shape_cast %2 : vector<128xf32> to vector<1x1x1x128xf32>
    %327 = vector.broadcast %326 : vector<1x1x1x128xf32> to vector<2x2x16x128xf32>
    %328 = arith.mulf %325, %327 : vector<2x2x16x128xf32>
    %329 = vector.extract_strided_slice %307 {offsets = [0, 0, 0, 0], sizes = [2, 2, 16, 128], strides = [1, 1, 1, 1]} : vector<2x4x16x128xf32> to vector<2x2x16x128xf32>
    %330 = vector.shape_cast %4 : vector<128xf32> to vector<1x1x1x128xf32>
    %331 = vector.broadcast %330 : vector<1x1x1x128xf32> to vector<2x2x16x128xf32>
    %332 = arith.mulf %329, %331 : vector<2x2x16x128xf32>
    %333 = arith.addf %328, %332 : vector<2x2x16x128xf32>
    %334 = vector.extract_strided_slice %324 {offsets = [0, 0, 0, 0], sizes = [2, 2, 16, 128], strides = [1, 1, 1, 1]} : vector<2x4x16x128xf32> to vector<2x2x16x128xf32>
    %335 = vector.shape_cast %6 : vector<128xf32> to vector<1x1x1x128xf32>
    %336 = vector.broadcast %335 : vector<1x1x1x128xf32> to vector<2x2x16x128xf32>
    %337 = arith.mulf %334, %336 : vector<2x2x16x128xf32>
    %338 = arith.addf %333, %337 : vector<2x2x16x128xf32>
    %339 = vector.extract_strided_slice %316 {offsets = [0, 1, 0, 0], sizes = [2, 2, 16, 128], strides = [1, 1, 1, 1]} : vector<2x4x16x128xf32> to vector<2x2x16x128xf32>
    %340 = vector.shape_cast %8 : vector<128xf32> to vector<1x1x1x128xf32>
    %341 = vector.broadcast %340 : vector<1x1x1x128xf32> to vector<2x2x16x128xf32>
    %342 = arith.mulf %339, %341 : vector<2x2x16x128xf32>
    %343 = arith.addf %338, %342 : vector<2x2x16x128xf32>
    %344 = vector.extract_strided_slice %307 {offsets = [0, 1, 0, 0], sizes = [2, 2, 16, 128], strides = [1, 1, 1, 1]} : vector<2x4x16x128xf32> to vector<2x2x16x128xf32>
    %345 = vector.shape_cast %10 : vector<128xf32> to vector<1x1x1x128xf32>
    %346 = vector.broadcast %345 : vector<1x1x1x128xf32> to vector<2x2x16x128xf32>
    %347 = arith.mulf %344, %346 : vector<2x2x16x128xf32>
    %348 = arith.addf %343, %347 : vector<2x2x16x128xf32>
    %349 = vector.extract_strided_slice %324 {offsets = [0, 1, 0, 0], sizes = [2, 2, 16, 128], strides = [1, 1, 1, 1]} : vector<2x4x16x128xf32> to vector<2x2x16x128xf32>
    %350 = vector.shape_cast %12 : vector<128xf32> to vector<1x1x1x128xf32>
    %351 = vector.broadcast %350 : vector<1x1x1x128xf32> to vector<2x2x16x128xf32>
    %352 = arith.mulf %349, %351 : vector<2x2x16x128xf32>
    %353 = arith.addf %348, %352 : vector<2x2x16x128xf32>
    %354 = vector.extract_strided_slice %316 {offsets = [0, 2, 0, 0], sizes = [2, 2, 16, 128], strides = [1, 1, 1, 1]} : vector<2x4x16x128xf32> to vector<2x2x16x128xf32>
    %355 = vector.shape_cast %14 : vector<128xf32> to vector<1x1x1x128xf32>
    %356 = vector.broadcast %355 : vector<1x1x1x128xf32> to vector<2x2x16x128xf32>
    %357 = arith.mulf %354, %356 : vector<2x2x16x128xf32>
    %358 = arith.addf %353, %357 : vector<2x2x16x128xf32>
    %359 = vector.extract_strided_slice %307 {offsets = [0, 2, 0, 0], sizes = [2, 2, 16, 128], strides = [1, 1, 1, 1]} : vector<2x4x16x128xf32> to vector<2x2x16x128xf32>
    %360 = vector.shape_cast %16 : vector<128xf32> to vector<1x1x1x128xf32>
    %361 = vector.broadcast %360 : vector<1x1x1x128xf32> to vector<2x2x16x128xf32>
    %362 = arith.mulf %359, %361 : vector<2x2x16x128xf32>
    %363 = arith.addf %358, %362 : vector<2x2x16x128xf32>
    %364 = vector.extract_strided_slice %324 {offsets = [0, 2, 0, 0], sizes = [2, 2, 16, 128], strides = [1, 1, 1, 1]} : vector<2x4x16x128xf32> to vector<2x2x16x128xf32>
    %365 = vector.shape_cast %18 : vector<128xf32> to vector<1x1x1x128xf32>
    %366 = vector.broadcast %365 : vector<1x1x1x128xf32> to vector<2x2x16x128xf32>
    %367 = arith.mulf %364, %366 : vector<2x2x16x128xf32>
    %368 = arith.addf %363, %367 : vector<2x2x16x128xf32>
    %369 = vector.shape_cast %368 : vector<2x2x16x128xf32> to vector<64x128xf32>
    %cst_71 = arith.constant dense<0.000000e+00> : vector<128xf32>
    %370 = vector.multi_reduction <add>, %369, %cst_71 [0] : vector<64x128xf32> to vector<128xf32>
    %371 = vector.shape_cast %370 : vector<128xf32> to vector<1x128xf32>
    %372 = arith.addf %301, %371 : vector<1x128xf32>
    %373 = arith.mulf %369, %369 : vector<64x128xf32>
    %cst_72 = arith.constant dense<0.000000e+00> : vector<128xf32>
    %374 = vector.multi_reduction <add>, %373, %cst_72 [0] : vector<64x128xf32> to vector<128xf32>
    %375 = vector.shape_cast %374 : vector<128xf32> to vector<1x128xf32>
    %376 = arith.addf %305, %375 : vector<1x128xf32>
    %c256 = arith.constant 256 : index
    %c0_73 = arith.constant 0 : index
    %377 = vector.load %arg4[%c256, %c0_73] : memref<512x128xf32, #tpu.memory_space<vmem>>, vector<64x128xf32>
    tpu.vector_store %arg4[%c256, %c0_73], %369 {strides = array<i32>} : memref<512x128xf32, #tpu.memory_space<vmem>>, vector<64x128xf32>,
    %c0_74 = arith.constant 0 : index
    %c9 = arith.constant 9 : index
    %c0_75 = arith.constant 0 : index
    %c0_76 = arith.constant 0 : index
    %378 = vector.load %arg0[%c0_74, %c9, %c0_75, %c0_76] : memref<2x16x16x128xf32, #tpu.memory_space<vmem>>, vector<2x4x16x128xf32>
    %379 = vector.shape_cast %378 : vector<2x4x16x128xf32> to vector<8x16x128xf32>
    %c0_i32_77 = arith.constant 0 : i32
    %380 = vector.broadcast %c0_i32_77 : i32 to vector<16x128xi32>
    %381 = arith.cmpi eq, %0, %380 : vector<16x128xi32>
    %c1_i32_78 = arith.constant 1 : i32
    %382 = tpu.dynamic_rotate %379 by %c1_i32_78 dim 1 : vector<8x16x128xf32>, i32 -> vector<8x16x128xf32>
    %cst_79 = arith.constant 0.000000e+00 : f32
    %383 = vector.shape_cast %381 : vector<16x128xi1> to vector<1x16x128xi1>
    %384 = vector.broadcast %383 : vector<1x16x128xi1> to vector<8x16x128xi1>
    %385 = vector.broadcast %cst_79 : f32 to vector<8x16x128xf32>
    %386 = arith.select %384, %385, %382 : vector<8x16x128xi1>, vector<8x16x128xf32>
    %387 = vector.shape_cast %386 : vector<8x16x128xf32> to vector<2x4x16x128xf32>
    %c15_i32_80 = arith.constant 15 : i32
    %388 = vector.broadcast %c15_i32_80 : i32 to vector<16x128xi32>
    %389 = arith.cmpi eq, %0, %388 : vector<16x128xi32>
    %c15_i32_81 = arith.constant 15 : i32
    %390 = tpu.dynamic_rotate %379 by %c15_i32_81 dim 1 : vector<8x16x128xf32>, i32 -> vector<8x16x128xf32>
    %cst_82 = arith.constant 0.000000e+00 : f32
    %391 = vector.shape_cast %389 : vector<16x128xi1> to vector<1x16x128xi1>
    %392 = vector.broadcast %391 : vector<1x16x128xi1> to vector<8x16x128xi1>
    %393 = vector.broadcast %cst_82 : f32 to vector<8x16x128xf32>
    %394 = arith.select %392, %393, %390 : vector<8x16x128xi1>, vector<8x16x128xf32>
    %395 = vector.shape_cast %394 : vector<8x16x128xf32> to vector<2x4x16x128xf32>
    %396 = vector.extract_strided_slice %387 {offsets = [0, 0, 0, 0], sizes = [2, 2, 16, 128], strides = [1, 1, 1, 1]} : vector<2x4x16x128xf32> to vector<2x2x16x128xf32>
    %397 = vector.shape_cast %2 : vector<128xf32> to vector<1x1x1x128xf32>
    %398 = vector.broadcast %397 : vector<1x1x1x128xf32> to vector<2x2x16x128xf32>
    %399 = arith.mulf %396, %398 : vector<2x2x16x128xf32>
    %400 = vector.extract_strided_slice %378 {offsets = [0, 0, 0, 0], sizes = [2, 2, 16, 128], strides = [1, 1, 1, 1]} : vector<2x4x16x128xf32> to vector<2x2x16x128xf32>
    %401 = vector.shape_cast %4 : vector<128xf32> to vector<1x1x1x128xf32>
    %402 = vector.broadcast %401 : vector<1x1x1x128xf32> to vector<2x2x16x128xf32>
    %403 = arith.mulf %400, %402 : vector<2x2x16x128xf32>
    %404 = arith.addf %399, %403 : vector<2x2x16x128xf32>
    %405 = vector.extract_strided_slice %395 {offsets = [0, 0, 0, 0], sizes = [2, 2, 16, 128], strides = [1, 1, 1, 1]} : vector<2x4x16x128xf32> to vector<2x2x16x128xf32>
    %406 = vector.shape_cast %6 : vector<128xf32> to vector<1x1x1x128xf32>
    %407 = vector.broadcast %406 : vector<1x1x1x128xf32> to vector<2x2x16x128xf32>
    %408 = arith.mulf %405, %407 : vector<2x2x16x128xf32>
    %409 = arith.addf %404, %408 : vector<2x2x16x128xf32>
    %410 = vector.extract_strided_slice %387 {offsets = [0, 1, 0, 0], sizes = [2, 2, 16, 128], strides = [1, 1, 1, 1]} : vector<2x4x16x128xf32> to vector<2x2x16x128xf32>
    %411 = vector.shape_cast %8 : vector<128xf32> to vector<1x1x1x128xf32>
    %412 = vector.broadcast %411 : vector<1x1x1x128xf32> to vector<2x2x16x128xf32>
    %413 = arith.mulf %410, %412 : vector<2x2x16x128xf32>
    %414 = arith.addf %409, %413 : vector<2x2x16x128xf32>
    %415 = vector.extract_strided_slice %378 {offsets = [0, 1, 0, 0], sizes = [2, 2, 16, 128], strides = [1, 1, 1, 1]} : vector<2x4x16x128xf32> to vector<2x2x16x128xf32>
    %416 = vector.shape_cast %10 : vector<128xf32> to vector<1x1x1x128xf32>
    %417 = vector.broadcast %416 : vector<1x1x1x128xf32> to vector<2x2x16x128xf32>
    %418 = arith.mulf %415, %417 : vector<2x2x16x128xf32>
    %419 = arith.addf %414, %418 : vector<2x2x16x128xf32>
    %420 = vector.extract_strided_slice %395 {offsets = [0, 1, 0, 0], sizes = [2, 2, 16, 128], strides = [1, 1, 1, 1]} : vector<2x4x16x128xf32> to vector<2x2x16x128xf32>
    %421 = vector.shape_cast %12 : vector<128xf32> to vector<1x1x1x128xf32>
    %422 = vector.broadcast %421 : vector<1x1x1x128xf32> to vector<2x2x16x128xf32>
    %423 = arith.mulf %420, %422 : vector<2x2x16x128xf32>
    %424 = arith.addf %419, %423 : vector<2x2x16x128xf32>
    %425 = vector.extract_strided_slice %387 {offsets = [0, 2, 0, 0], sizes = [2, 2, 16, 128], strides = [1, 1, 1, 1]} : vector<2x4x16x128xf32> to vector<2x2x16x128xf32>
    %426 = vector.shape_cast %14 : vector<128xf32> to vector<1x1x1x128xf32>
    %427 = vector.broadcast %426 : vector<1x1x1x128xf32> to vector<2x2x16x128xf32>
    %428 = arith.mulf %425, %427 : vector<2x2x16x128xf32>
    %429 = arith.addf %424, %428 : vector<2x2x16x128xf32>
    %430 = vector.extract_strided_slice %378 {offsets = [0, 2, 0, 0], sizes = [2, 2, 16, 128], strides = [1, 1, 1, 1]} : vector<2x4x16x128xf32> to vector<2x2x16x128xf32>
    %431 = vector.shape_cast %16 : vector<128xf32> to vector<1x1x1x128xf32>
    %432 = vector.broadcast %431 : vector<1x1x1x128xf32> to vector<2x2x16x128xf32>
    %433 = arith.mulf %430, %432 : vector<2x2x16x128xf32>
    %434 = arith.addf %429, %433 : vector<2x2x16x128xf32>
    %435 = vector.extract_strided_slice %395 {offsets = [0, 2, 0, 0], sizes = [2, 2, 16, 128], strides = [1, 1, 1, 1]} : vector<2x4x16x128xf32> to vector<2x2x16x128xf32>
    %436 = vector.shape_cast %18 : vector<128xf32> to vector<1x1x1x128xf32>
    %437 = vector.broadcast %436 : vector<1x1x1x128xf32> to vector<2x2x16x128xf32>
    %438 = arith.mulf %435, %437 : vector<2x2x16x128xf32>
    %439 = arith.addf %434, %438 : vector<2x2x16x128xf32>
    %440 = vector.shape_cast %439 : vector<2x2x16x128xf32> to vector<64x128xf32>
    %cst_83 = arith.constant dense<0.000000e+00> : vector<128xf32>
    %441 = vector.multi_reduction <add>, %440, %cst_83 [0] : vector<64x128xf32> to vector<128xf32>
    %442 = vector.shape_cast %441 : vector<128xf32> to vector<1x128xf32>
    %443 = arith.addf %372, %442 : vector<1x128xf32>
    %444 = arith.mulf %440, %440 : vector<64x128xf32>
    %cst_84 = arith.constant dense<0.000000e+00> : vector<128xf32>
    %445 = vector.multi_reduction <add>, %444, %cst_84 [0] : vector<64x128xf32> to vector<128xf32>
    %446 = vector.shape_cast %445 : vector<128xf32> to vector<1x128xf32>
    %447 = arith.addf %376, %446 : vector<1x128xf32>
    %c320 = arith.constant 320 : index
    %c0_85 = arith.constant 0 : index
    %448 = vector.load %arg4[%c320, %c0_85] : memref<512x128xf32, #tpu.memory_space<vmem>>, vector<64x128xf32>
    tpu.vector_store %arg4[%c320, %c0_85], %440 {strides = array<i32>} : memref<512x128xf32, #tpu.memory_space<vmem>>, vector<64x128xf32>,
    %c0_86 = arith.constant 0 : index
    %c11 = arith.constant 11 : index
    %c0_87 = arith.constant 0 : index
    %c0_88 = arith.constant 0 : index
    %449 = vector.load %arg0[%c0_86, %c11, %c0_87, %c0_88] : memref<2x16x16x128xf32, #tpu.memory_space<vmem>>, vector<2x4x16x128xf32>
    %450 = vector.shape_cast %449 : vector<2x4x16x128xf32> to vector<8x16x128xf32>
    %c0_i32_89 = arith.constant 0 : i32
    %451 = vector.broadcast %c0_i32_89 : i32 to vector<16x128xi32>
    %452 = arith.cmpi eq, %0, %451 : vector<16x128xi32>
    %c1_i32_90 = arith.constant 1 : i32
    %453 = tpu.dynamic_rotate %450 by %c1_i32_90 dim 1 : vector<8x16x128xf32>, i32 -> vector<8x16x128xf32>
    %cst_91 = arith.constant 0.000000e+00 : f32
    %454 = vector.shape_cast %452 : vector<16x128xi1> to vector<1x16x128xi1>
    %455 = vector.broadcast %454 : vector<1x16x128xi1> to vector<8x16x128xi1>
    %456 = vector.broadcast %cst_91 : f32 to vector<8x16x128xf32>
    %457 = arith.select %455, %456, %453 : vector<8x16x128xi1>, vector<8x16x128xf32>
    %458 = vector.shape_cast %457 : vector<8x16x128xf32> to vector<2x4x16x128xf32>
    %c15_i32_92 = arith.constant 15 : i32
    %459 = vector.broadcast %c15_i32_92 : i32 to vector<16x128xi32>
    %460 = arith.cmpi eq, %0, %459 : vector<16x128xi32>
    %c15_i32_93 = arith.constant 15 : i32
    %461 = tpu.dynamic_rotate %450 by %c15_i32_93 dim 1 : vector<8x16x128xf32>, i32 -> vector<8x16x128xf32>
    %cst_94 = arith.constant 0.000000e+00 : f32
    %462 = vector.shape_cast %460 : vector<16x128xi1> to vector<1x16x128xi1>
    %463 = vector.broadcast %462 : vector<1x16x128xi1> to vector<8x16x128xi1>
    %464 = vector.broadcast %cst_94 : f32 to vector<8x16x128xf32>
    %465 = arith.select %463, %464, %461 : vector<8x16x128xi1>, vector<8x16x128xf32>
    %466 = vector.shape_cast %465 : vector<8x16x128xf32> to vector<2x4x16x128xf32>
    %467 = vector.extract_strided_slice %458 {offsets = [0, 0, 0, 0], sizes = [2, 2, 16, 128], strides = [1, 1, 1, 1]} : vector<2x4x16x128xf32> to vector<2x2x16x128xf32>
    %468 = vector.shape_cast %2 : vector<128xf32> to vector<1x1x1x128xf32>
    %469 = vector.broadcast %468 : vector<1x1x1x128xf32> to vector<2x2x16x128xf32>
    %470 = arith.mulf %467, %469 : vector<2x2x16x128xf32>
    %471 = vector.extract_strided_slice %449 {offsets = [0, 0, 0, 0], sizes = [2, 2, 16, 128], strides = [1, 1, 1, 1]} : vector<2x4x16x128xf32> to vector<2x2x16x128xf32>
    %472 = vector.shape_cast %4 : vector<128xf32> to vector<1x1x1x128xf32>
    %473 = vector.broadcast %472 : vector<1x1x1x128xf32> to vector<2x2x16x128xf32>
    %474 = arith.mulf %471, %473 : vector<2x2x16x128xf32>
    %475 = arith.addf %470, %474 : vector<2x2x16x128xf32>
    %476 = vector.extract_strided_slice %466 {offsets = [0, 0, 0, 0], sizes = [2, 2, 16, 128], strides = [1, 1, 1, 1]} : vector<2x4x16x128xf32> to vector<2x2x16x128xf32>
    %477 = vector.shape_cast %6 : vector<128xf32> to vector<1x1x1x128xf32>
    %478 = vector.broadcast %477 : vector<1x1x1x128xf32> to vector<2x2x16x128xf32>
    %479 = arith.mulf %476, %478 : vector<2x2x16x128xf32>
    %480 = arith.addf %475, %479 : vector<2x2x16x128xf32>
    %481 = vector.extract_strided_slice %458 {offsets = [0, 1, 0, 0], sizes = [2, 2, 16, 128], strides = [1, 1, 1, 1]} : vector<2x4x16x128xf32> to vector<2x2x16x128xf32>
    %482 = vector.shape_cast %8 : vector<128xf32> to vector<1x1x1x128xf32>
    %483 = vector.broadcast %482 : vector<1x1x1x128xf32> to vector<2x2x16x128xf32>
    %484 = arith.mulf %481, %483 : vector<2x2x16x128xf32>
    %485 = arith.addf %480, %484 : vector<2x2x16x128xf32>
    %486 = vector.extract_strided_slice %449 {offsets = [0, 1, 0, 0], sizes = [2, 2, 16, 128], strides = [1, 1, 1, 1]} : vector<2x4x16x128xf32> to vector<2x2x16x128xf32>
    %487 = vector.shape_cast %10 : vector<128xf32> to vector<1x1x1x128xf32>
    %488 = vector.broadcast %487 : vector<1x1x1x128xf32> to vector<2x2x16x128xf32>
    %489 = arith.mulf %486, %488 : vector<2x2x16x128xf32>
    %490 = arith.addf %485, %489 : vector<2x2x16x128xf32>
    %491 = vector.extract_strided_slice %466 {offsets = [0, 1, 0, 0], sizes = [2, 2, 16, 128], strides = [1, 1, 1, 1]} : vector<2x4x16x128xf32> to vector<2x2x16x128xf32>
    %492 = vector.shape_cast %12 : vector<128xf32> to vector<1x1x1x128xf32>
    %493 = vector.broadcast %492 : vector<1x1x1x128xf32> to vector<2x2x16x128xf32>
    %494 = arith.mulf %491, %493 : vector<2x2x16x128xf32>
    %495 = arith.addf %490, %494 : vector<2x2x16x128xf32>
    %496 = vector.extract_strided_slice %458 {offsets = [0, 2, 0, 0], sizes = [2, 2, 16, 128], strides = [1, 1, 1, 1]} : vector<2x4x16x128xf32> to vector<2x2x16x128xf32>
    %497 = vector.shape_cast %14 : vector<128xf32> to vector<1x1x1x128xf32>
    %498 = vector.broadcast %497 : vector<1x1x1x128xf32> to vector<2x2x16x128xf32>
    %499 = arith.mulf %496, %498 : vector<2x2x16x128xf32>
    %500 = arith.addf %495, %499 : vector<2x2x16x128xf32>
    %501 = vector.extract_strided_slice %449 {offsets = [0, 2, 0, 0], sizes = [2, 2, 16, 128], strides = [1, 1, 1, 1]} : vector<2x4x16x128xf32> to vector<2x2x16x128xf32>
    %502 = vector.shape_cast %16 : vector<128xf32> to vector<1x1x1x128xf32>
    %503 = vector.broadcast %502 : vector<1x1x1x128xf32> to vector<2x2x16x128xf32>
    %504 = arith.mulf %501, %503 : vector<2x2x16x128xf32>
    %505 = arith.addf %500, %504 : vector<2x2x16x128xf32>
    %506 = vector.extract_strided_slice %466 {offsets = [0, 2, 0, 0], sizes = [2, 2, 16, 128], strides = [1, 1, 1, 1]} : vector<2x4x16x128xf32> to vector<2x2x16x128xf32>
    %507 = vector.shape_cast %18 : vector<128xf32> to vector<1x1x1x128xf32>
    %508 = vector.broadcast %507 : vector<1x1x1x128xf32> to vector<2x2x16x128xf32>
    %509 = arith.mulf %506, %508 : vector<2x2x16x128xf32>
    %510 = arith.addf %505, %509 : vector<2x2x16x128xf32>
    %511 = vector.shape_cast %510 : vector<2x2x16x128xf32> to vector<64x128xf32>
    %cst_95 = arith.constant dense<0.000000e+00> : vector<128xf32>
    %512 = vector.multi_reduction <add>, %511, %cst_95 [0] : vector<64x128xf32> to vector<128xf32>
    %513 = vector.shape_cast %512 : vector<128xf32> to vector<1x128xf32>
    %514 = arith.addf %443, %513 : vector<1x128xf32>
    %515 = arith.mulf %511, %511 : vector<64x128xf32>
    %cst_96 = arith.constant dense<0.000000e+00> : vector<128xf32>
    %516 = vector.multi_reduction <add>, %515, %cst_96 [0] : vector<64x128xf32> to vector<128xf32>
    %517 = vector.shape_cast %516 : vector<128xf32> to vector<1x128xf32>
    %518 = arith.addf %447, %517 : vector<1x128xf32>
    %c384 = arith.constant 384 : index
    %c0_97 = arith.constant 0 : index
    %519 = vector.load %arg4[%c384, %c0_97] : memref<512x128xf32, #tpu.memory_space<vmem>>, vector<64x128xf32>
    tpu.vector_store %arg4[%c384, %c0_97], %511 {strides = array<i32>} : memref<512x128xf32, #tpu.memory_space<vmem>>, vector<64x128xf32>,
    %c0_98 = arith.constant 0 : index
    %c13 = arith.constant 13 : index
    %c0_99 = arith.constant 0 : index
    %c0_100 = arith.constant 0 : index
    %520 = vector.load %arg0[%c0_98, %c13, %c0_99, %c0_100] : memref<2x16x16x128xf32, #tpu.memory_space<vmem>>, vector<2x3x16x128xf32>
    %cst_101 = arith.constant 0.000000e+00 : f32
    %521 = vector.broadcast %cst_101 : f32 to vector<2x1x16x128xf32>
    %522 = tpu.concatenate %520, %521 in 1 : vector<2x3x16x128xf32>, vector<2x1x16x128xf32> -> vector<2x4x16x128xf32>
    %523 = vector.shape_cast %522 : vector<2x4x16x128xf32> to vector<8x16x128xf32>
    %c0_i32_102 = arith.constant 0 : i32
    %524 = vector.broadcast %c0_i32_102 : i32 to vector<16x128xi32>
    %525 = arith.cmpi eq, %0, %524 : vector<16x128xi32>
    %c1_i32_103 = arith.constant 1 : i32
    %526 = tpu.dynamic_rotate %523 by %c1_i32_103 dim 1 : vector<8x16x128xf32>, i32 -> vector<8x16x128xf32>
    %cst_104 = arith.constant 0.000000e+00 : f32
    %527 = vector.shape_cast %525 : vector<16x128xi1> to vector<1x16x128xi1>
    %528 = vector.broadcast %527 : vector<1x16x128xi1> to vector<8x16x128xi1>
    %529 = vector.broadcast %cst_104 : f32 to vector<8x16x128xf32>
    %530 = arith.select %528, %529, %526 : vector<8x16x128xi1>, vector<8x16x128xf32>
    %531 = vector.shape_cast %530 : vector<8x16x128xf32> to vector<2x4x16x128xf32>
    %c15_i32_105 = arith.constant 15 : i32
    %532 = vector.broadcast %c15_i32_105 : i32 to vector<16x128xi32>
    %533 = arith.cmpi eq, %0, %532 : vector<16x128xi32>
    %c15_i32_106 = arith.constant 15 : i32
    %534 = tpu.dynamic_rotate %523 by %c15_i32_106 dim 1 : vector<8x16x128xf32>, i32 -> vector<8x16x128xf32>
    %cst_107 = arith.constant 0.000000e+00 : f32
    %535 = vector.shape_cast %533 : vector<16x128xi1> to vector<1x16x128xi1>
    %536 = vector.broadcast %535 : vector<1x16x128xi1> to vector<8x16x128xi1>
    %537 = vector.broadcast %cst_107 : f32 to vector<8x16x128xf32>
    %538 = arith.select %536, %537, %534 : vector<8x16x128xi1>, vector<8x16x128xf32>
    %539 = vector.shape_cast %538 : vector<8x16x128xf32> to vector<2x4x16x128xf32>
    %540 = vector.extract_strided_slice %531 {offsets = [0, 0, 0, 0], sizes = [2, 2, 16, 128], strides = [1, 1, 1, 1]} : vector<2x4x16x128xf32> to vector<2x2x16x128xf32>
    %541 = vector.shape_cast %2 : vector<128xf32> to vector<1x1x1x128xf32>
    %542 = vector.broadcast %541 : vector<1x1x1x128xf32> to vector<2x2x16x128xf32>
    %543 = arith.mulf %540, %542 : vector<2x2x16x128xf32>
    %544 = vector.extract_strided_slice %522 {offsets = [0, 0, 0, 0], sizes = [2, 2, 16, 128], strides = [1, 1, 1, 1]} : vector<2x4x16x128xf32> to vector<2x2x16x128xf32>
    %545 = vector.shape_cast %4 : vector<128xf32> to vector<1x1x1x128xf32>
    %546 = vector.broadcast %545 : vector<1x1x1x128xf32> to vector<2x2x16x128xf32>
    %547 = arith.mulf %544, %546 : vector<2x2x16x128xf32>
    %548 = arith.addf %543, %547 : vector<2x2x16x128xf32>
    %549 = vector.extract_strided_slice %539 {offsets = [0, 0, 0, 0], sizes = [2, 2, 16, 128], strides = [1, 1, 1, 1]} : vector<2x4x16x128xf32> to vector<2x2x16x128xf32>
    %550 = vector.shape_cast %6 : vector<128xf32> to vector<1x1x1x128xf32>
    %551 = vector.broadcast %550 : vector<1x1x1x128xf32> to vector<2x2x16x128xf32>
    %552 = arith.mulf %549, %551 : vector<2x2x16x128xf32>
    %553 = arith.addf %548, %552 : vector<2x2x16x128xf32>
    %554 = vector.extract_strided_slice %531 {offsets = [0, 1, 0, 0], sizes = [2, 2, 16, 128], strides = [1, 1, 1, 1]} : vector<2x4x16x128xf32> to vector<2x2x16x128xf32>
    %555 = vector.shape_cast %8 : vector<128xf32> to vector<1x1x1x128xf32>
    %556 = vector.broadcast %555 : vector<1x1x1x128xf32> to vector<2x2x16x128xf32>
    %557 = arith.mulf %554, %556 : vector<2x2x16x128xf32>
    %558 = arith.addf %553, %557 : vector<2x2x16x128xf32>
    %559 = vector.extract_strided_slice %522 {offsets = [0, 1, 0, 0], sizes = [2, 2, 16, 128], strides = [1, 1, 1, 1]} : vector<2x4x16x128xf32> to vector<2x2x16x128xf32>
    %560 = vector.shape_cast %10 : vector<128xf32> to vector<1x1x1x128xf32>
    %561 = vector.broadcast %560 : vector<1x1x1x128xf32> to vector<2x2x16x128xf32>
    %562 = arith.mulf %559, %561 : vector<2x2x16x128xf32>
    %563 = arith.addf %558, %562 : vector<2x2x16x128xf32>
    %564 = vector.extract_strided_slice %539 {offsets = [0, 1, 0, 0], sizes = [2, 2, 16, 128], strides = [1, 1, 1, 1]} : vector<2x4x16x128xf32> to vector<2x2x16x128xf32>
    %565 = vector.shape_cast %12 : vector<128xf32> to vector<1x1x1x128xf32>
    %566 = vector.broadcast %565 : vector<1x1x1x128xf32> to vector<2x2x16x128xf32>
    %567 = arith.mulf %564, %566 : vector<2x2x16x128xf32>
    %568 = arith.addf %563, %567 : vector<2x2x16x128xf32>
    %569 = vector.extract_strided_slice %531 {offsets = [0, 2, 0, 0], sizes = [2, 2, 16, 128], strides = [1, 1, 1, 1]} : vector<2x4x16x128xf32> to vector<2x2x16x128xf32>
    %570 = vector.shape_cast %14 : vector<128xf32> to vector<1x1x1x128xf32>
    %571 = vector.broadcast %570 : vector<1x1x1x128xf32> to vector<2x2x16x128xf32>
    %572 = arith.mulf %569, %571 : vector<2x2x16x128xf32>
    %573 = arith.addf %568, %572 : vector<2x2x16x128xf32>
    %574 = vector.extract_strided_slice %522 {offsets = [0, 2, 0, 0], sizes = [2, 2, 16, 128], strides = [1, 1, 1, 1]} : vector<2x4x16x128xf32> to vector<2x2x16x128xf32>
    %575 = vector.shape_cast %16 : vector<128xf32> to vector<1x1x1x128xf32>
    %576 = vector.broadcast %575 : vector<1x1x1x128xf32> to vector<2x2x16x128xf32>
    %577 = arith.mulf %574, %576 : vector<2x2x16x128xf32>
    %578 = arith.addf %573, %577 : vector<2x2x16x128xf32>
    %579 = vector.extract_strided_slice %539 {offsets = [0, 2, 0, 0], sizes = [2, 2, 16, 128], strides = [1, 1, 1, 1]} : vector<2x4x16x128xf32> to vector<2x2x16x128xf32>
    %580 = vector.shape_cast %18 : vector<128xf32> to vector<1x1x1x128xf32>
    %581 = vector.broadcast %580 : vector<1x1x1x128xf32> to vector<2x2x16x128xf32>
    %582 = arith.mulf %579, %581 : vector<2x2x16x128xf32>
    %583 = arith.addf %578, %582 : vector<2x2x16x128xf32>
    %584 = vector.shape_cast %583 : vector<2x2x16x128xf32> to vector<64x128xf32>
    %cst_108 = arith.constant dense<0.000000e+00> : vector<128xf32>
    %585 = vector.multi_reduction <add>, %584, %cst_108 [0] : vector<64x128xf32> to vector<128xf32>
    %586 = vector.shape_cast %585 : vector<128xf32> to vector<1x128xf32>
    %587 = arith.addf %514, %586 : vector<1x128xf32>
    %588 = arith.mulf %584, %584 : vector<64x128xf32>
    %cst_109 = arith.constant dense<0.000000e+00> : vector<128xf32>
    %589 = vector.multi_reduction <add>, %588, %cst_109 [0] : vector<64x128xf32> to vector<128xf32>
    %590 = vector.shape_cast %589 : vector<128xf32> to vector<1x128xf32>
    %591 = arith.addf %518, %590 : vector<1x128xf32>
    %c448 = arith.constant 448 : index
    %c0_110 = arith.constant 0 : index
    %592 = vector.load %arg4[%c448, %c0_110] : memref<512x128xf32, #tpu.memory_space<vmem>>, vector<64x128xf32>
    tpu.vector_store %arg4[%c448, %c0_110], %584 {strides = array<i32>} : memref<512x128xf32, #tpu.memory_space<vmem>>, vector<64x128xf32>,
    %cst_111 = arith.constant 0.001953125 : f32
    %593 = vector.broadcast %cst_111 : f32 to vector<1x128xf32>
    %594 = arith.mulf %587, %593 : vector<1x128xf32>
    %cst_112 = arith.constant 0.001953125 : f32
    %595 = vector.broadcast %cst_112 : f32 to vector<1x128xf32>
    %596 = arith.mulf %591, %595 : vector<1x128xf32>
    %597 = arith.mulf %594, %594 : vector<1x128xf32>
    %598 = arith.subf %596, %597 : vector<1x128xf32>
    %cst_113 = arith.constant 0.000000e+00 : f32
    %599 = vector.broadcast %cst_113 : f32 to vector<1x128xf32>
    %600 = arith.maximumf %598, %599 : vector<1x128xf32>
    %cst_114 = arith.constant 9.99999974E-6 : f32
    %601 = vector.broadcast %cst_114 : f32 to vector<1x128xf32>
    %602 = arith.addf %600, %601 : vector<1x128xf32>
    %603 = math.rsqrt %602 : vector<1x128xf32>
    %c0_115 = arith.constant 0 : index
    %c0_116 = arith.constant 0 : index
    %604 = vector.load %arg2[%c0_115, %c0_116] : memref<128x128xf32, #tpu.memory_space<vmem>>, vector<128x128xf32>
    %cst_117 = arith.constant 0.000000e+00 : f32
    %605 = vector.broadcast %cst_117 : f32 to vector<1x128xf32>
    %cst_118 = arith.constant 0.000000e+00 : f32
    %606 = vector.broadcast %cst_118 : f32 to vector<1x128xf32>
    %c0_119 = arith.constant 0 : index
    %c0_120 = arith.constant 0 : index
    %607 = vector.load %arg4[%c0_119, %c0_120] : memref<512x128xf32, #tpu.memory_space<vmem>>, vector<64x128xf32>
    %608 = vector.broadcast %594 : vector<1x128xf32> to vector<64x128xf32>
    %609 = arith.subf %607, %608 : vector<64x128xf32>
    %cst_121 = arith.constant 0.000000e+00 : f32
    %610 = vector.broadcast %cst_121 : f32 to vector<64x128xf32>
    %611 = arith.maximumf %609, %610 : vector<64x128xf32>
    %612 = vector.broadcast %603 : vector<1x128xf32> to vector<64x128xf32>
    %613 = arith.mulf %611, %612 : vector<64x128xf32>
    %cst_122 = arith.constant dense<0.000000e+00> : vector<64x128xf32>
    %614 = tpu.matmul %613, %604, %cst_122 {dimension_numbers = #tpu.dot_dimension_numbers<[1], [0], [0], [1], [0, 0, 1, 1], [], []>} : vector<64x128xf32>, vector<128x128xf32>, vector<64x128xf32> -> vector<64x128xf32>
    %cst_123 = arith.constant dense<0.000000e+00> : vector<128xf32>
    %615 = vector.multi_reduction <add>, %614, %cst_123 [0] : vector<64x128xf32> to vector<128xf32>
    %616 = vector.shape_cast %615 : vector<128xf32> to vector<1x128xf32>
    %617 = arith.addf %605, %616 : vector<1x128xf32>
    %618 = arith.mulf %614, %614 : vector<64x128xf32>
    %cst_124 = arith.constant dense<0.000000e+00> : vector<128xf32>
    %619 = vector.multi_reduction <add>, %618, %cst_124 [0] : vector<64x128xf32> to vector<128xf32>
    %620 = vector.shape_cast %619 : vector<128xf32> to vector<1x128xf32>
    %621 = arith.addf %606, %620 : vector<1x128xf32>
    %c0_125 = arith.constant 0 : index
    %c0_126 = arith.constant 0 : index
    %622 = vector.load %arg5[%c0_125, %c0_126] : memref<512x128xf32, #tpu.memory_space<vmem>>, vector<64x128xf32>
    tpu.vector_store %arg5[%c0_125, %c0_126], %614 {strides = array<i32>} : memref<512x128xf32, #tpu.memory_space<vmem>>, vector<64x128xf32>,
    %c64_127 = arith.constant 64 : index
    %c0_128 = arith.constant 0 : index
    %623 = vector.load %arg4[%c64_127, %c0_128] : memref<512x128xf32, #tpu.memory_space<vmem>>, vector<64x128xf32>
    %624 = vector.broadcast %594 : vector<1x128xf32> to vector<64x128xf32>
    %625 = arith.subf %623, %624 : vector<64x128xf32>
    %cst_129 = arith.constant 0.000000e+00 : f32
    %626 = vector.broadcast %cst_129 : f32 to vector<64x128xf32>
    %627 = arith.maximumf %625, %626 : vector<64x128xf32>
    %628 = vector.broadcast %603 : vector<1x128xf32> to vector<64x128xf32>
    %629 = arith.mulf %627, %628 : vector<64x128xf32>
    %cst_130 = arith.constant dense<0.000000e+00> : vector<64x128xf32>
    %630 = tpu.matmul %629, %604, %cst_130 {dimension_numbers = #tpu.dot_dimension_numbers<[1], [0], [0], [1], [0, 0, 1, 1], [], []>} : vector<64x128xf32>, vector<128x128xf32>, vector<64x128xf32> -> vector<64x128xf32>
    %cst_131 = arith.constant dense<0.000000e+00> : vector<128xf32>
    %631 = vector.multi_reduction <add>, %630, %cst_131 [0] : vector<64x128xf32> to vector<128xf32>
    %632 = vector.shape_cast %631 : vector<128xf32> to vector<1x128xf32>
    %633 = arith.addf %617, %632 : vector<1x128xf32>
    %634 = arith.mulf %630, %630 : vector<64x128xf32>
    %cst_132 = arith.constant dense<0.000000e+00> : vector<128xf32>
    %635 = vector.multi_reduction <add>, %634, %cst_132 [0] : vector<64x128xf32> to vector<128xf32>
    %636 = vector.shape_cast %635 : vector<128xf32> to vector<1x128xf32>
    %637 = arith.addf %621, %636 : vector<1x128xf32>
    %c64_133 = arith.constant 64 : index
    %c0_134 = arith.constant 0 : index
    %638 = vector.load %arg5[%c64_133, %c0_134] : memref<512x128xf32, #tpu.memory_space<vmem>>, vector<64x128xf32>
    tpu.vector_store %arg5[%c64_133, %c0_134], %630 {strides = array<i32>} : memref<512x128xf32, #tpu.memory_space<vmem>>, vector<64x128xf32>,
    %c128_135 = arith.constant 128 : index
    %c0_136 = arith.constant 0 : index
    %639 = vector.load %arg4[%c128_135, %c0_136] : memref<512x128xf32, #tpu.memory_space<vmem>>, vector<64x128xf32>
    %640 = vector.broadcast %594 : vector<1x128xf32> to vector<64x128xf32>
    %641 = arith.subf %639, %640 : vector<64x128xf32>
    %cst_137 = arith.constant 0.000000e+00 : f32
    %642 = vector.broadcast %cst_137 : f32 to vector<64x128xf32>
    %643 = arith.maximumf %641, %642 : vector<64x128xf32>
    %644 = vector.broadcast %603 : vector<1x128xf32> to vector<64x128xf32>
    %645 = arith.mulf %643, %644 : vector<64x128xf32>
    %cst_138 = arith.constant dense<0.000000e+00> : vector<64x128xf32>
    %646 = tpu.matmul %645, %604, %cst_138 {dimension_numbers = #tpu.dot_dimension_numbers<[1], [0], [0], [1], [0, 0, 1, 1], [], []>} : vector<64x128xf32>, vector<128x128xf32>, vector<64x128xf32> -> vector<64x128xf32>
    %cst_139 = arith.constant dense<0.000000e+00> : vector<128xf32>
    %647 = vector.multi_reduction <add>, %646, %cst_139 [0] : vector<64x128xf32> to vector<128xf32>
    %648 = vector.shape_cast %647 : vector<128xf32> to vector<1x128xf32>
    %649 = arith.addf %633, %648 : vector<1x128xf32>
    %650 = arith.mulf %646, %646 : vector<64x128xf32>
    %cst_140 = arith.constant dense<0.000000e+00> : vector<128xf32>
    %651 = vector.multi_reduction <add>, %650, %cst_140 [0] : vector<64x128xf32> to vector<128xf32>
    %652 = vector.shape_cast %651 : vector<128xf32> to vector<1x128xf32>
    %653 = arith.addf %637, %652 : vector<1x128xf32>
    %c128_141 = arith.constant 128 : index
    %c0_142 = arith.constant 0 : index
    %654 = vector.load %arg5[%c128_141, %c0_142] : memref<512x128xf32, #tpu.memory_space<vmem>>, vector<64x128xf32>
    tpu.vector_store %arg5[%c128_141, %c0_142], %646 {strides = array<i32>} : memref<512x128xf32, #tpu.memory_space<vmem>>, vector<64x128xf32>,
    %c192_143 = arith.constant 192 : index
    %c0_144 = arith.constant 0 : index
    %655 = vector.load %arg4[%c192_143, %c0_144] : memref<512x128xf32, #tpu.memory_space<vmem>>, vector<64x128xf32>
    %656 = vector.broadcast %594 : vector<1x128xf32> to vector<64x128xf32>
    %657 = arith.subf %655, %656 : vector<64x128xf32>
    %cst_145 = arith.constant 0.000000e+00 : f32
    %658 = vector.broadcast %cst_145 : f32 to vector<64x128xf32>
    %659 = arith.maximumf %657, %658 : vector<64x128xf32>
    %660 = vector.broadcast %603 : vector<1x128xf32> to vector<64x128xf32>
    %661 = arith.mulf %659, %660 : vector<64x128xf32>
    %cst_146 = arith.constant dense<0.000000e+00> : vector<64x128xf32>
    %662 = tpu.matmul %661, %604, %cst_146 {dimension_numbers = #tpu.dot_dimension_numbers<[1], [0], [0], [1], [0, 0, 1, 1], [], []>} : vector<64x128xf32>, vector<128x128xf32>, vector<64x128xf32> -> vector<64x128xf32>
    %cst_147 = arith.constant dense<0.000000e+00> : vector<128xf32>
    %663 = vector.multi_reduction <add>, %662, %cst_147 [0] : vector<64x128xf32> to vector<128xf32>
    %664 = vector.shape_cast %663 : vector<128xf32> to vector<1x128xf32>
    %665 = arith.addf %649, %664 : vector<1x128xf32>
    %666 = arith.mulf %662, %662 : vector<64x128xf32>
    %cst_148 = arith.constant dense<0.000000e+00> : vector<128xf32>
    %667 = vector.multi_reduction <add>, %666, %cst_148 [0] : vector<64x128xf32> to vector<128xf32>
    %668 = vector.shape_cast %667 : vector<128xf32> to vector<1x128xf32>
    %669 = arith.addf %653, %668 : vector<1x128xf32>
    %c192_149 = arith.constant 192 : index
    %c0_150 = arith.constant 0 : index
    %670 = vector.load %arg5[%c192_149, %c0_150] : memref<512x128xf32, #tpu.memory_space<vmem>>, vector<64x128xf32>
    tpu.vector_store %arg5[%c192_149, %c0_150], %662 {strides = array<i32>} : memref<512x128xf32, #tpu.memory_space<vmem>>, vector<64x128xf32>,
    %c256_151 = arith.constant 256 : index
    %c0_152 = arith.constant 0 : index
    %671 = vector.load %arg4[%c256_151, %c0_152] : memref<512x128xf32, #tpu.memory_space<vmem>>, vector<64x128xf32>
    %672 = vector.broadcast %594 : vector<1x128xf32> to vector<64x128xf32>
    %673 = arith.subf %671, %672 : vector<64x128xf32>
    %cst_153 = arith.constant 0.000000e+00 : f32
    %674 = vector.broadcast %cst_153 : f32 to vector<64x128xf32>
    %675 = arith.maximumf %673, %674 : vector<64x128xf32>
    %676 = vector.broadcast %603 : vector<1x128xf32> to vector<64x128xf32>
    %677 = arith.mulf %675, %676 : vector<64x128xf32>
    %cst_154 = arith.constant dense<0.000000e+00> : vector<64x128xf32>
    %678 = tpu.matmul %677, %604, %cst_154 {dimension_numbers = #tpu.dot_dimension_numbers<[1], [0], [0], [1], [0, 0, 1, 1], [], []>} : vector<64x128xf32>, vector<128x128xf32>, vector<64x128xf32> -> vector<64x128xf32>
    %cst_155 = arith.constant dense<0.000000e+00> : vector<128xf32>
    %679 = vector.multi_reduction <add>, %678, %cst_155 [0] : vector<64x128xf32> to vector<128xf32>
    %680 = vector.shape_cast %679 : vector<128xf32> to vector<1x128xf32>
    %681 = arith.addf %665, %680 : vector<1x128xf32>
    %682 = arith.mulf %678, %678 : vector<64x128xf32>
    %cst_156 = arith.constant dense<0.000000e+00> : vector<128xf32>
    %683 = vector.multi_reduction <add>, %682, %cst_156 [0] : vector<64x128xf32> to vector<128xf32>
    %684 = vector.shape_cast %683 : vector<128xf32> to vector<1x128xf32>
    %685 = arith.addf %669, %684 : vector<1x128xf32>
    %c256_157 = arith.constant 256 : index
    %c0_158 = arith.constant 0 : index
    %686 = vector.load %arg5[%c256_157, %c0_158] : memref<512x128xf32, #tpu.memory_space<vmem>>, vector<64x128xf32>
    tpu.vector_store %arg5[%c256_157, %c0_158], %678 {strides = array<i32>} : memref<512x128xf32, #tpu.memory_space<vmem>>, vector<64x128xf32>,
    %c320_159 = arith.constant 320 : index
    %c0_160 = arith.constant 0 : index
    %687 = vector.load %arg4[%c320_159, %c0_160] : memref<512x128xf32, #tpu.memory_space<vmem>>, vector<64x128xf32>
    %688 = vector.broadcast %594 : vector<1x128xf32> to vector<64x128xf32>
    %689 = arith.subf %687, %688 : vector<64x128xf32>
    %cst_161 = arith.constant 0.000000e+00 : f32
    %690 = vector.broadcast %cst_161 : f32 to vector<64x128xf32>
    %691 = arith.maximumf %689, %690 : vector<64x128xf32>
    %692 = vector.broadcast %603 : vector<1x128xf32> to vector<64x128xf32>
    %693 = arith.mulf %691, %692 : vector<64x128xf32>
    %cst_162 = arith.constant dense<0.000000e+00> : vector<64x128xf32>
    %694 = tpu.matmul %693, %604, %cst_162 {dimension_numbers = #tpu.dot_dimension_numbers<[1], [0], [0], [1], [0, 0, 1, 1], [], []>} : vector<64x128xf32>, vector<128x128xf32>, vector<64x128xf32> -> vector<64x128xf32>
    %cst_163 = arith.constant dense<0.000000e+00> : vector<128xf32>
    %695 = vector.multi_reduction <add>, %694, %cst_163 [0] : vector<64x128xf32> to vector<128xf32>
    %696 = vector.shape_cast %695 : vector<128xf32> to vector<1x128xf32>
    %697 = arith.addf %681, %696 : vector<1x128xf32>
    %698 = arith.mulf %694, %694 : vector<64x128xf32>
    %cst_164 = arith.constant dense<0.000000e+00> : vector<128xf32>
    %699 = vector.multi_reduction <add>, %698, %cst_164 [0] : vector<64x128xf32> to vector<128xf32>
    %700 = vector.shape_cast %699 : vector<128xf32> to vector<1x128xf32>
    %701 = arith.addf %685, %700 : vector<1x128xf32>
    %c320_165 = arith.constant 320 : index
    %c0_166 = arith.constant 0 : index
    %702 = vector.load %arg5[%c320_165, %c0_166] : memref<512x128xf32, #tpu.memory_space<vmem>>, vector<64x128xf32>
    tpu.vector_store %arg5[%c320_165, %c0_166], %694 {strides = array<i32>} : memref<512x128xf32, #tpu.memory_space<vmem>>, vector<64x128xf32>,
    %c384_167 = arith.constant 384 : index
    %c0_168 = arith.constant 0 : index
    %703 = vector.load %arg4[%c384_167, %c0_168] : memref<512x128xf32, #tpu.memory_space<vmem>>, vector<64x128xf32>
    %704 = vector.broadcast %594 : vector<1x128xf32> to vector<64x128xf32>
    %705 = arith.subf %703, %704 : vector<64x128xf32>
    %cst_169 = arith.constant 0.000000e+00 : f32
    %706 = vector.broadcast %cst_169 : f32 to vector<64x128xf32>
    %707 = arith.maximumf %705, %706 : vector<64x128xf32>
    %708 = vector.broadcast %603 : vector<1x128xf32> to vector<64x128xf32>
    %709 = arith.mulf %707, %708 : vector<64x128xf32>
    %cst_170 = arith.constant dense<0.000000e+00> : vector<64x128xf32>
    %710 = tpu.matmul %709, %604, %cst_170 {dimension_numbers = #tpu.dot_dimension_numbers<[1], [0], [0], [1], [0, 0, 1, 1], [], []>} : vector<64x128xf32>, vector<128x128xf32>, vector<64x128xf32> -> vector<64x128xf32>
    %cst_171 = arith.constant dense<0.000000e+00> : vector<128xf32>
    %711 = vector.multi_reduction <add>, %710, %cst_171 [0] : vector<64x128xf32> to vector<128xf32>
    %712 = vector.shape_cast %711 : vector<128xf32> to vector<1x128xf32>
    %713 = arith.addf %697, %712 : vector<1x128xf32>
    %714 = arith.mulf %710, %710 : vector<64x128xf32>
    %cst_172 = arith.constant dense<0.000000e+00> : vector<128xf32>
    %715 = vector.multi_reduction <add>, %714, %cst_172 [0] : vector<64x128xf32> to vector<128xf32>
    %716 = vector.shape_cast %715 : vector<128xf32> to vector<1x128xf32>
    %717 = arith.addf %701, %716 : vector<1x128xf32>
    %c384_173 = arith.constant 384 : index
    %c0_174 = arith.constant 0 : index
    %718 = vector.load %arg5[%c384_173, %c0_174] : memref<512x128xf32, #tpu.memory_space<vmem>>, vector<64x128xf32>
    tpu.vector_store %arg5[%c384_173, %c0_174], %710 {strides = array<i32>} : memref<512x128xf32, #tpu.memory_space<vmem>>, vector<64x128xf32>,
    %c448_175 = arith.constant 448 : index
    %c0_176 = arith.constant 0 : index
    %719 = vector.load %arg4[%c448_175, %c0_176] : memref<512x128xf32, #tpu.memory_space<vmem>>, vector<64x128xf32>
    %720 = vector.broadcast %594 : vector<1x128xf32> to vector<64x128xf32>
    %721 = arith.subf %719, %720 : vector<64x128xf32>
    %cst_177 = arith.constant 0.000000e+00 : f32
    %722 = vector.broadcast %cst_177 : f32 to vector<64x128xf32>
    %723 = arith.maximumf %721, %722 : vector<64x128xf32>
    %724 = vector.broadcast %603 : vector<1x128xf32> to vector<64x128xf32>
    %725 = arith.mulf %723, %724 : vector<64x128xf32>
    %cst_178 = arith.constant dense<0.000000e+00> : vector<64x128xf32>
    %726 = tpu.matmul %725, %604, %cst_178 {dimension_numbers = #tpu.dot_dimension_numbers<[1], [0], [0], [1], [0, 0, 1, 1], [], []>} : vector<64x128xf32>, vector<128x128xf32>, vector<64x128xf32> -> vector<64x128xf32>
    %cst_179 = arith.constant dense<0.000000e+00> : vector<128xf32>
    %727 = vector.multi_reduction <add>, %726, %cst_179 [0] : vector<64x128xf32> to vector<128xf32>
    %728 = vector.shape_cast %727 : vector<128xf32> to vector<1x128xf32>
    %729 = arith.addf %713, %728 : vector<1x128xf32>
    %730 = arith.mulf %726, %726 : vector<64x128xf32>
    %cst_180 = arith.constant dense<0.000000e+00> : vector<128xf32>
    %731 = vector.multi_reduction <add>, %730, %cst_180 [0] : vector<64x128xf32> to vector<128xf32>
    %732 = vector.shape_cast %731 : vector<128xf32> to vector<1x128xf32>
    %733 = arith.addf %717, %732 : vector<1x128xf32>
    %c448_181 = arith.constant 448 : index
    %c0_182 = arith.constant 0 : index
    %734 = vector.load %arg5[%c448_181, %c0_182] : memref<512x128xf32, #tpu.memory_space<vmem>>, vector<64x128xf32>
    tpu.vector_store %arg5[%c448_181, %c0_182], %726 {strides = array<i32>} : memref<512x128xf32, #tpu.memory_space<vmem>>, vector<64x128xf32>,
    %cst_183 = arith.constant 0.001953125 : f32
    %735 = vector.broadcast %cst_183 : f32 to vector<1x128xf32>
    %736 = arith.mulf %729, %735 : vector<1x128xf32>
    %cst_184 = arith.constant 0.001953125 : f32
    %737 = vector.broadcast %cst_184 : f32 to vector<1x128xf32>
    %738 = arith.mulf %733, %737 : vector<1x128xf32>
    %739 = arith.mulf %736, %736 : vector<1x128xf32>
    %740 = arith.subf %738, %739 : vector<1x128xf32>
    %cst_185 = arith.constant 0.000000e+00 : f32
    %741 = vector.broadcast %cst_185 : f32 to vector<1x128xf32>
    %742 = arith.maximumf %740, %741 : vector<1x128xf32>
    %cst_186 = arith.constant 9.99999974E-6 : f32
    %743 = vector.broadcast %cst_186 : f32 to vector<1x128xf32>
    %744 = arith.addf %742, %743 : vector<1x128xf32>
    %745 = math.rsqrt %744 : vector<1x128xf32>
    %c0_187 = arith.constant 0 : index
    %c0_188 = arith.constant 0 : index
    %746 = vector.load %arg5[%c0_187, %c0_188] : memref<512x128xf32, #tpu.memory_space<vmem>>, vector<64x128xf32>
    %747 = vector.broadcast %736 : vector<1x128xf32> to vector<64x128xf32>
    %748 = arith.subf %746, %747 : vector<64x128xf32>
    %cst_189 = arith.constant 0.000000e+00 : f32
    %749 = vector.broadcast %cst_189 : f32 to vector<64x128xf32>
    %750 = arith.maximumf %748, %749 : vector<64x128xf32>
    %751 = vector.broadcast %745 : vector<1x128xf32> to vector<64x128xf32>
    %752 = arith.mulf %750, %751 : vector<64x128xf32>
    %753 = vector.shape_cast %752 : vector<64x128xf32> to vector<2x2x16x128xf32>
    %c0_190 = arith.constant 0 : index
    %c0_191 = arith.constant 0 : index
    %c0_192 = arith.constant 0 : index
    %c0_193 = arith.constant 0 : index
    %754 = vector.load %arg3[%c0_190, %c0_191, %c0_192, %c0_193] : memref<2x16x16x128xf32, #tpu.memory_space<vmem>>, vector<2x2x16x128xf32>
    tpu.vector_store %arg3[%c0_190, %c0_191, %c0_192, %c0_193], %753 {strides = array<i32>} : memref<2x16x16x128xf32, #tpu.memory_space<vmem>>, vector<2x2x16x128xf32>,
    %c64_194 = arith.constant 64 : index
    %c0_195 = arith.constant 0 : index
    %755 = vector.load %arg5[%c64_194, %c0_195] : memref<512x128xf32, #tpu.memory_space<vmem>>, vector<64x128xf32>
    %756 = vector.broadcast %736 : vector<1x128xf32> to vector<64x128xf32>
    %757 = arith.subf %755, %756 : vector<64x128xf32>
    %cst_196 = arith.constant 0.000000e+00 : f32
    %758 = vector.broadcast %cst_196 : f32 to vector<64x128xf32>
    %759 = arith.maximumf %757, %758 : vector<64x128xf32>
    %760 = vector.broadcast %745 : vector<1x128xf32> to vector<64x128xf32>
    %761 = arith.mulf %759, %760 : vector<64x128xf32>
    %762 = vector.shape_cast %761 : vector<64x128xf32> to vector<2x2x16x128xf32>
    %c0_197 = arith.constant 0 : index
    %c2_198 = arith.constant 2 : index
    %c0_199 = arith.constant 0 : index
    %c0_200 = arith.constant 0 : index
    %763 = vector.load %arg3[%c0_197, %c2_198, %c0_199, %c0_200] : memref<2x16x16x128xf32, #tpu.memory_space<vmem>>, vector<2x2x16x128xf32>
    tpu.vector_store %arg3[%c0_197, %c2_198, %c0_199, %c0_200], %762 {strides = array<i32>} : memref<2x16x16x128xf32, #tpu.memory_space<vmem>>, vector<2x2x16x128xf32>,
    %c128_201 = arith.constant 128 : index
    %c0_202 = arith.constant 0 : index
    %764 = vector.load %arg5[%c128_201, %c0_202] : memref<512x128xf32, #tpu.memory_space<vmem>>, vector<64x128xf32>
    %765 = vector.broadcast %736 : vector<1x128xf32> to vector<64x128xf32>
    %766 = arith.subf %764, %765 : vector<64x128xf32>
    %cst_203 = arith.constant 0.000000e+00 : f32
    %767 = vector.broadcast %cst_203 : f32 to vector<64x128xf32>
    %768 = arith.maximumf %766, %767 : vector<64x128xf32>
    %769 = vector.broadcast %745 : vector<1x128xf32> to vector<64x128xf32>
    %770 = arith.mulf %768, %769 : vector<64x128xf32>
    %771 = vector.shape_cast %770 : vector<64x128xf32> to vector<2x2x16x128xf32>
    %c0_204 = arith.constant 0 : index
    %c4_205 = arith.constant 4 : index
    %c0_206 = arith.constant 0 : index
    %c0_207 = arith.constant 0 : index
    %772 = vector.load %arg3[%c0_204, %c4_205, %c0_206, %c0_207] : memref<2x16x16x128xf32, #tpu.memory_space<vmem>>, vector<2x2x16x128xf32>
    tpu.vector_store %arg3[%c0_204, %c4_205, %c0_206, %c0_207], %771 {strides = array<i32>} : memref<2x16x16x128xf32, #tpu.memory_space<vmem>>, vector<2x2x16x128xf32>,
    %c192_208 = arith.constant 192 : index
    %c0_209 = arith.constant 0 : index
    %773 = vector.load %arg5[%c192_208, %c0_209] : memref<512x128xf32, #tpu.memory_space<vmem>>, vector<64x128xf32>
    %774 = vector.broadcast %736 : vector<1x128xf32> to vector<64x128xf32>
    %775 = arith.subf %773, %774 : vector<64x128xf32>
    %cst_210 = arith.constant 0.000000e+00 : f32
    %776 = vector.broadcast %cst_210 : f32 to vector<64x128xf32>
    %777 = arith.maximumf %775, %776 : vector<64x128xf32>
    %778 = vector.broadcast %745 : vector<1x128xf32> to vector<64x128xf32>
    %779 = arith.mulf %777, %778 : vector<64x128xf32>
    %780 = vector.shape_cast %779 : vector<64x128xf32> to vector<2x2x16x128xf32>
    %c0_211 = arith.constant 0 : index
    %c6_212 = arith.constant 6 : index
    %c0_213 = arith.constant 0 : index
    %c0_214 = arith.constant 0 : index
    %781 = vector.load %arg3[%c0_211, %c6_212, %c0_213, %c0_214] : memref<2x16x16x128xf32, #tpu.memory_space<vmem>>, vector<2x2x16x128xf32>
    tpu.vector_store %arg3[%c0_211, %c6_212, %c0_213, %c0_214], %780 {strides = array<i32>} : memref<2x16x16x128xf32, #tpu.memory_space<vmem>>, vector<2x2x16x128xf32>,
    %c256_215 = arith.constant 256 : index
    %c0_216 = arith.constant 0 : index
    %782 = vector.load %arg5[%c256_215, %c0_216] : memref<512x128xf32, #tpu.memory_space<vmem>>, vector<64x128xf32>
    %783 = vector.broadcast %736 : vector<1x128xf32> to vector<64x128xf32>
    %784 = arith.subf %782, %783 : vector<64x128xf32>
    %cst_217 = arith.constant 0.000000e+00 : f32
    %785 = vector.broadcast %cst_217 : f32 to vector<64x128xf32>
    %786 = arith.maximumf %784, %785 : vector<64x128xf32>
    %787 = vector.broadcast %745 : vector<1x128xf32> to vector<64x128xf32>
    %788 = arith.mulf %786, %787 : vector<64x128xf32>
    %789 = vector.shape_cast %788 : vector<64x128xf32> to vector<2x2x16x128xf32>
    %c0_218 = arith.constant 0 : index
    %c8_219 = arith.constant 8 : index
    %c0_220 = arith.constant 0 : index
    %c0_221 = arith.constant 0 : index
    %790 = vector.load %arg3[%c0_218, %c8_219, %c0_220, %c0_221] : memref<2x16x16x128xf32, #tpu.memory_space<vmem>>, vector<2x2x16x128xf32>
    tpu.vector_store %arg3[%c0_218, %c8_219, %c0_220, %c0_221], %789 {strides = array<i32>} : memref<2x16x16x128xf32, #tpu.memory_space<vmem>>, vector<2x2x16x128xf32>,
    %c320_222 = arith.constant 320 : index
    %c0_223 = arith.constant 0 : index
    %791 = vector.load %arg5[%c320_222, %c0_223] : memref<512x128xf32, #tpu.memory_space<vmem>>, vector<64x128xf32>
    %792 = vector.broadcast %736 : vector<1x128xf32> to vector<64x128xf32>
    %793 = arith.subf %791, %792 : vector<64x128xf32>
    %cst_224 = arith.constant 0.000000e+00 : f32
    %794 = vector.broadcast %cst_224 : f32 to vector<64x128xf32>
    %795 = arith.maximumf %793, %794 : vector<64x128xf32>
    %796 = vector.broadcast %745 : vector<1x128xf32> to vector<64x128xf32>
    %797 = arith.mulf %795, %796 : vector<64x128xf32>
    %798 = vector.shape_cast %797 : vector<64x128xf32> to vector<2x2x16x128xf32>
    %c0_225 = arith.constant 0 : index
    %c10 = arith.constant 10 : index
    %c0_226 = arith.constant 0 : index
    %c0_227 = arith.constant 0 : index
    %799 = vector.load %arg3[%c0_225, %c10, %c0_226, %c0_227] : memref<2x16x16x128xf32, #tpu.memory_space<vmem>>, vector<2x2x16x128xf32>
    tpu.vector_store %arg3[%c0_225, %c10, %c0_226, %c0_227], %798 {strides = array<i32>} : memref<2x16x16x128xf32, #tpu.memory_space<vmem>>, vector<2x2x16x128xf32>,
    %c384_228 = arith.constant 384 : index
    %c0_229 = arith.constant 0 : index
    %800 = vector.load %arg5[%c384_228, %c0_229] : memref<512x128xf32, #tpu.memory_space<vmem>>, vector<64x128xf32>
    %801 = vector.broadcast %736 : vector<1x128xf32> to vector<64x128xf32>
    %802 = arith.subf %800, %801 : vector<64x128xf32>
    %cst_230 = arith.constant 0.000000e+00 : f32
    %803 = vector.broadcast %cst_230 : f32 to vector<64x128xf32>
    %804 = arith.maximumf %802, %803 : vector<64x128xf32>
    %805 = vector.broadcast %745 : vector<1x128xf32> to vector<64x128xf32>
    %806 = arith.mulf %804, %805 : vector<64x128xf32>
    %807 = vector.shape_cast %806 : vector<64x128xf32> to vector<2x2x16x128xf32>
    %c0_231 = arith.constant 0 : index
    %c12 = arith.constant 12 : index
    %c0_232 = arith.constant 0 : index
    %c0_233 = arith.constant 0 : index
    %808 = vector.load %arg3[%c0_231, %c12, %c0_232, %c0_233] : memref<2x16x16x128xf32, #tpu.memory_space<vmem>>, vector<2x2x16x128xf32>
    tpu.vector_store %arg3[%c0_231, %c12, %c0_232, %c0_233], %807 {strides = array<i32>} : memref<2x16x16x128xf32, #tpu.memory_space<vmem>>, vector<2x2x16x128xf32>,
    %c448_234 = arith.constant 448 : index
    %c0_235 = arith.constant 0 : index
    %809 = vector.load %arg5[%c448_234, %c0_235] : memref<512x128xf32, #tpu.memory_space<vmem>>, vector<64x128xf32>
    %810 = vector.broadcast %736 : vector<1x128xf32> to vector<64x128xf32>
    %811 = arith.subf %809, %810 : vector<64x128xf32>
    %cst_236 = arith.constant 0.000000e+00 : f32
    %812 = vector.broadcast %cst_236 : f32 to vector<64x128xf32>
    %813 = arith.maximumf %811, %812 : vector<64x128xf32>
    %814 = vector.broadcast %745 : vector<1x128xf32> to vector<64x128xf32>
    %815 = arith.mulf %813, %814 : vector<64x128xf32>
    %816 = vector.shape_cast %815 : vector<64x128xf32> to vector<2x2x16x128xf32>
    %c0_237 = arith.constant 0 : index
    %c14 = arith.constant 14 : index
    %c0_238 = arith.constant 0 : index
    %c0_239 = arith.constant 0 : index
    %817 = vector.load %arg3[%c0_237, %c14, %c0_238, %c0_239] : memref<2x16x16x128xf32, #tpu.memory_space<vmem>>, vector<2x2x16x128xf32>
    tpu.vector_store %arg3[%c0_237, %c14, %c0_238, %c0_239], %816 {strides = array<i32>} : memref<2x16x16x128xf32, #tpu.memory_space<vmem>>, vector<2x2x16x128xf32>,
    return
  }
}

</mosaic_0001>

<llo_original>
// kernel: depthwise_separable_forward.1
$region0: #{depthwise_separable_forward.1}
  #allocation0 [shape = 'u32[]', space=smem, size = 0x4, offset = 0x4, fixed_abs, tag = 'smem constant byte address 0x4 - core index']
  #allocation1 [shape = 'u32[144,128]{1,0:T(1,128)}', space=vmem, size = 0x12000, scoped, tag = 'internal scratch']
  #allocation2 [shape = 'f32[512,128]{1,0:T(8,128)}', space=vmem, size = 0x40000, scoped, tag = 'scratch operand']
  #allocation3 [shape = 'f32[512,128]{1,0:T(8,128)}', space=vmem, size = 0x40000, scoped, tag = 'scratch operand']
  %s0 = inlined_call_operand.hbm [shape: f32[2,16,16,128], index: 0, kind: input, shape index: {}]
  %s1 = inlined_call_operand.vmem [shape: f32[9,128], index: 1, kind: input, shape index: {}]
  %s2 = inlined_call_operand.vmem [shape: f32[128,128], index: 2, kind: input, shape index: {}]
  %s3 = inlined_call_operand.hbm [shape: f32[2,16,16,128], index: 3, kind: output, shape index: {}]
  %s4 = sld [smem:[#allocation0]]
  $region26: #{depthwise_separable_forward.1} parent=0
    _
  %s6 = ssub.s32 1, %s4
  %s7 = scalar_select 0, %s6, %s4
  $region1: #{depthwise_separable_forward.1} parent=0
    #allocation4 [shape = 'u8[262144]{0}', space=vmem, size = 0x40000, scoped, tag = 'input window, operand 0, single buffered']
    #allocation5 [shape = 's32[1]{0}', space=sflag, size = 0x4, scoped, tag = 'scoped memory for depthwise_separable_forward.1']
    #allocation6 [shape = 's32[1]{0}', space=sflag, size = 0x4, scoped, tag = 'scoped memory for depthwise_separable_forward.1']
    #allocation7 [shape = 'u8[262144]{0}', space=vmem, size = 0x40000, scoped, tag = 'output window, operand 0, single buffered']
    %8 = vsyncpa [#allocation5], 0
    %9 = vsyncpa [#allocation6], 0
    // Predicated region
    $region2: #{depthwise_separable_forward.1} parent=1 // pred_check
      _
    $region3: #{depthwise_separable_forward.1} parent=1 // pred_check_branch
      %11 = sbr.rel (0) target = $region5
    $region4: #{depthwise_separable_forward.1} parent=1 // pred_region
      %s13 = ssub.s32 8192, 8192
      %14 = vsyncadd [#allocation5], %s13
      %s15 = sshll.u32 [#allocation4], 4
      %s16 = int_to_ptr.vmem [resolvable:$true] %s15
      %21 = dma.hbm_to_vmem [thread:$0]  %s0, 8192, %s16, [#allocation5], 128, 128, 8
    $region5: #{depthwise_separable_forward.1} parent=1 // pred_fallthru
      _
    // Predicated region
    $region6: #{depthwise_separable_forward.1} parent=1 // pred_check
      _
    $region7: #{depthwise_separable_forward.1} parent=1 // pred_check_branch
      %23 = sbr.rel (0) target = $region9
    $region8: #{depthwise_separable_forward.1} parent=1 // pred_region
      _
    $region9: #{depthwise_separable_forward.1} parent=1 // pred_fallthru
      _
    // Predicated region
    $region10: #{depthwise_separable_forward.1} parent=1 // pred_check
      _
    $region11: #{depthwise_separable_forward.1} parent=1 // pred_check_branch
      %25 = sbr.rel (0) target = $region13
    $region12: #{depthwise_separable_forward.1} parent=1 // pred_region
      _
    $region13: #{depthwise_separable_forward.1} parent=1 // pred_fallthru
      _
    // Predicated region
    $region14: #{depthwise_separable_forward.1} parent=1 // pred_check
      _
    $region15: #{depthwise_separable_forward.1} parent=1 // pred_check_branch
      %27 = sbr.rel (0) target = $region17
    $region16: #{depthwise_separable_forward.1} parent=1 // pred_region
      %28 = dma.done [#allocation5], 8192
    $region17: #{depthwise_separable_forward.1} parent=1 // pred_fallthru
      _
    %v29 = vlaneseq
    %v30 = vshrl.u32 %v29, 7
    %v31 = vadd.s32 %v30, 8
    %v32 = vld [vmem:[%s1] sm:$0x1]
    %v33 = vld [vmem:[%s1 + $0x1] sm:$0x1]
    %v34 = vld [vmem:[%s1 + $0x2] sm:$0x1]
    %v35 = vld [vmem:[%s1 + $0x3] sm:$0x1]
    %v36 = vld [vmem:[%s1 + $0x4] sm:$0x1]
    %v37 = vld [vmem:[%s1 + $0x5] sm:$0x1]
    %v38 = vld [vmem:[%s1 + $0x6] sm:$0x1]
    %v39 = vld [vmem:[%s1 + $0x7] sm:$0x1]
    %v40 = vld [vmem:[%s1 + $0x8] sm:$0x1]
    %v41 = vld [vmem:[#allocation4] sm:$0xff]
    %v42 = vld [vmem:[#allocation4 + $0x8] sm:$0xff]
    %v43 = vld [vmem:[#allocation4 + $0x10] sm:$0xff]
    %v44 = vld [vmem:[#allocation4 + $0x18] sm:$0xff]
    %v45 = vld [vmem:[#allocation4 + $0x20] sm:$0xff]
    %v46 = vld [vmem:[#allocation4 + $0x28] sm:$0xff]
    %v47 = vld [vmem:[#allocation4 + $0x100] sm:$0xff]
    %v48 = vld [vmem:[#allocation4 + $0x108] sm:$0xff]
    %v49 = vld [vmem:[#allocation4 + $0x110] sm:$0xff]
    %v50 = vld [vmem:[#allocation4 + $0x118] sm:$0xff]
    %v51 = vld [vmem:[#allocation4 + $0x120] sm:$0xff]
    %v52 = vld [vmem:[#allocation4 + $0x128] sm:$0xff]
    %vm53 = vcmp.eq.s32.totalorder %v30, 0
    %vm54 = vcmp.eq.s32.totalorder %v31, 0
    %v55 = vrot.slane %v41, 7
    %v56 = vrot.slane %v43, 7
    %v57 = vrot.slane %v45, 7
    %v58 = vrot.slane %v47, 7
    %v59 = vrot.slane %v49, 7
    %v60 = vrot.slane %v51, 7
    %v61 = vrot.slane %v42, 7
    %v62 = vrot.slane %v44, 7
    %v63 = vrot.slane %v46, 7
    %v64 = vrot.slane %v48, 7
    %v65 = vrot.slane %v50, 7
    %v66 = vrot.slane %v52, 7
    %vm67 = vcmp.lt.s32.totalorder %v30, 1
    %v68 = vsel %vm67, %v55, %v61
    %v69 = vsel %vm67, %v56, %v62
    %v70 = vsel %vm67, %v57, %v63
    %v71 = vsel %vm67, %v58, %v64
    %v72 = vsel %vm67, %v59, %v65
    %v73 = vsel %vm67, %v60, %v66
    %v74 = vsel %vm67, %v61, %v55
    %v75 = vsel %vm67, %v62, %v56
    %v76 = vsel %vm67, %v63, %v57
    %v77 = vsel %vm67, %v64, %v58
    %v78 = vsel %vm67, %v65, %v59
    %v79 = vsel %vm67, %v66, %v60
    %v80 = vsel %vm53, 1, 0
    %v81 = vsel %vm54, 1, 0
    %vm82 = vcmp.eq.s32.totalorder %v80, 1
    %vm83 = vcmp.eq.s32.totalorder %v81, 1
    %v84 = vsel %vm82, 0.0, 0.0
    %v85 = vsel %vm83, 0.0, 0.0
    %v86 = vsel %vm82, 0.0, %v74
    %v87 = vsel %vm83, 0.0, %v68
    %v88 = vsel %vm82, 0.0, %v75
    %v89 = vsel %vm83, 0.0, %v69
    %v90 = vsel %vm82, 0.0, %v76
    %v91 = vsel %vm83, 0.0, %v70
    %v92 = vsel %vm82, 0.0, %v77
    %v93 = vsel %vm83, 0.0, %v71
    %v94 = vsel %vm82, 0.0, %v78
    %v95 = vsel %vm83, 0.0, %v72
    %v96 = vsel %vm82, 0.0, %v79
    %v97 = vsel %vm83, 0.0, %v73
    %vm98 = vcmp.eq.s32.totalorder %v30, 15
    %vm99 = vcmp.eq.s32.totalorder %v31, 15
    %v100 = vrot.slane %v41, 1
    %v101 = vrot.slane %v43, 1
    %v102 = vrot.slane %v45, 1
    %v103 = vrot.slane %v47, 1
    %v104 = vrot.slane %v49, 1
    %v105 = vrot.slane %v51, 1
    %v106 = vrot.slane %v42, 1
    %v107 = vrot.slane %v44, 1
    %v108 = vrot.slane %v46, 1
    %v109 = vrot.slane %v48, 1
    %v110 = vrot.slane %v50, 1
    %v111 = vrot.slane %v52, 1
    %vm112 = vcmp.lt.s32.totalorder %v30, 7
    %v113 = vsel %vm112, %v100, %v106
    %v114 = vsel %vm112, %v101, %v107
    %v115 = vsel %vm112, %v102, %v108
    %v116 = vsel %vm112, %v103, %v109
    %v117 = vsel %vm112, %v104, %v110
    %v118 = vsel %vm112, %v105, %v111
    %v119 = vsel %vm112, %v106, %v100
    %v120 = vsel %vm112, %v107, %v101
    %v121 = vsel %vm112, %v108, %v102
    %v122 = vsel %vm112, %v109, %v103
    %v123 = vsel %vm112, %v110, %v104
    %v124 = vsel %vm112, %v111, %v105
    %v125 = vsel %vm98, 1, 0
    %v126 = vsel %vm99, 1, 0
    %vm127 = vcmp.eq.s32.totalorder %v125, 1
    %vm128 = vcmp.eq.s32.totalorder %v126, 1
    %v129 = vsel %vm127, 0.0, 0.0
    %v130 = vsel %vm128, 0.0, 0.0
    %v131 = vsel %vm127, 0.0, %v113
    %v132 = vsel %vm128, 0.0, %v119
    %v133 = vsel %vm127, 0.0, %v114
    %v134 = vsel %vm128, 0.0, %v120
    %v135 = vsel %vm127, 0.0, %v115
    %v136 = vsel %vm128, 0.0, %v121
    %v137 = vsel %vm127, 0.0, %v116
    %v138 = vsel %vm128, 0.0, %v122
    %v139 = vsel %vm127, 0.0, %v117
    %v140 = vsel %vm128, 0.0, %v123
    %v141 = vsel %vm127, 0.0, %v118
    %v142 = vsel %vm128, 0.0, %v124
    %v143 = vlaneseq
    %v144 = vshrl.u32 %v143, 7
    %v145 = vsub.s32 0, %v144
    %v146 = vrot.slane %v32, %v145
    %v147 = vmul.f32 %v84, %v146
    %v148 = vmul.f32 %v85, %v146
    %v149 = vmul.f32 %v86, %v146
    %v150 = vmul.f32 %v87, %v146
    %v151 = vmul.f32 %v92, %v146
    %v152 = vmul.f32 %v93, %v146
    %v153 = vlaneseq
    %v154 = vshrl.u32 %v153, 7
    %v155 = vsub.s32 0, %v154
    %v156 = vrot.slane %v33, %v155
    %v157 = vmul.f32 %v156, 0.0
    %v158 = vmul.f32 %v41, %v156
    %v159 = vmul.f32 %v42, %v156
    %v160 = vmul.f32 %v47, %v156
    %v161 = vmul.f32 %v48, %v156
    %v162 = vadd.f32 %v147, %v157
    %v163 = vadd.f32 %v148, %v157
    %v164 = vadd.f32 %v149, %v158
    %v165 = vadd.f32 %v150, %v159
    %v166 = vadd.f32 %v151, %v160
    %v167 = vadd.f32 %v152, %v161
    %v168 = vlaneseq
    %v169 = vshrl.u32 %v168, 7
    %v170 = vsub.s32 0, %v169
    %v171 = vrot.slane %v34, %v170
    %v172 = vmul.f32 %v129, %v171
    %v173 = vmul.f32 %v130, %v171
    %v174 = vmul.f32 %v131, %v171
    %v175 = vmul.f32 %v132, %v171
    %v176 = vmul.f32 %v137, %v171
    %v177 = vmul.f32 %v138, %v171
    %v178 = vadd.f32 %v162, %v172
    %v179 = vadd.f32 %v163, %v173
    %v180 = vadd.f32 %v164, %v174
    %v181 = vadd.f32 %v165, %v175
    %v182 = vadd.f32 %v166, %v176
    %v183 = vadd.f32 %v167, %v177
    %v184 = vlaneseq
    %v185 = vshrl.u32 %v184, 7
    %v186 = vsub.s32 0, %v185
    %v187 = vrot.slane %v35, %v186
    %v188 = vmul.f32 %v86, %v187
    %v189 = vmul.f32 %v87, %v187
    %v190 = vmul.f32 %v88, %v187
    %v191 = vmul.f32 %v89, %v187
    %v192 = vmul.f32 %v92, %v187
    %v193 = vmul.f32 %v93, %v187
    %v194 = vmul.f32 %v94, %v187
    %v195 = vmul.f32 %v95, %v187
    %v196 = vadd.f32 %v178, %v188
    %v197 = vadd.f32 %v179, %v189
    %v198 = vadd.f32 %v180, %v190
    %v199 = vadd.f32 %v181, %v191
    %v200 = vadd.f32 %v178, %v192
    %v201 = vadd.f32 %v179, %v193
    %v202 = vadd.f32 %v182, %v194
    %v203 = vadd.f32 %v183, %v195
    %v204 = vlaneseq
    %v205 = vshrl.u32 %v204, 7
    %v206 = vsub.s32 0, %v205
    %v207 = vrot.slane %v36, %v206
    %v208 = vmul.f32 %v41, %v207
    %v209 = vmul.f32 %v42, %v207
    %v210 = vmul.f32 %v43, %v207
    %v211 = vmul.f32 %v44, %v207
    %v212 = vmul.f32 %v47, %v207
    %v213 = vmul.f32 %v48, %v207
    %v214 = vmul.f32 %v49, %v207
    %v215 = vmul.f32 %v50, %v207
    %v216 = vadd.f32 %v196, %v208
    %v217 = vadd.f32 %v197, %v209
    %v218 = vadd.f32 %v198, %v210
    %v219 = vadd.f32 %v199, %v211
    %v220 = vadd.f32 %v200, %v212
    %v221 = vadd.f32 %v201, %v213
    %v222 = vadd.f32 %v202, %v214
    %v223 = vadd.f32 %v203, %v215
    %v224 = vlaneseq
    %v225 = vshrl.u32 %v224, 7
    %v226 = vsub.s32 0, %v225
    %v227 = vrot.slane %v37, %v226
    %v228 = vmul.f32 %v131, %v227
    %v229 = vmul.f32 %v132, %v227
    %v230 = vmul.f32 %v133, %v227
    %v231 = vmul.f32 %v134, %v227
    %v232 = vmul.f32 %v137, %v227
    %v233 = vmul.f32 %v138, %v227
    %v234 = vmul.f32 %v139, %v227
    %v235 = vmul.f32 %v140, %v227
    %v236 = vadd.f32 %v216, %v228
    %v237 = vadd.f32 %v217, %v229
    %v238 = vadd.f32 %v218, %v230
    %v239 = vadd.f32 %v219, %v231
    %v240 = vadd.f32 %v220, %v232
    %v241 = vadd.f32 %v221, %v233
    %v242 = vadd.f32 %v222, %v234
    %v243 = vadd.f32 %v223, %v235
    %v244 = vlaneseq
    %v245 = vshrl.u32 %v244, 7
    %v246 = vsub.s32 0, %v245
    %v247 = vrot.slane %v38, %v246
    %v248 = vmul.f32 %v88, %v247
    %v249 = vmul.f32 %v89, %v247
    %v250 = vmul.f32 %v90, %v247
    %v251 = vmul.f32 %v91, %v247
    %v252 = vmul.f32 %v94, %v247
    %v253 = vmul.f32 %v95, %v247
    %v254 = vmul.f32 %v96, %v247
    %v255 = vmul.f32 %v97, %v247
    %v256 = vadd.f32 %v236, %v248
    %v257 = vadd.f32 %v237, %v249
    %v258 = vadd.f32 %v238, %v250
    %v259 = vadd.f32 %v239, %v251
    %v260 = vadd.f32 %v240, %v252
    %v261 = vadd.f32 %v241, %v253
    %v262 = vadd.f32 %v242, %v254
    %v263 = vadd.f32 %v243, %v255
    %v264 = vlaneseq
    %v265 = vshrl.u32 %v264, 7
    %v266 = vsub.s32 0, %v265
    %v267 = vrot.slane %v39, %v266
    %v268 = vmul.f32 %v43, %v267
    %v269 = vmul.f32 %v44, %v267
    %v270 = vmul.f32 %v45, %v267
    %v271 = vmul.f32 %v46, %v267
    %v272 = vmul.f32 %v49, %v267
    %v273 = vmul.f32 %v50, %v267
    %v274 = vmul.f32 %v51, %v267
    %v275 = vmul.f32 %v52, %v267
    %v276 = vadd.f32 %v256, %v268
    %v277 = vadd.f32 %v257, %v269
    %v278 = vadd.f32 %v258, %v270
    %v279 = vadd.f32 %v259, %v271
    %v280 = vadd.f32 %v260, %v272
    %v281 = vadd.f32 %v261, %v273
    %v282 = vadd.f32 %v262, %v274
    %v283 = vadd.f32 %v263, %v275
    %v284 = vlaneseq
    %v285 = vshrl.u32 %v284, 7
    %v286 = vsub.s32 0, %v285
    %v287 = vrot.slane %v40, %v286
    %v288 = vmul.f32 %v133, %v287
    %v289 = vmul.f32 %v134, %v287
    %v290 = vmul.f32 %v135, %v287
    %v291 = vmul.f32 %v136, %v287
    %v292 = vmul.f32 %v139, %v287
    %v293 = vmul.f32 %v140, %v287
    %v294 = vmul.f32 %v141, %v287
    %v295 = vmul.f32 %v142, %v287
    %v296 = vadd.f32 %v276, %v288
    %v297 = vadd.f32 %v277, %v289
    %v298 = vadd.f32 %v278, %v290
    %v299 = vadd.f32 %v279, %v291
    %v300 = vadd.f32 %v280, %v292
    %v301 = vadd.f32 %v281, %v293
    %v302 = vadd.f32 %v282, %v294
    %v303 = vadd.f32 %v283, %v295
    %v304 = vadd.f32 %v296, %v297
    %v305 = vadd.f32 %v304, %v298
    %v306 = vadd.f32 %v305, %v299
    %v307 = vadd.f32 %v306, %v300
    %v308 = vadd.f32 %v307, %v301
    %v309 = vadd.f32 %v308, %v302
    %v310 = vadd.f32 %v309, %v303
    %v311 = vrot.slane %v310, 4
    %v312 = vadd.f32 %v310, %v311
    %v313 = vrot.slane %v312, 2
    %v314 = vadd.f32 %v312, %v313
    %v315 = vrot.slane %v314, 1
    %v316 = vadd.f32 %v314, %v315
    %v317 = vadd.f32 %v316, 0.0
    %v318 = vmul.f32 %v296, %v296
    %v319 = vmul.f32 %v297, %v297
    %v320 = vmul.f32 %v298, %v298
    %v321 = vmul.f32 %v299, %v299
    %v322 = vmul.f32 %v300, %v300
    %v323 = vmul.f32 %v301, %v301
    %v324 = vmul.f32 %v302, %v302
    %v325 = vmul.f32 %v303, %v303
    %v326 = vadd.f32 %v318, %v319
    %v327 = vadd.f32 %v326, %v320
    %v328 = vadd.f32 %v327, %v321
    %v329 = vadd.f32 %v328, %v322
    %v330 = vadd.f32 %v329, %v323
    %v331 = vadd.f32 %v330, %v324
    %v332 = vadd.f32 %v331, %v325
    %v333 = vrot.slane %v332, 4
    %v334 = vadd.f32 %v332, %v333
    %v335 = vrot.slane %v334, 2
    %v336 = vadd.f32 %v334, %v335
    %v337 = vrot.slane %v336, 1
    %v338 = vadd.f32 %v336, %v337
    %v339 = vadd.f32 %v338, 0.0
    %340 = vst [vmem:[#allocation2] sm:$0xff] %v296
    %341 = vst [vmem:[#allocation2 + $0x8] sm:$0xff] %v297
    %342 = vst [vmem:[#allocation2 + $0x10] sm:$0xff] %v298
    %343 = vst [vmem:[#allocation2 + $0x18] sm:$0xff] %v299
    %344 = vst [vmem:[#allocation2 + $0x20] sm:$0xff] %v300
    %345 = vst [vmem:[#allocation2 + $0x28] sm:$0xff] %v301
    %346 = vst [vmem:[#allocation2 + $0x30] sm:$0xff] %v302
    %347 = vst [vmem:[#allocation2 + $0x38] sm:$0xff] %v303
    %s348 = scalar_lea.vmem [#allocation4], 16
    %v349 = vld [vmem:[%s348] sm:$0xff]
    %v350 = vld [vmem:[%s348 + $0x8] sm:$0xff]
    %v351 = vld [vmem:[%s348 + $0x10] sm:$0xff]
    %v352 = vld [vmem:[%s348 + $0x18] sm:$0xff]
    %v353 = vld [vmem:[%s348 + $0x20] sm:$0xff]
    %v354 = vld [vmem:[%s348 + $0x28] sm:$0xff]
    %v355 = vld [vmem:[%s348 + $0x30] sm:$0xff]
    %v356 = vld [vmem:[%s348 + $0x38] sm:$0xff]
    %v357 = vld [vmem:[%s348 + $0x100] sm:$0xff]
    %v358 = vld [vmem:[%s348 + $0x108] sm:$0xff]
    %v359 = vld [vmem:[%s348 + $0x110] sm:$0xff]
    %v360 = vld [vmem:[%s348 + $0x118] sm:$0xff]
    %v361 = vld [vmem:[%s348 + $0x120] sm:$0xff]
    %v362 = vld [vmem:[%s348 + $0x128] sm:$0xff]
    %v363 = vld [vmem:[%s348 + $0x130] sm:$0xff]
    %v364 = vld [vmem:[%s348 + $0x138] sm:$0xff]
    %v365 = vrot.slane %v349, 7
    %v366 = vrot.slane %v351, 7
    %v367 = vrot.slane %v353, 7
    %v368 = vrot.slane %v355, 7
    %v369 = vrot.slane %v357, 7
    %v370 = vrot.slane %v359, 7
    %v371 = vrot.slane %v361, 7
    %v372 = vrot.slane %v363, 7
    %v373 = vrot.slane %v350, 7
    %v374 = vrot.slane %v352, 7
    %v375 = vrot.slane %v354, 7
    %v376 = vrot.slane %v356, 7
    %v377 = vrot.slane %v358, 7
    %v378 = vrot.slane %v360, 7
    %v379 = vrot.slane %v362, 7
    %v380 = vrot.slane %v364, 7
    %v381 = vsel %vm67, %v365, %v373
    %v382 = vsel %vm67, %v366, %v374
    %v383 = vsel %vm67, %v367, %v375
    %v384 = vsel %vm67, %v368, %v376
    %v385 = vsel %vm67, %v369, %v377
    %v386 = vsel %vm67, %v370, %v378
    %v387 = vsel %vm67, %v371, %v379
    %v388 = vsel %vm67, %v372, %v380
    %v389 = vsel %vm67, %v373, %v365
    %v390 = vsel %vm67, %v374, %v366
    %v391 = vsel %vm67, %v375, %v367
    %v392 = vsel %vm67, %v376, %v368
    %v393 = vsel %vm67, %v377, %v369
    %v394 = vsel %vm67, %v378, %v370
    %v395 = vsel %vm67, %v379, %v371
    %v396 = vsel %vm67, %v380, %v372
    %v397 = vsel %vm82, 0.0, %v389
    %v398 = vsel %vm83, 0.0, %v381
    %v399 = vsel %vm82, 0.0, %v390
    %v400 = vsel %vm83, 0.0, %v382
    %v401 = vsel %vm82, 0.0, %v391
    %v402 = vsel %vm83, 0.0, %v383
    %v403 = vsel %vm82, 0.0, %v392
    %v404 = vsel %vm83, 0.0, %v384
    %v405 = vsel %vm82, 0.0, %v393
    %v406 = vsel %vm83, 0.0, %v385
    %v407 = vsel %vm82, 0.0, %v394
    %v408 = vsel %vm83, 0.0, %v386
    %v409 = vsel %vm82, 0.0, %v395
    %v410 = vsel %vm83, 0.0, %v387
    %v411 = vsel %vm82, 0.0, %v396
    %v412 = vsel %vm83, 0.0, %v388
    %v413 = vrot.slane %v349, 1
    %v414 = vrot.slane %v351, 1
    %v415 = vrot.slane %v353, 1
    %v416 = vrot.slane %v355, 1
    %v417 = vrot.slane %v357, 1
    %v418 = vrot.slane %v359, 1
    %v419 = vrot.slane %v361, 1
    %v420 = vrot.slane %v363, 1
    %v421 = vrot.slane %v350, 1
    %v422 = vrot.slane %v352, 1
    %v423 = vrot.slane %v354, 1
    %v424 = vrot.slane %v356, 1
    %v425 = vrot.slane %v358, 1
    %v426 = vrot.slane %v360, 1
    %v427 = vrot.slane %v362, 1
    %v428 = vrot.slane %v364, 1
    %v429 = vsel %vm112, %v413, %v421
    %v430 = vsel %vm112, %v414, %v422
    %v431 = vsel %vm112, %v415, %v423
    %v432 = vsel %vm112, %v416, %v424
    %v433 = vsel %vm112, %v417, %v425
    %v434 = vsel %vm112, %v418, %v426
    %v435 = vsel %vm112, %v419, %v427
    %v436 = vsel %vm112, %v420, %v428
    %v437 = vsel %vm112, %v421, %v413
    %v438 = vsel %vm112, %v422, %v414
    %v439 = vsel %vm112, %v423, %v415
    %v440 = vsel %vm112, %v424, %v416
    %v441 = vsel %vm112, %v425, %v417
    %v442 = vsel %vm112, %v426, %v418
    %v443 = vsel %vm112, %v427, %v419
    %v444 = vsel %vm112, %v428, %v420
    %v445 = vsel %vm127, 0.0, %v429
    %v446 = vsel %vm128, 0.0, %v437
    %v447 = vsel %vm127, 0.0, %v430
    %v448 = vsel %vm128, 0.0, %v438
    %v449 = vsel %vm127, 0.0, %v431
    %v450 = vsel %vm128, 0.0, %v439
    %v451 = vsel %vm127, 0.0, %v432
    %v452 = vsel %vm128, 0.0, %v440
    %v453 = vsel %vm127, 0.0, %v433
    %v454 = vsel %vm128, 0.0, %v441
    %v455 = vsel %vm127, 0.0, %v434
    %v456 = vsel %vm128, 0.0, %v442
    %v457 = vsel %vm127, 0.0, %v435
    %v458 = vsel %vm128, 0.0, %v443
    %v459 = vsel %vm127, 0.0, %v436
    %v460 = vsel %vm128, 0.0, %v444
    %v461 = vmul.f32 %v397, %v146
    %v462 = vmul.f32 %v398, %v146
    %v463 = vmul.f32 %v399, %v146
    %v464 = vmul.f32 %v400, %v146
    %v465 = vmul.f32 %v405, %v146
    %v466 = vmul.f32 %v406, %v146
    %v467 = vmul.f32 %v407, %v146
    %v468 = vmul.f32 %v408, %v146
    %v469 = vmul.f32 %v349, %v156
    %v470 = vmul.f32 %v350, %v156
    %v471 = vmul.f32 %v351, %v156
    %v472 = vmul.f32 %v352, %v156
    %v473 = vmul.f32 %v357, %v156
    %v474 = vmul.f32 %v358, %v156
    %v475 = vmul.f32 %v359, %v156
    %v476 = vmul.f32 %v360, %v156
    %v477 = vadd.f32 %v461, %v469
    %v478 = vadd.f32 %v462, %v470
    %v479 = vadd.f32 %v463, %v471
    %v480 = vadd.f32 %v464, %v472
    %v481 = vadd.f32 %v465, %v473
    %v482 = vadd.f32 %v466, %v474
    %v483 = vadd.f32 %v467, %v475
    %v484 = vadd.f32 %v468, %v476
    %v485 = vmul.f32 %v445, %v171
    %v486 = vmul.f32 %v446, %v171
    %v487 = vmul.f32 %v447, %v171
    %v488 = vmul.f32 %v448, %v171
    %v489 = vmul.f32 %v453, %v171
    %v490 = vmul.f32 %v454, %v171
    %v491 = vmul.f32 %v455, %v171
    %v492 = vmul.f32 %v456, %v171
    %v493 = vadd.f32 %v477, %v485
    %v494 = vadd.f32 %v478, %v486
    %v495 = vadd.f32 %v479, %v487
    %v496 = vadd.f32 %v480, %v488
    %v497 = vadd.f32 %v481, %v489
    %v498 = vadd.f32 %v482, %v490
    %v499 = vadd.f32 %v483, %v491
    %v500 = vadd.f32 %v484, %v492
    %v501 = vmul.f32 %v399, %v187
    %v502 = vmul.f32 %v400, %v187
    %v503 = vmul.f32 %v401, %v187
    %v504 = vmul.f32 %v402, %v187
    %v505 = vmul.f32 %v407, %v187
    %v506 = vmul.f32 %v408, %v187
    %v507 = vmul.f32 %v409, %v187
    %v508 = vmul.f32 %v410, %v187
    %v509 = vadd.f32 %v493, %v501
    %v510 = vadd.f32 %v494, %v502
    %v511 = vadd.f32 %v495, %v503
    %v512 = vadd.f32 %v496, %v504
    %v513 = vadd.f32 %v497, %v505
    %v514 = vadd.f32 %v498, %v506
    %v515 = vadd.f32 %v499, %v507
    %v516 = vadd.f32 %v500, %v508
    %v517 = vmul.f32 %v351, %v207
    %v518 = vmul.f32 %v352, %v207
    %v519 = vmul.f32 %v353, %v207
    %v520 = vmul.f32 %v354, %v207
    %v521 = vmul.f32 %v359, %v207
    %v522 = vmul.f32 %v360, %v207
    %v523 = vmul.f32 %v361, %v207
    %v524 = vmul.f32 %v362, %v207
    %v525 = vadd.f32 %v509, %v517
    %v526 = vadd.f32 %v510, %v518
    %v527 = vadd.f32 %v511, %v519
    %v528 = vadd.f32 %v512, %v520
    %v529 = vadd.f32 %v513, %v521
    %v530 = vadd.f32 %v514, %v522
    %v531 = vadd.f32 %v515, %v523
    %v532 = vadd.f32 %v516, %v524
    %v533 = vmul.f32 %v447, %v227
    %v534 = vmul.f32 %v448, %v227
    %v535 = vmul.f32 %v449, %v227
    %v536 = vmul.f32 %v450, %v227
    %v537 = vmul.f32 %v455, %v227
    %v538 = vmul.f32 %v456, %v227
    %v539 = vmul.f32 %v457, %v227
    %v540 = vmul.f32 %v458, %v227
    %v541 = vadd.f32 %v525, %v533
    %v542 = vadd.f32 %v526, %v534
    %v543 = vadd.f32 %v527, %v535
    %v544 = vadd.f32 %v528, %v536
    %v545 = vadd.f32 %v529, %v537
    %v546 = vadd.f32 %v530, %v538
    %v547 = vadd.f32 %v531, %v539
    %v548 = vadd.f32 %v532, %v540
    %v549 = vmul.f32 %v401, %v247
    %v550 = vmul.f32 %v402, %v247
    %v551 = vmul.f32 %v403, %v247
    %v552 = vmul.f32 %v404, %v247
    %v553 = vmul.f32 %v409, %v247
    %v554 = vmul.f32 %v410, %v247
    %v555 = vmul.f32 %v411, %v247
    %v556 = vmul.f32 %v412, %v247
    %v557 = vadd.f32 %v541, %v549
    %v558 = vadd.f32 %v542, %v550
    %v559 = vadd.f32 %v543, %v551
    %v560 = vadd.f32 %v544, %v552
    %v561 = vadd.f32 %v545, %v553
    %v562 = vadd.f32 %v546, %v554
    %v563 = vadd.f32 %v547, %v555
    %v564 = vadd.f32 %v548, %v556
    %v565 = vmul.f32 %v353, %v267
    %v566 = vmul.f32 %v354, %v267
    %v567 = vmul.f32 %v355, %v267
    %v568 = vmul.f32 %v356, %v267
    %v569 = vmul.f32 %v361, %v267
    %v570 = vmul.f32 %v362, %v267
    %v571 = vmul.f32 %v363, %v267
    %v572 = vmul.f32 %v364, %v267
    %v573 = vadd.f32 %v557, %v565
    %v574 = vadd.f32 %v558, %v566
    %v575 = vadd.f32 %v559, %v567
    %v576 = vadd.f32 %v560, %v568
    %v577 = vadd.f32 %v561, %v569
    %v578 = vadd.f32 %v562, %v570
    %v579 = vadd.f32 %v563, %v571
    %v580 = vadd.f32 %v564, %v572
    %v581 = vmul.f32 %v449, %v287
    %v582 = vmul.f32 %v450, %v287
    %v583 = vmul.f32 %v451, %v287
    %v584 = vmul.f32 %v452, %v287
    %v585 = vmul.f32 %v457, %v287
    %v586 = vmul.f32 %v458, %v287
    %v587 = vmul.f32 %v459, %v287
    %v588 = vmul.f32 %v460, %v287
    %v589 = vadd.f32 %v573, %v581
    %v590 = vadd.f32 %v574, %v582
    %v591 = vadd.f32 %v575, %v583
    %v592 = vadd.f32 %v576, %v584
    %v593 = vadd.f32 %v577, %v585
    %v594 = vadd.f32 %v578, %v586
    %v595 = vadd.f32 %v579, %v587
    %v596 = vadd.f32 %v580, %v588
    %v597 = vadd.f32 %v589, %v590
    %v598 = vadd.f32 %v597, %v591
    %v599 = vadd.f32 %v598, %v592
    %v600 = vadd.f32 %v599, %v593
    %v601 = vadd.f32 %v600, %v594
    %v602 = vadd.f32 %v601, %v595
    %v603 = vadd.f32 %v602, %v596
    %v604 = vrot.slane %v603, 4
    %v605 = vadd.f32 %v603, %v604
    %v606 = vrot.slane %v605, 2
    %v607 = vadd.f32 %v605, %v606
    %v608 = vrot.slane %v607, 1
    %v609 = vadd.f32 %v607, %v608
    %v610 = vadd.f32 %v317, %v609
    %v611 = vmul.f32 %v589, %v589
    %v612 = vmul.f32 %v590, %v590
    %v613 = vmul.f32 %v591, %v591
    %v614 = vmul.f32 %v592, %v592
    %v615 = vmul.f32 %v593, %v593
    %v616 = vmul.f32 %v594, %v594
    %v617 = vmul.f32 %v595, %v595
    %v618 = vmul.f32 %v596, %v596
    %v619 = vadd.f32 %v611, %v612
    %v620 = vadd.f32 %v619, %v613
    %v621 = vadd.f32 %v620, %v614
    %v622 = vadd.f32 %v621, %v615
    %v623 = vadd.f32 %v622, %v616
    %v624 = vadd.f32 %v623, %v617
    %v625 = vadd.f32 %v624, %v618
    %v626 = vrot.slane %v625, 4
    %v627 = vadd.f32 %v625, %v626
    %v628 = vrot.slane %v627, 2
    %v629 = vadd.f32 %v627, %v628
    %v630 = vrot.slane %v629, 1
    %v631 = vadd.f32 %v629, %v630
    %v632 = vadd.f32 %v339, %v631
    %633 = vst [vmem:[#allocation2 + $0x40] sm:$0xff] %v589
    %634 = vst [vmem:[#allocation2 + $0x48] sm:$0xff] %v590
    %635 = vst [vmem:[#allocation2 + $0x50] sm:$0xff] %v591
    %636 = vst [vmem:[#allocation2 + $0x58] sm:$0xff] %v592
    %637 = vst [vmem:[#allocation2 + $0x60] sm:$0xff] %v593
    %638 = vst [vmem:[#allocation2 + $0x68] sm:$0xff] %v594
    %639 = vst [vmem:[#allocation2 + $0x70] sm:$0xff] %v595
    %640 = vst [vmem:[#allocation2 + $0x78] sm:$0xff] %v596
    %s641 = scalar_lea.vmem [#allocation4], 48
    %v642 = vld [vmem:[%s641] sm:$0xff]
    %v643 = vld [vmem:[%s641 + $0x8] sm:$0xff]
    %v644 = vld [vmem:[%s641 + $0x10] sm:$0xff]
    %v645 = vld [vmem:[%s641 + $0x18] sm:$0xff]
    %v646 = vld [vmem:[%s641 + $0x20] sm:$0xff]
    %v647 = vld [vmem:[%s641 + $0x28] sm:$0xff]
    %v648 = vld [vmem:[%s641 + $0x30] sm:$0xff]
    %v649 = vld [vmem:[%s641 + $0x38] sm:$0xff]
    %v650 = vld [vmem:[%s641 + $0x100] sm:$0xff]
    %v651 = vld [vmem:[%s641 + $0x108] sm:$0xff]
    %v652 = vld [vmem:[%s641 + $0x110] sm:$0xff]
    %v653 = vld [vmem:[%s641 + $0x118] sm:$0xff]
    %v654 = vld [vmem:[%s641 + $0x120] sm:$0xff]
    %v655 = vld [vmem:[%s641 + $0x128] sm:$0xff]
    %v656 = vld [vmem:[%s641 + $0x130] sm:$0xff]
    %v657 = vld [vmem:[%s641 + $0x138] sm:$0xff]
    %v658 = vrot.slane %v642, 7
    %v659 = vrot.slane %v644, 7
    %v660 = vrot.slane %v646, 7
    %v661 = vrot.slane %v648, 7
    %v662 = vrot.slane %v650, 7
    %v663 = vrot.slane %v652, 7
    %v664 = vrot.slane %v654, 7
    %v665 = vrot.slane %v656, 7
    %v666 = vrot.slane %v643, 7
    %v667 = vrot.slane %v645, 7
    %v668 = vrot.slane %v647, 7
    %v669 = vrot.slane %v649, 7
    %v670 = vrot.slane %v651, 7
    %v671 = vrot.slane %v653, 7
    %v672 = vrot.slane %v655, 7
    %v673 = vrot.slane %v657, 7
    %v674 = vsel %vm67, %v658, %v666
    %v675 = vsel %vm67, %v659, %v667
    %v676 = vsel %vm67, %v660, %v668
    %v677 = vsel %vm67, %v661, %v669
    %v678 = vsel %vm67, %v662, %v670
    %v679 = vsel %vm67, %v663, %v671
    %v680 = vsel %vm67, %v664, %v672
    %v681 = vsel %vm67, %v665, %v673
    %v682 = vsel %vm67, %v666, %v658
    %v683 = vsel %vm67, %v667, %v659
    %v684 = vsel %vm67, %v668, %v660
    %v685 = vsel %vm67, %v669, %v661
    %v686 = vsel %vm67, %v670, %v662
    %v687 = vsel %vm67, %v671, %v663
    %v688 = vsel %vm67, %v672, %v664
    %v689 = vsel %vm67, %v673, %v665
    %v690 = vsel %vm82, 0.0, %v682
    %v691 = vsel %vm83, 0.0, %v674
    %v692 = vsel %vm82, 0.0, %v683
    %v693 = vsel %vm83, 0.0, %v675
    %v694 = vsel %vm82, 0.0, %v684
    %v695 = vsel %vm83, 0.0, %v676
    %v696 = vsel %vm82, 0.0, %v685
    %v697 = vsel %vm83, 0.0, %v677
    %v698 = vsel %vm82, 0.0, %v686
    %v699 = vsel %vm83, 0.0, %v678
    %v700 = vsel %vm82, 0.0, %v687
    %v701 = vsel %vm83, 0.0, %v679
    %v702 = vsel %vm82, 0.0, %v688
    %v703 = vsel %vm83, 0.0, %v680
    %v704 = vsel %vm82, 0.0, %v689
    %v705 = vsel %vm83, 0.0, %v681
    %v706 = vrot.slane %v642, 1
    %v707 = vrot.slane %v644, 1
    %v708 = vrot.slane %v646, 1
    %v709 = vrot.slane %v648, 1
    %v710 = vrot.slane %v650, 1
    %v711 = vrot.slane %v652, 1
    %v712 = vrot.slane %v654, 1
    %v713 = vrot.slane %v656, 1
    %v714 = vrot.slane %v643, 1
    %v715 = vrot.slane %v645, 1
    %v716 = vrot.slane %v647, 1
    %v717 = vrot.slane %v649, 1
    %v718 = vrot.slane %v651, 1
    %v719 = vrot.slane %v653, 1
    %v720 = vrot.slane %v655, 1
    %v721 = vrot.slane %v657, 1
    %v722 = vsel %vm112, %v706, %v714
    %v723 = vsel %vm112, %v707, %v715
    %v724 = vsel %vm112, %v708, %v716
    %v725 = vsel %vm112, %v709, %v717
    %v726 = vsel %vm112, %v710, %v718
    %v727 = vsel %vm112, %v711, %v719
    %v728 = vsel %vm112, %v712, %v720
    %v729 = vsel %vm112, %v713, %v721
    %v730 = vsel %vm112, %v714, %v706
    %v731 = vsel %vm112, %v715, %v707
    %v732 = vsel %vm112, %v716, %v708
    %v733 = vsel %vm112, %v717, %v709
    %v734 = vsel %vm112, %v718, %v710
    %v735 = vsel %vm112, %v719, %v711
    %v736 = vsel %vm112, %v720, %v712
    %v737 = vsel %vm112, %v721, %v713
    %v738 = vsel %vm127, 0.0, %v722
    %v739 = vsel %vm128, 0.0, %v730
    %v740 = vsel %vm127, 0.0, %v723
    %v741 = vsel %vm128, 0.0, %v731
    %v742 = vsel %vm127, 0.0, %v724
    %v743 = vsel %vm128, 0.0, %v732
    %v744 = vsel %vm127, 0.0, %v725
    %v745 = vsel %vm128, 0.0, %v733
    %v746 = vsel %vm127, 0.0, %v726
    %v747 = vsel %vm128, 0.0, %v734
    %v748 = vsel %vm127, 0.0, %v727
    %v749 = vsel %vm128, 0.0, %v735
    %v750 = vsel %vm127, 0.0, %v728
    %v751 = vsel %vm128, 0.0, %v736
    %v752 = vsel %vm127, 0.0, %v729
    %v753 = vsel %vm128, 0.0, %v737
    %v754 = vmul.f32 %v690, %v146
    %v755 = vmul.f32 %v691, %v146
    %v756 = vmul.f32 %v692, %v146
    %v757 = vmul.f32 %v693, %v146
    %v758 = vmul.f32 %v698, %v146
    %v759 = vmul.f32 %v699, %v146
    %v760 = vmul.f32 %v700, %v146
    %v761 = vmul.f32 %v701, %v146
    %v762 = vmul.f32 %v642, %v156
    %v763 = vmul.f32 %v643, %v156
    %v764 = vmul.f32 %v644, %v156
    %v765 = vmul.f32 %v645, %v156
    %v766 = vmul.f32 %v650, %v156
    %v767 = vmul.f32 %v651, %v156
    %v768 = vmul.f32 %v652, %v156
    %v769 = vmul.f32 %v653, %v156
    %v770 = vadd.f32 %v754, %v762
    %v771 = vadd.f32 %v755, %v763
    %v772 = vadd.f32 %v756, %v764
    %v773 = vadd.f32 %v757, %v765
    %v774 = vadd.f32 %v758, %v766
    %v775 = vadd.f32 %v759, %v767
    %v776 = vadd.f32 %v760, %v768
    %v777 = vadd.f32 %v761, %v769
    %v778 = vmul.f32 %v738, %v171
    %v779 = vmul.f32 %v739, %v171
    %v780 = vmul.f32 %v740, %v171
    %v781 = vmul.f32 %v741, %v171
    %v782 = vmul.f32 %v746, %v171
    %v783 = vmul.f32 %v747, %v171
    %v784 = vmul.f32 %v748, %v171
    %v785 = vmul.f32 %v749, %v171
    %v786 = vadd.f32 %v770, %v778
    %v787 = vadd.f32 %v771, %v779
    %v788 = vadd.f32 %v772, %v780
    %v789 = vadd.f32 %v773, %v781
    %v790 = vadd.f32 %v774, %v782
    %v791 = vadd.f32 %v775, %v783
    %v792 = vadd.f32 %v776, %v784
    %v793 = vadd.f32 %v777, %v785
    %v794 = vmul.f32 %v692, %v187
    %v795 = vmul.f32 %v693, %v187
    %v796 = vmul.f32 %v694, %v187
    %v797 = vmul.f32 %v695, %v187
    %v798 = vmul.f32 %v700, %v187
    %v799 = vmul.f32 %v701, %v187
    %v800 = vmul.f32 %v702, %v187
    %v801 = vmul.f32 %v703, %v187
    %v802 = vadd.f32 %v786, %v794
    %v803 = vadd.f32 %v787, %v795
    %v804 = vadd.f32 %v788, %v796
    %v805 = vadd.f32 %v789, %v797
    %v806 = vadd.f32 %v790, %v798
    %v807 = vadd.f32 %v791, %v799
    %v808 = vadd.f32 %v792, %v800
    %v809 = vadd.f32 %v793, %v801
    %v810 = vmul.f32 %v644, %v207
    %v811 = vmul.f32 %v645, %v207
    %v812 = vmul.f32 %v646, %v207
    %v813 = vmul.f32 %v647, %v207
    %v814 = vmul.f32 %v652, %v207
    %v815 = vmul.f32 %v653, %v207
    %v816 = vmul.f32 %v654, %v207
    %v817 = vmul.f32 %v655, %v207
    %v818 = vadd.f32 %v802, %v810
    %v819 = vadd.f32 %v803, %v811
    %v820 = vadd.f32 %v804, %v812
    %v821 = vadd.f32 %v805, %v813
    %v822 = vadd.f32 %v806, %v814
    %v823 = vadd.f32 %v807, %v815
    %v824 = vadd.f32 %v808, %v816
    %v825 = vadd.f32 %v809, %v817
    %v826 = vmul.f32 %v740, %v227
    %v827 = vmul.f32 %v741, %v227
    %v828 = vmul.f32 %v742, %v227
    %v829 = vmul.f32 %v743, %v227
    %v830 = vmul.f32 %v748, %v227
    %v831 = vmul.f32 %v749, %v227
    %v832 = vmul.f32 %v750, %v227
    %v833 = vmul.f32 %v751, %v227
    %v834 = vadd.f32 %v818, %v826
    %v835 = vadd.f32 %v819, %v827
    %v836 = vadd.f32 %v820, %v828
    %v837 = vadd.f32 %v821, %v829
    %v838 = vadd.f32 %v822, %v830
    %v839 = vadd.f32 %v823, %v831
    %v840 = vadd.f32 %v824, %v832
    %v841 = vadd.f32 %v825, %v833
    %v842 = vmul.f32 %v694, %v247
    %v843 = vmul.f32 %v695, %v247
    %v844 = vmul.f32 %v696, %v247
    %v845 = vmul.f32 %v697, %v247
    %v846 = vmul.f32 %v702, %v247
    %v847 = vmul.f32 %v703, %v247
    %v848 = vmul.f32 %v704, %v247
    %v849 = vmul.f32 %v705, %v247
    %v850 = vadd.f32 %v834, %v842
    %v851 = vadd.f32 %v835, %v843
    %v852 = vadd.f32 %v836, %v844
    %v853 = vadd.f32 %v837, %v845
    %v854 = vadd.f32 %v838, %v846
    %v855 = vadd.f32 %v839, %v847
    %v856 = vadd.f32 %v840, %v848
    %v857 = vadd.f32 %v841, %v849
    %v858 = vmul.f32 %v646, %v267
    %v859 = vmul.f32 %v647, %v267
    %v860 = vmul.f32 %v648, %v267
    %v861 = vmul.f32 %v649, %v267
    %v862 = vmul.f32 %v654, %v267
    %v863 = vmul.f32 %v655, %v267
    %v864 = vmul.f32 %v656, %v267
    %v865 = vmul.f32 %v657, %v267
    %v866 = vadd.f32 %v850, %v858
    %v867 = vadd.f32 %v851, %v859
    %v868 = vadd.f32 %v852, %v860
    %v869 = vadd.f32 %v853, %v861
    %v870 = vadd.f32 %v854, %v862
    %v871 = vadd.f32 %v855, %v863
    %v872 = vadd.f32 %v856, %v864
    %v873 = vadd.f32 %v857, %v865
    %v874 = vmul.f32 %v742, %v287
    %v875 = vmul.f32 %v743, %v287
    %v876 = vmul.f32 %v744, %v287
    %v877 = vmul.f32 %v745, %v287
    %v878 = vmul.f32 %v750, %v287
    %v879 = vmul.f32 %v751, %v287
    %v880 = vmul.f32 %v752, %v287
    %v881 = vmul.f32 %v753, %v287
    %v882 = vadd.f32 %v866, %v874
    %v883 = vadd.f32 %v867, %v875
    %v884 = vadd.f32 %v868, %v876
    %v885 = vadd.f32 %v869, %v877
    %v886 = vadd.f32 %v870, %v878
    %v887 = vadd.f32 %v871, %v879
    %v888 = vadd.f32 %v872, %v880
    %v889 = vadd.f32 %v873, %v881
    %v890 = vadd.f32 %v882, %v883
    %v891 = vadd.f32 %v890, %v884
    %v892 = vadd.f32 %v891, %v885
    %v893 = vadd.f32 %v892, %v886
    %v894 = vadd.f32 %v893, %v887
    %v895 = vadd.f32 %v894, %v888
    %v896 = vadd.f32 %v895, %v889
    %v897 = vrot.slane %v896, 4
    %v898 = vadd.f32 %v896, %v897
    %v899 = vrot.slane %v898, 2
    %v900 = vadd.f32 %v898, %v899
    %v901 = vrot.slane %v900, 1
    %v902 = vadd.f32 %v900, %v901
    %v903 = vadd.f32 %v610, %v902
    %v904 = vmul.f32 %v882, %v882
    %v905 = vmul.f32 %v883, %v883
    %v906 = vmul.f32 %v884, %v884
    %v907 = vmul.f32 %v885, %v885
    %v908 = vmul.f32 %v886, %v886
    %v909 = vmul.f32 %v887, %v887
    %v910 = vmul.f32 %v888, %v888
    %v911 = vmul.f32 %v889, %v889
    %v912 = vadd.f32 %v904, %v905
    %v913 = vadd.f32 %v912, %v906
    %v914 = vadd.f32 %v913, %v907
    %v915 = vadd.f32 %v914, %v908
    %v916 = vadd.f32 %v915, %v909
    %v917 = vadd.f32 %v916, %v910
    %v918 = vadd.f32 %v917, %v911
    %v919 = vrot.slane %v918, 4
    %v920 = vadd.f32 %v918, %v919
    %v921 = vrot.slane %v920, 2
    %v922 = vadd.f32 %v920, %v921
    %v923 = vrot.slane %v922, 1
    %v924 = vadd.f32 %v922, %v923
    %v925 = vadd.f32 %v632, %v924
    %926 = vst [vmem:[#allocation2 + $0x80] sm:$0xff] %v882
    %927 = vst [vmem:[#allocation2 + $0x88] sm:$0xff] %v883
    %928 = vst [vmem:[#allocation2 + $0x90] sm:$0xff] %v884
    %929 = vst [vmem:[#allocation2 + $0x98] sm:$0xff] %v885
    %930 = vst [vmem:[#allocation2 + $0xa0] sm:$0xff] %v886
    %931 = vst [vmem:[#allocation2 + $0xa8] sm:$0xff] %v887
    %932 = vst [vmem:[#allocation2 + $0xb0] sm:$0xff] %v888
    %933 = vst [vmem:[#allocation2 + $0xb8] sm:$0xff] %v889
    %s934 = scalar_lea.vmem [#allocation4], 80
    %v935 = vld [vmem:[%s934] sm:$0xff]
    %v936 = vld [vmem:[%s934 + $0x8] sm:$0xff]
    %v937 = vld [vmem:[%s934 + $0x10] sm:$0xff]
    %v938 = vld [vmem:[%s934 + $0x18] sm:$0xff]
    %v939 = vld [vmem:[%s934 + $0x20] sm:$0xff]
    %v940 = vld [vmem:[%s934 + $0x28] sm:$0xff]
    %v941 = vld [vmem:[%s934 + $0x30] sm:$0xff]
    %v942 = vld [vmem:[%s934 + $0x38] sm:$0xff]
    %v943 = vld [vmem:[%s934 + $0x100] sm:$0xff]
    %v944 = vld [vmem:[%s934 + $0x108] sm:$0xff]
    %v945 = vld [vmem:[%s934 + $0x110] sm:$0xff]
    %v946 = vld [vmem:[%s934 + $0x118] sm:$0xff]
    %v947 = vld [vmem:[%s934 + $0x120] sm:$0xff]
    %v948 = vld [vmem:[%s934 + $0x128] sm:$0xff]
    %v949 = vld [vmem:[%s934 + $0x130] sm:$0xff]
    %v950 = vld [vmem:[%s934 + $0x138] sm:$0xff]
    %v951 = vrot.slane %v935, 7
    %v952 = vrot.slane %v937, 7
    %v953 = vrot.slane %v939, 7
    %v954 = vrot.slane %v941, 7
    %v955 = vrot.slane %v943, 7
    %v956 = vrot.slane %v945, 7
    %v957 = vrot.slane %v947, 7
    %v958 = vrot.slane %v949, 7
    %v959 = vrot.slane %v936, 7
    %v960 = vrot.slane %v938, 7
    %v961 = vrot.slane %v940, 7
    %v962 = vrot.slane %v942, 7
    %v963 = vrot.slane %v944, 7
    %v964 = vrot.slane %v946, 7
    %v965 = vrot.slane %v948, 7
    %v966 = vrot.slane %v950, 7
    %v967 = vsel %vm67, %v951, %v959
    %v968 = vsel %vm67, %v952, %v960
    %v969 = vsel %vm67, %v953, %v961
    %v970 = vsel %vm67, %v954, %v962
    %v971 = vsel %vm67, %v955, %v963
    %v972 = vsel %vm67, %v956, %v964
    %v973 = vsel %vm67, %v957, %v965
    %v974 = vsel %vm67, %v958, %v966
    %v975 = vsel %vm67, %v959, %v951
    %v976 = vsel %vm67, %v960, %v952
    %v977 = vsel %vm67, %v961, %v953
    %v978 = vsel %vm67, %v962, %v954
    %v979 = vsel %vm67, %v963, %v955
    %v980 = vsel %vm67, %v964, %v956
    %v981 = vsel %vm67, %v965, %v957
    %v982 = vsel %vm67, %v966, %v958
    %v983 = vsel %vm82, 0.0, %v975
    %v984 = vsel %vm83, 0.0, %v967
    %v985 = vsel %vm82, 0.0, %v976
    %v986 = vsel %vm83, 0.0, %v968
    %v987 = vsel %vm82, 0.0, %v977
    %v988 = vsel %vm83, 0.0, %v969
    %v989 = vsel %vm82, 0.0, %v978
    %v990 = vsel %vm83, 0.0, %v970
    %v991 = vsel %vm82, 0.0, %v979
    %v992 = vsel %vm83, 0.0, %v971
    %v993 = vsel %vm82, 0.0, %v980
    %v994 = vsel %vm83, 0.0, %v972
    %v995 = vsel %vm82, 0.0, %v981
    %v996 = vsel %vm83, 0.0, %v973
    %v997 = vsel %vm82, 0.0, %v982
    %v998 = vsel %vm83, 0.0, %v974
    %v999 = vrot.slane %v935, 1
    %v1000 = vrot.slane %v937, 1
    %v1001 = vrot.slane %v939, 1
    %v1002 = vrot.slane %v941, 1
    %v1003 = vrot.slane %v943, 1
    %v1004 = vrot.slane %v945, 1
    %v1005 = vrot.slane %v947, 1
    %v1006 = vrot.slane %v949, 1
    %v1007 = vrot.slane %v936, 1
    %v1008 = vrot.slane %v938, 1
    %v1009 = vrot.slane %v940, 1
    %v1010 = vrot.slane %v942, 1
    %v1011 = vrot.slane %v944, 1
    %v1012 = vrot.slane %v946, 1
    %v1013 = vrot.slane %v948, 1
    %v1014 = vrot.slane %v950, 1
    %v1015 = vsel %vm112, %v999, %v1007
    %v1016 = vsel %vm112, %v1000, %v1008
    %v1017 = vsel %vm112, %v1001, %v1009
    %v1018 = vsel %vm112, %v1002, %v1010
    %v1019 = vsel %vm112, %v1003, %v1011
    %v1020 = vsel %vm112, %v1004, %v1012
    %v1021 = vsel %vm112, %v1005, %v1013
    %v1022 = vsel %vm112, %v1006, %v1014
    %v1023 = vsel %vm112, %v1007, %v999
    %v1024 = vsel %vm112, %v1008, %v1000
    %v1025 = vsel %vm112, %v1009, %v1001
    %v1026 = vsel %vm112, %v1010, %v1002
    %v1027 = vsel %vm112, %v1011, %v1003
    %v1028 = vsel %vm112, %v1012, %v1004
    %v1029 = vsel %vm112, %v1013, %v1005
    %v1030 = vsel %vm112, %v1014, %v1006
    %v1031 = vsel %vm127, 0.0, %v1015
    %v1032 = vsel %vm128, 0.0, %v1023
    %v1033 = vsel %vm127, 0.0, %v1016
    %v1034 = vsel %vm128, 0.0, %v1024
    %v1035 = vsel %vm127, 0.0, %v1017
    %v1036 = vsel %vm128, 0.0, %v1025
    %v1037 = vsel %vm127, 0.0, %v1018
    %v1038 = vsel %vm128, 0.0, %v1026
    %v1039 = vsel %vm127, 0.0, %v1019
    %v1040 = vsel %vm128, 0.0, %v1027
    %v1041 = vsel %vm127, 0.0, %v1020
    %v1042 = vsel %vm128, 0.0, %v1028
    %v1043 = vsel %vm127, 0.0, %v1021
    %v1044 = vsel %vm128, 0.0, %v1029
    %v1045 = vsel %vm127, 0.0, %v1022
    %v1046 = vsel %vm128, 0.0, %v1030
    %v1047 = vmul.f32 %v983, %v146
    %v1048 = vmul.f32 %v984, %v146
    %v1049 = vmul.f32 %v985, %v146
    %v1050 = vmul.f32 %v986, %v146
    %v1051 = vmul.f32 %v991, %v146
    %v1052 = vmul.f32 %v992, %v146
    %v1053 = vmul.f32 %v993, %v146
    %v1054 = vmul.f32 %v994, %v146
    %v1055 = vmul.f32 %v935, %v156
    %v1056 = vmul.f32 %v936, %v156
    %v1057 = vmul.f32 %v937, %v156
    %v1058 = vmul.f32 %v938, %v156
    %v1059 = vmul.f32 %v943, %v156
    %v1060 = vmul.f32 %v944, %v156
    %v1061 = vmul.f32 %v945, %v156
    %v1062 = vmul.f32 %v946, %v156
    %v1063 = vadd.f32 %v1047, %v1055
    %v1064 = vadd.f32 %v1048, %v1056
    %v1065 = vadd.f32 %v1049, %v1057
    %v1066 = vadd.f32 %v1050, %v1058
    %v1067 = vadd.f32 %v1051, %v1059
    %v1068 = vadd.f32 %v1052, %v1060
    %v1069 = vadd.f32 %v1053, %v1061
    %v1070 = vadd.f32 %v1054, %v1062
    %v1071 = vmul.f32 %v1031, %v171
    %v1072 = vmul.f32 %v1032, %v171
    %v1073 = vmul.f32 %v1033, %v171
    %v1074 = vmul.f32 %v1034, %v171
    %v1075 = vmul.f32 %v1039, %v171
    %v1076 = vmul.f32 %v1040, %v171
    %v1077 = vmul.f32 %v1041, %v171
    %v1078 = vmul.f32 %v1042, %v171
    %v1079 = vadd.f32 %v1063, %v1071
    %v1080 = vadd.f32 %v1064, %v1072
    %v1081 = vadd.f32 %v1065, %v1073
    %v1082 = vadd.f32 %v1066, %v1074
    %v1083 = vadd.f32 %v1067, %v1075
    %v1084 = vadd.f32 %v1068, %v1076
    %v1085 = vadd.f32 %v1069, %v1077
    %v1086 = vadd.f32 %v1070, %v1078
    %v1087 = vmul.f32 %v985, %v187
    %v1088 = vmul.f32 %v986, %v187
    %v1089 = vmul.f32 %v987, %v187
    %v1090 = vmul.f32 %v988, %v187
    %v1091 = vmul.f32 %v993, %v187
    %v1092 = vmul.f32 %v994, %v187
    %v1093 = vmul.f32 %v995, %v187
    %v1094 = vmul.f32 %v996, %v187
    %v1095 = vadd.f32 %v1079, %v1087
    %v1096 = vadd.f32 %v1080, %v1088
    %v1097 = vadd.f32 %v1081, %v1089
    %v1098 = vadd.f32 %v1082, %v1090
    %v1099 = vadd.f32 %v1083, %v1091
    %v1100 = vadd.f32 %v1084, %v1092
    %v1101 = vadd.f32 %v1085, %v1093
    %v1102 = vadd.f32 %v1086, %v1094
    %v1103 = vmul.f32 %v937, %v207
    %v1104 = vmul.f32 %v938, %v207
    %v1105 = vmul.f32 %v939, %v207
    %v1106 = vmul.f32 %v940, %v207
    %v1107 = vmul.f32 %v945, %v207
    %v1108 = vmul.f32 %v946, %v207
    %v1109 = vmul.f32 %v947, %v207
    %v1110 = vmul.f32 %v948, %v207
    %v1111 = vadd.f32 %v1095, %v1103
    %v1112 = vadd.f32 %v1096, %v1104
    %v1113 = vadd.f32 %v1097, %v1105
    %v1114 = vadd.f32 %v1098, %v1106
    %v1115 = vadd.f32 %v1099, %v1107
    %v1116 = vadd.f32 %v1100, %v1108
    %v1117 = vadd.f32 %v1101, %v1109
    %v1118 = vadd.f32 %v1102, %v1110
    %v1119 = vmul.f32 %v1033, %v227
    %v1120 = vmul.f32 %v1034, %v227
    %v1121 = vmul.f32 %v1035, %v227
    %v1122 = vmul.f32 %v1036, %v227
    %v1123 = vmul.f32 %v1041, %v227
    %v1124 = vmul.f32 %v1042, %v227
    %v1125 = vmul.f32 %v1043, %v227
    %v1126 = vmul.f32 %v1044, %v227
    %v1127 = vadd.f32 %v1111, %v1119
    %v1128 = vadd.f32 %v1112, %v1120
    %v1129 = vadd.f32 %v1113, %v1121
    %v1130 = vadd.f32 %v1114, %v1122
    %v1131 = vadd.f32 %v1115, %v1123
    %v1132 = vadd.f32 %v1116, %v1124
    %v1133 = vadd.f32 %v1117, %v1125
    %v1134 = vadd.f32 %v1118, %v1126
    %v1135 = vmul.f32 %v987, %v247
    %v1136 = vmul.f32 %v988, %v247
    %v1137 = vmul.f32 %v989, %v247
    %v1138 = vmul.f32 %v990, %v247
    %v1139 = vmul.f32 %v995, %v247
    %v1140 = vmul.f32 %v996, %v247
    %v1141 = vmul.f32 %v997, %v247
    %v1142 = vmul.f32 %v998, %v247
    %v1143 = vadd.f32 %v1127, %v1135
    %v1144 = vadd.f32 %v1128, %v1136
    %v1145 = vadd.f32 %v1129, %v1137
    %v1146 = vadd.f32 %v1130, %v1138
    %v1147 = vadd.f32 %v1131, %v1139
    %v1148 = vadd.f32 %v1132, %v1140
    %v1149 = vadd.f32 %v1133, %v1141
    %v1150 = vadd.f32 %v1134, %v1142
    %v1151 = vmul.f32 %v939, %v267
    %v1152 = vmul.f32 %v940, %v267
    %v1153 = vmul.f32 %v941, %v267
    %v1154 = vmul.f32 %v942, %v267
    %v1155 = vmul.f32 %v947, %v267
    %v1156 = vmul.f32 %v948, %v267
    %v1157 = vmul.f32 %v949, %v267
    %v1158 = vmul.f32 %v950, %v267
    %v1159 = vadd.f32 %v1143, %v1151
    %v1160 = vadd.f32 %v1144, %v1152
    %v1161 = vadd.f32 %v1145, %v1153
    %v1162 = vadd.f32 %v1146, %v1154
    %v1163 = vadd.f32 %v1147, %v1155
    %v1164 = vadd.f32 %v1148, %v1156
    %v1165 = vadd.f32 %v1149, %v1157
    %v1166 = vadd.f32 %v1150, %v1158
    %v1167 = vmul.f32 %v1035, %v287
    %v1168 = vmul.f32 %v1036, %v287
    %v1169 = vmul.f32 %v1037, %v287
    %v1170 = vmul.f32 %v1038, %v287
    %v1171 = vmul.f32 %v1043, %v287
    %v1172 = vmul.f32 %v1044, %v287
    %v1173 = vmul.f32 %v1045, %v287
    %v1174 = vmul.f32 %v1046, %v287
    %v1175 = vadd.f32 %v1159, %v1167
    %v1176 = vadd.f32 %v1160, %v1168
    %v1177 = vadd.f32 %v1161, %v1169
    %v1178 = vadd.f32 %v1162, %v1170
    %v1179 = vadd.f32 %v1163, %v1171
    %v1180 = vadd.f32 %v1164, %v1172
    %v1181 = vadd.f32 %v1165, %v1173
    %v1182 = vadd.f32 %v1166, %v1174
    %v1183 = vadd.f32 %v1175, %v1176
    %v1184 = vadd.f32 %v1183, %v1177
    %v1185 = vadd.f32 %v1184, %v1178
    %v1186 = vadd.f32 %v1185, %v1179
    %v1187 = vadd.f32 %v1186, %v1180
    %v1188 = vadd.f32 %v1187, %v1181
    %v1189 = vadd.f32 %v1188, %v1182
    %v1190 = vrot.slane %v1189, 4
    %v1191 = vadd.f32 %v1189, %v1190
    %v1192 = vrot.slane %v1191, 2
    %v1193 = vadd.f32 %v1191, %v1192
    %v1194 = vrot.slane %v1193, 1
    %v1195 = vadd.f32 %v1193, %v1194
    %v1196 = vadd.f32 %v903, %v1195
    %v1197 = vmul.f32 %v1175, %v1175
    %v1198 = vmul.f32 %v1176, %v1176
    %v1199 = vmul.f32 %v1177, %v1177
    %v1200 = vmul.f32 %v1178, %v1178
    %v1201 = vmul.f32 %v1179, %v1179
    %v1202 = vmul.f32 %v1180, %v1180
    %v1203 = vmul.f32 %v1181, %v1181
    %v1204 = vmul.f32 %v1182, %v1182
    %v1205 = vadd.f32 %v1197, %v1198
    %v1206 = vadd.f32 %v1205, %v1199
    %v1207 = vadd.f32 %v1206, %v1200
    %v1208 = vadd.f32 %v1207, %v1201
    %v1209 = vadd.f32 %v1208, %v1202
    %v1210 = vadd.f32 %v1209, %v1203
    %v1211 = vadd.f32 %v1210, %v1204
    %v1212 = vrot.slane %v1211, 4
    %v1213 = vadd.f32 %v1211, %v1212
    %v1214 = vrot.slane %v1213, 2
    %v1215 = vadd.f32 %v1213, %v1214
    %v1216 = vrot.slane %v1215, 1
    %v1217 = vadd.f32 %v1215, %v1216
    %v1218 = vadd.f32 %v925, %v1217
    %1219 = vst [vmem:[#allocation2 + $0xc0] sm:$0xff] %v1175
    %1220 = vst [vmem:[#allocation2 + $0xc8] sm:$0xff] %v1176
    %1221 = vst [vmem:[#allocation2 + $0xd0] sm:$0xff] %v1177
    %1222 = vst [vmem:[#allocation2 + $0xd8] sm:$0xff] %v1178
    %1223 = vst [vmem:[#allocation2 + $0xe0] sm:$0xff] %v1179
    %1224 = vst [vmem:[#allocation2 + $0xe8] sm:$0xff] %v1180
    %1225 = vst [vmem:[#allocation2 + $0xf0] sm:$0xff] %v1181
    %1226 = vst [vmem:[#allocation2 + $0xf8] sm:$0xff] %v1182
    %s1227 = scalar_lea.vmem [#allocation4], 112
    %v1228 = vld [vmem:[%s1227] sm:$0xff]
    %v1229 = vld [vmem:[%s1227 + $0x8] sm:$0xff]
    %v1230 = vld [vmem:[%s1227 + $0x10] sm:$0xff]
    %v1231 = vld [vmem:[%s1227 + $0x18] sm:$0xff]
    %v1232 = vld [vmem:[%s1227 + $0x20] sm:$0xff]
    %v1233 = vld [vmem:[%s1227 + $0x28] sm:$0xff]
    %v1234 = vld [vmem:[%s1227 + $0x30] sm:$0xff]
    %v1235 = vld [vmem:[%s1227 + $0x38] sm:$0xff]
    %v1236 = vld [vmem:[%s1227 + $0x100] sm:$0xff]
    %v1237 = vld [vmem:[%s1227 + $0x108] sm:$0xff]
    %v1238 = vld [vmem:[%s1227 + $0x110] sm:$0xff]
    %v1239 = vld [vmem:[%s1227 + $0x118] sm:$0xff]
    %v1240 = vld [vmem:[%s1227 + $0x120] sm:$0xff]
    %v1241 = vld [vmem:[%s1227 + $0x128] sm:$0xff]
    %v1242 = vld [vmem:[%s1227 + $0x130] sm:$0xff]
    %v1243 = vld [vmem:[%s1227 + $0x138] sm:$0xff]
    %v1244 = vrot.slane %v1228, 7
    %v1245 = vrot.slane %v1230, 7
    %v1246 = vrot.slane %v1232, 7
    %v1247 = vrot.slane %v1234, 7
    %v1248 = vrot.slane %v1236, 7
    %v1249 = vrot.slane %v1238, 7
    %v1250 = vrot.slane %v1240, 7
    %v1251 = vrot.slane %v1242, 7
    %v1252 = vrot.slane %v1229, 7
    %v1253 = vrot.slane %v1231, 7
    %v1254 = vrot.slane %v1233, 7
    %v1255 = vrot.slane %v1235, 7
    %v1256 = vrot.slane %v1237, 7
    %v1257 = vrot.slane %v1239, 7
    %v1258 = vrot.slane %v1241, 7
    %v1259 = vrot.slane %v1243, 7
    %v1260 = vsel %vm67, %v1244, %v1252
    %v1261 = vsel %vm67, %v1245, %v1253
    %v1262 = vsel %vm67, %v1246, %v1254
    %v1263 = vsel %vm67, %v1247, %v1255
    %v1264 = vsel %vm67, %v1248, %v1256
    %v1265 = vsel %vm67, %v1249, %v1257
    %v1266 = vsel %vm67, %v1250, %v1258
    %v1267 = vsel %vm67, %v1251, %v1259
    %v1268 = vsel %vm67, %v1252, %v1244
    %v1269 = vsel %vm67, %v1253, %v1245
    %v1270 = vsel %vm67, %v1254, %v1246
    %v1271 = vsel %vm67, %v1255, %v1247
    %v1272 = vsel %vm67, %v1256, %v1248
    %v1273 = vsel %vm67, %v1257, %v1249
    %v1274 = vsel %vm67, %v1258, %v1250
    %v1275 = vsel %vm67, %v1259, %v1251
    %v1276 = vsel %vm82, 0.0, %v1268
    %v1277 = vsel %vm83, 0.0, %v1260
    %v1278 = vsel %vm82, 0.0, %v1269
    %v1279 = vsel %vm83, 0.0, %v1261
    %v1280 = vsel %vm82, 0.0, %v1270
    %v1281 = vsel %vm83, 0.0, %v1262
    %v1282 = vsel %vm82, 0.0, %v1271
    %v1283 = vsel %vm83, 0.0, %v1263
    %v1284 = vsel %vm82, 0.0, %v1272
    %v1285 = vsel %vm83, 0.0, %v1264
    %v1286 = vsel %vm82, 0.0, %v1273
    %v1287 = vsel %vm83, 0.0, %v1265
    %v1288 = vsel %vm82, 0.0, %v1274
    %v1289 = vsel %vm83, 0.0, %v1266
    %v1290 = vsel %vm82, 0.0, %v1275
    %v1291 = vsel %vm83, 0.0, %v1267
    %v1292 = vrot.slane %v1228, 1
    %v1293 = vrot.slane %v1230, 1
    %v1294 = vrot.slane %v1232, 1
    %v1295 = vrot.slane %v1234, 1
    %v1296 = vrot.slane %v1236, 1
    %v1297 = vrot.slane %v1238, 1
    %v1298 = vrot.slane %v1240, 1
    %v1299 = vrot.slane %v1242, 1
    %v1300 = vrot.slane %v1229, 1
    %v1301 = vrot.slane %v1231, 1
    %v1302 = vrot.slane %v1233, 1
    %v1303 = vrot.slane %v1235, 1
    %v1304 = vrot.slane %v1237, 1
    %v1305 = vrot.slane %v1239, 1
    %v1306 = vrot.slane %v1241, 1
    %v1307 = vrot.slane %v1243, 1
    %v1308 = vsel %vm112, %v1292, %v1300
    %v1309 = vsel %vm112, %v1293, %v1301
    %v1310 = vsel %vm112, %v1294, %v1302
    %v1311 = vsel %vm112, %v1295, %v1303
    %v1312 = vsel %vm112, %v1296, %v1304
    %v1313 = vsel %vm112, %v1297, %v1305
    %v1314 = vsel %vm112, %v1298, %v1306
    %v1315 = vsel %vm112, %v1299, %v1307
    %v1316 = vsel %vm112, %v1300, %v1292
    %v1317 = vsel %vm112, %v1301, %v1293
    %v1318 = vsel %vm112, %v1302, %v1294
    %v1319 = vsel %vm112, %v1303, %v1295
    %v1320 = vsel %vm112, %v1304, %v1296
    %v1321 = vsel %vm112, %v1305, %v1297
    %v1322 = vsel %vm112, %v1306, %v1298
    %v1323 = vsel %vm112, %v1307, %v1299
    %v1324 = vsel %vm127, 0.0, %v1308
    %v1325 = vsel %vm128, 0.0, %v1316
    %v1326 = vsel %vm127, 0.0, %v1309
    %v1327 = vsel %vm128, 0.0, %v1317
    %v1328 = vsel %vm127, 0.0, %v1310
    %v1329 = vsel %vm128, 0.0, %v1318
    %v1330 = vsel %vm127, 0.0, %v1311
    %v1331 = vsel %vm128, 0.0, %v1319
    %v1332 = vsel %vm127, 0.0, %v1312
    %v1333 = vsel %vm128, 0.0, %v1320
    %v1334 = vsel %vm127, 0.0, %v1313
    %v1335 = vsel %vm128, 0.0, %v1321
    %v1336 = vsel %vm127, 0.0, %v1314
    %v1337 = vsel %vm128, 0.0, %v1322
    %v1338 = vsel %vm127, 0.0, %v1315
    %v1339 = vsel %vm128, 0.0, %v1323
    %v1340 = vmul.f32 %v1276, %v146
    %v1341 = vmul.f32 %v1277, %v146
    %v1342 = vmul.f32 %v1278, %v146
    %v1343 = vmul.f32 %v1279, %v146
    %v1344 = vmul.f32 %v1284, %v146
    %v1345 = vmul.f32 %v1285, %v146
    %v1346 = vmul.f32 %v1286, %v146
    %v1347 = vmul.f32 %v1287, %v146
    %v1348 = vmul.f32 %v1228, %v156
    %v1349 = vmul.f32 %v1229, %v156
    %v1350 = vmul.f32 %v1230, %v156
    %v1351 = vmul.f32 %v1231, %v156
    %v1352 = vmul.f32 %v1236, %v156
    %v1353 = vmul.f32 %v1237, %v156
    %v1354 = vmul.f32 %v1238, %v156
    %v1355 = vmul.f32 %v1239, %v156
    %v1356 = vadd.f32 %v1340, %v1348
    %v1357 = vadd.f32 %v1341, %v1349
    %v1358 = vadd.f32 %v1342, %v1350
    %v1359 = vadd.f32 %v1343, %v1351
    %v1360 = vadd.f32 %v1344, %v1352
    %v1361 = vadd.f32 %v1345, %v1353
    %v1362 = vadd.f32 %v1346, %v1354
    %v1363 = vadd.f32 %v1347, %v1355
    %v1364 = vmul.f32 %v1324, %v171
    %v1365 = vmul.f32 %v1325, %v171
    %v1366 = vmul.f32 %v1326, %v171
    %v1367 = vmul.f32 %v1327, %v171
    %v1368 = vmul.f32 %v1332, %v171
    %v1369 = vmul.f32 %v1333, %v171
    %v1370 = vmul.f32 %v1334, %v171
    %v1371 = vmul.f32 %v1335, %v171
    %v1372 = vadd.f32 %v1356, %v1364
    %v1373 = vadd.f32 %v1357, %v1365
    %v1374 = vadd.f32 %v1358, %v1366
    %v1375 = vadd.f32 %v1359, %v1367
    %v1376 = vadd.f32 %v1360, %v1368
    %v1377 = vadd.f32 %v1361, %v1369
    %v1378 = vadd.f32 %v1362, %v1370
    %v1379 = vadd.f32 %v1363, %v1371
    %v1380 = vmul.f32 %v1278, %v187
    %v1381 = vmul.f32 %v1279, %v187
    %v1382 = vmul.f32 %v1280, %v187
    %v1383 = vmul.f32 %v1281, %v187
    %v1384 = vmul.f32 %v1286, %v187
    %v1385 = vmul.f32 %v1287, %v187
    %v1386 = vmul.f32 %v1288, %v187
    %v1387 = vmul.f32 %v1289, %v187
    %v1388 = vadd.f32 %v1372, %v1380
    %v1389 = vadd.f32 %v1373, %v1381
    %v1390 = vadd.f32 %v1374, %v1382
    %v1391 = vadd.f32 %v1375, %v1383
    %v1392 = vadd.f32 %v1376, %v1384
    %v1393 = vadd.f32 %v1377, %v1385
    %v1394 = vadd.f32 %v1378, %v1386
    %v1395 = vadd.f32 %v1379, %v1387
    %v1396 = vmul.f32 %v1230, %v207
    %v1397 = vmul.f32 %v1231, %v207
    %v1398 = vmul.f32 %v1232, %v207
    %v1399 = vmul.f32 %v1233, %v207
    %v1400 = vmul.f32 %v1238, %v207
    %v1401 = vmul.f32 %v1239, %v207
    %v1402 = vmul.f32 %v1240, %v207
    %v1403 = vmul.f32 %v1241, %v207
    %v1404 = vadd.f32 %v1388, %v1396
    %v1405 = vadd.f32 %v1389, %v1397
    %v1406 = vadd.f32 %v1390, %v1398
    %v1407 = vadd.f32 %v1391, %v1399
    %v1408 = vadd.f32 %v1392, %v1400
    %v1409 = vadd.f32 %v1393, %v1401
    %v1410 = vadd.f32 %v1394, %v1402
    %v1411 = vadd.f32 %v1395, %v1403
    %v1412 = vmul.f32 %v1326, %v227
    %v1413 = vmul.f32 %v1327, %v227
    %v1414 = vmul.f32 %v1328, %v227
    %v1415 = vmul.f32 %v1329, %v227
    %v1416 = vmul.f32 %v1334, %v227
    %v1417 = vmul.f32 %v1335, %v227
    %v1418 = vmul.f32 %v1336, %v227
    %v1419 = vmul.f32 %v1337, %v227
    %v1420 = vadd.f32 %v1404, %v1412
    %v1421 = vadd.f32 %v1405, %v1413
    %v1422 = vadd.f32 %v1406, %v1414
    %v1423 = vadd.f32 %v1407, %v1415
    %v1424 = vadd.f32 %v1408, %v1416
    %v1425 = vadd.f32 %v1409, %v1417
    %v1426 = vadd.f32 %v1410, %v1418
    %v1427 = vadd.f32 %v1411, %v1419
    %v1428 = vmul.f32 %v1280, %v247
    %v1429 = vmul.f32 %v1281, %v247
    %v1430 = vmul.f32 %v1282, %v247
    %v1431 = vmul.f32 %v1283, %v247
    %v1432 = vmul.f32 %v1288, %v247
    %v1433 = vmul.f32 %v1289, %v247
    %v1434 = vmul.f32 %v1290, %v247
    %v1435 = vmul.f32 %v1291, %v247
    %v1436 = vadd.f32 %v1420, %v1428
    %v1437 = vadd.f32 %v1421, %v1429
    %v1438 = vadd.f32 %v1422, %v1430
    %v1439 = vadd.f32 %v1423, %v1431
    %v1440 = vadd.f32 %v1424, %v1432
    %v1441 = vadd.f32 %v1425, %v1433
    %v1442 = vadd.f32 %v1426, %v1434
    %v1443 = vadd.f32 %v1427, %v1435
    %v1444 = vmul.f32 %v1232, %v267
    %v1445 = vmul.f32 %v1233, %v267
    %v1446 = vmul.f32 %v1234, %v267
    %v1447 = vmul.f32 %v1235, %v267
    %v1448 = vmul.f32 %v1240, %v267
    %v1449 = vmul.f32 %v1241, %v267
    %v1450 = vmul.f32 %v1242, %v267
    %v1451 = vmul.f32 %v1243, %v267
    %v1452 = vadd.f32 %v1436, %v1444
    %v1453 = vadd.f32 %v1437, %v1445
    %v1454 = vadd.f32 %v1438, %v1446
    %v1455 = vadd.f32 %v1439, %v1447
    %v1456 = vadd.f32 %v1440, %v1448
    %v1457 = vadd.f32 %v1441, %v1449
    %v1458 = vadd.f32 %v1442, %v1450
    %v1459 = vadd.f32 %v1443, %v1451
    %v1460 = vmul.f32 %v1328, %v287
    %v1461 = vmul.f32 %v1329, %v287
    %v1462 = vmul.f32 %v1330, %v287
    %v1463 = vmul.f32 %v1331, %v287
    %v1464 = vmul.f32 %v1336, %v287
    %v1465 = vmul.f32 %v1337, %v287
    %v1466 = vmul.f32 %v1338, %v287
    %v1467 = vmul.f32 %v1339, %v287
    %v1468 = vadd.f32 %v1452, %v1460
    %v1469 = vadd.f32 %v1453, %v1461
    %v1470 = vadd.f32 %v1454, %v1462
    %v1471 = vadd.f32 %v1455, %v1463
    %v1472 = vadd.f32 %v1456, %v1464
    %v1473 = vadd.f32 %v1457, %v1465
    %v1474 = vadd.f32 %v1458, %v1466
    %v1475 = vadd.f32 %v1459, %v1467
    %v1476 = vadd.f32 %v1468, %v1469
    %v1477 = vadd.f32 %v1476, %v1470
    %v1478 = vadd.f32 %v1477, %v1471
    %v1479 = vadd.f32 %v1478, %v1472
    %v1480 = vadd.f32 %v1479, %v1473
    %v1481 = vadd.f32 %v1480, %v1474
    %v1482 = vadd.f32 %v1481, %v1475
    %v1483 = vrot.slane %v1482, 4
    %v1484 = vadd.f32 %v1482, %v1483
    %v1485 = vrot.slane %v1484, 2
    %v1486 = vadd.f32 %v1484, %v1485
    %v1487 = vrot.slane %v1486, 1
    %v1488 = vadd.f32 %v1486, %v1487
    %v1489 = vadd.f32 %v1196, %v1488
    %v1490 = vmul.f32 %v1468, %v1468
    %v1491 = vmul.f32 %v1469, %v1469
    %v1492 = vmul.f32 %v1470, %v1470
    %v1493 = vmul.f32 %v1471, %v1471
    %v1494 = vmul.f32 %v1472, %v1472
    %v1495 = vmul.f32 %v1473, %v1473
    %v1496 = vmul.f32 %v1474, %v1474
    %v1497 = vmul.f32 %v1475, %v1475
    %v1498 = vadd.f32 %v1490, %v1491
    %v1499 = vadd.f32 %v1498, %v1492
    %v1500 = vadd.f32 %v1499, %v1493
    %v1501 = vadd.f32 %v1500, %v1494
    %v1502 = vadd.f32 %v1501, %v1495
    %v1503 = vadd.f32 %v1502, %v1496
    %v1504 = vadd.f32 %v1503, %v1497
    %v1505 = vrot.slane %v1504, 4
    %v1506 = vadd.f32 %v1504, %v1505
    %v1507 = vrot.slane %v1506, 2
    %v1508 = vadd.f32 %v1506, %v1507
    %v1509 = vrot.slane %v1508, 1
    %v1510 = vadd.f32 %v1508, %v1509
    %v1511 = vadd.f32 %v1218, %v1510
    %1512 = vst [vmem:[#allocation2 + $0x100] sm:$0xff] %v1468
    %1513 = vst [vmem:[#allocation2 + $0x108] sm:$0xff] %v1469
    %1514 = vst [vmem:[#allocation2 + $0x110] sm:$0xff] %v1470
    %1515 = vst [vmem:[#allocation2 + $0x118] sm:$0xff] %v1471
    %1516 = vst [vmem:[#allocation2 + $0x120] sm:$0xff] %v1472
    %1517 = vst [vmem:[#allocation2 + $0x128] sm:$0xff] %v1473
    %1518 = vst [vmem:[#allocation2 + $0x130] sm:$0xff] %v1474
    %1519 = vst [vmem:[#allocation2 + $0x138] sm:$0xff] %v1475
    %s1520 = scalar_lea.vmem [#allocation4], 144
    %v1521 = vld [vmem:[%s1520] sm:$0xff]
    %v1522 = vld [vmem:[%s1520 + $0x8] sm:$0xff]
    %v1523 = vld [vmem:[%s1520 + $0x10] sm:$0xff]
    %v1524 = vld [vmem:[%s1520 + $0x18] sm:$0xff]
    %v1525 = vld [vmem:[%s1520 + $0x20] sm:$0xff]
    %v1526 = vld [vmem:[%s1520 + $0x28] sm:$0xff]
    %v1527 = vld [vmem:[%s1520 + $0x30] sm:$0xff]
    %v1528 = vld [vmem:[%s1520 + $0x38] sm:$0xff]
    %v1529 = vld [vmem:[%s1520 + $0x100] sm:$0xff]
    %v1530 = vld [vmem:[%s1520 + $0x108] sm:$0xff]
    %v1531 = vld [vmem:[%s1520 + $0x110] sm:$0xff]
    %v1532 = vld [vmem:[%s1520 + $0x118] sm:$0xff]
    %v1533 = vld [vmem:[%s1520 + $0x120] sm:$0xff]
    %v1534 = vld [vmem:[%s1520 + $0x128] sm:$0xff]
    %v1535 = vld [vmem:[%s1520 + $0x130] sm:$0xff]
    %v1536 = vld [vmem:[%s1520 + $0x138] sm:$0xff]
    %v1537 = vrot.slane %v1521, 7
    %v1538 = vrot.slane %v1523, 7
    %v1539 = vrot.slane %v1525, 7
    %v1540 = vrot.slane %v1527, 7
    %v1541 = vrot.slane %v1529, 7
    %v1542 = vrot.slane %v1531, 7
    %v1543 = vrot.slane %v1533, 7
    %v1544 = vrot.slane %v1535, 7
    %v1545 = vrot.slane %v1522, 7
    %v1546 = vrot.slane %v1524, 7
    %v1547 = vrot.slane %v1526, 7
    %v1548 = vrot.slane %v1528, 7
    %v1549 = vrot.slane %v1530, 7
    %v1550 = vrot.slane %v1532, 7
    %v1551 = vrot.slane %v1534, 7
    %v1552 = vrot.slane %v1536, 7
    %v1553 = vsel %vm67, %v1537, %v1545
    %v1554 = vsel %vm67, %v1538, %v1546
    %v1555 = vsel %vm67, %v1539, %v1547
    %v1556 = vsel %vm67, %v1540, %v1548
    %v1557 = vsel %vm67, %v1541, %v1549
    %v1558 = vsel %vm67, %v1542, %v1550
    %v1559 = vsel %vm67, %v1543, %v1551
    %v1560 = vsel %vm67, %v1544, %v1552
    %v1561 = vsel %vm67, %v1545, %v1537
    %v1562 = vsel %vm67, %v1546, %v1538
    %v1563 = vsel %vm67, %v1547, %v1539
    %v1564 = vsel %vm67, %v1548, %v1540
    %v1565 = vsel %vm67, %v1549, %v1541
    %v1566 = vsel %vm67, %v1550, %v1542
    %v1567 = vsel %vm67, %v1551, %v1543
    %v1568 = vsel %vm67, %v1552, %v1544
    %v1569 = vsel %vm82, 0.0, %v1561
    %v1570 = vsel %vm83, 0.0, %v1553
    %v1571 = vsel %vm82, 0.0, %v1562
    %v1572 = vsel %vm83, 0.0, %v1554
    %v1573 = vsel %vm82, 0.0, %v1563
    %v1574 = vsel %vm83, 0.0, %v1555
    %v1575 = vsel %vm82, 0.0, %v1564
    %v1576 = vsel %vm83, 0.0, %v1556
    %v1577 = vsel %vm82, 0.0, %v1565
    %v1578 = vsel %vm83, 0.0, %v1557
    %v1579 = vsel %vm82, 0.0, %v1566
    %v1580 = vsel %vm83, 0.0, %v1558
    %v1581 = vsel %vm82, 0.0, %v1567
    %v1582 = vsel %vm83, 0.0, %v1559
    %v1583 = vsel %vm82, 0.0, %v1568
    %v1584 = vsel %vm83, 0.0, %v1560
    %v1585 = vrot.slane %v1521, 1
    %v1586 = vrot.slane %v1523, 1
    %v1587 = vrot.slane %v1525, 1
    %v1588 = vrot.slane %v1527, 1
    %v1589 = vrot.slane %v1529, 1
    %v1590 = vrot.slane %v1531, 1
    %v1591 = vrot.slane %v1533, 1
    %v1592 = vrot.slane %v1535, 1
    %v1593 = vrot.slane %v1522, 1
    %v1594 = vrot.slane %v1524, 1
    %v1595 = vrot.slane %v1526, 1
    %v1596 = vrot.slane %v1528, 1
    %v1597 = vrot.slane %v1530, 1
    %v1598 = vrot.slane %v1532, 1
    %v1599 = vrot.slane %v1534, 1
    %v1600 = vrot.slane %v1536, 1
    %v1601 = vsel %vm112, %v1585, %v1593
    %v1602 = vsel %vm112, %v1586, %v1594
    %v1603 = vsel %vm112, %v1587, %v1595
    %v1604 = vsel %vm112, %v1588, %v1596
    %v1605 = vsel %vm112, %v1589, %v1597
    %v1606 = vsel %vm112, %v1590, %v1598
    %v1607 = vsel %vm112, %v1591, %v1599
    %v1608 = vsel %vm112, %v1592, %v1600
    %v1609 = vsel %vm112, %v1593, %v1585
    %v1610 = vsel %vm112, %v1594, %v1586
    %v1611 = vsel %vm112, %v1595, %v1587
    %v1612 = vsel %vm112, %v1596, %v1588
    %v1613 = vsel %vm112, %v1597, %v1589
    %v1614 = vsel %vm112, %v1598, %v1590
    %v1615 = vsel %vm112, %v1599, %v1591
    %v1616 = vsel %vm112, %v1600, %v1592
    %v1617 = vsel %vm127, 0.0, %v1601
    %v1618 = vsel %vm128, 0.0, %v1609
    %v1619 = vsel %vm127, 0.0, %v1602
    %v1620 = vsel %vm128, 0.0, %v1610
    %v1621 = vsel %vm127, 0.0, %v1603
    %v1622 = vsel %vm128, 0.0, %v1611
    %v1623 = vsel %vm127, 0.0, %v1604
    %v1624 = vsel %vm128, 0.0, %v1612
    %v1625 = vsel %vm127, 0.0, %v1605
    %v1626 = vsel %vm128, 0.0, %v1613
    %v1627 = vsel %vm127, 0.0, %v1606
    %v1628 = vsel %vm128, 0.0, %v1614
    %v1629 = vsel %vm127, 0.0, %v1607
    %v1630 = vsel %vm128, 0.0, %v1615
    %v1631 = vsel %vm127, 0.0, %v1608
    %v1632 = vsel %vm128, 0.0, %v1616
    %v1633 = vmul.f32 %v1569, %v146
    %v1634 = vmul.f32 %v1570, %v146
    %v1635 = vmul.f32 %v1571, %v146
    %v1636 = vmul.f32 %v1572, %v146
    %v1637 = vmul.f32 %v1577, %v146
    %v1638 = vmul.f32 %v1578, %v146
    %v1639 = vmul.f32 %v1579, %v146
    %v1640 = vmul.f32 %v1580, %v146
    %v1641 = vmul.f32 %v1521, %v156
    %v1642 = vmul.f32 %v1522, %v156
    %v1643 = vmul.f32 %v1523, %v156
    %v1644 = vmul.f32 %v1524, %v156
    %v1645 = vmul.f32 %v1529, %v156
    %v1646 = vmul.f32 %v1530, %v156
    %v1647 = vmul.f32 %v1531, %v156
    %v1648 = vmul.f32 %v1532, %v156
    %v1649 = vadd.f32 %v1633, %v1641
    %v1650 = vadd.f32 %v1634, %v1642
    %v1651 = vadd.f32 %v1635, %v1643
    %v1652 = vadd.f32 %v1636, %v1644
    %v1653 = vadd.f32 %v1637, %v1645
    %v1654 = vadd.f32 %v1638, %v1646
    %v1655 = vadd.f32 %v1639, %v1647
    %v1656 = vadd.f32 %v1640, %v1648
    %v1657 = vmul.f32 %v1617, %v171
    %v1658 = vmul.f32 %v1618, %v171
    %v1659 = vmul.f32 %v1619, %v171
    %v1660 = vmul.f32 %v1620, %v171
    %v1661 = vmul.f32 %v1625, %v171
    %v1662 = vmul.f32 %v1626, %v171
    %v1663 = vmul.f32 %v1627, %v171
    %v1664 = vmul.f32 %v1628, %v171
    %v1665 = vadd.f32 %v1649, %v1657
    %v1666 = vadd.f32 %v1650, %v1658
    %v1667 = vadd.f32 %v1651, %v1659
    %v1668 = vadd.f32 %v1652, %v1660
    %v1669 = vadd.f32 %v1653, %v1661
    %v1670 = vadd.f32 %v1654, %v1662
    %v1671 = vadd.f32 %v1655, %v1663
    %v1672 = vadd.f32 %v1656, %v1664
    %v1673 = vmul.f32 %v1571, %v187
    %v1674 = vmul.f32 %v1572, %v187
    %v1675 = vmul.f32 %v1573, %v187
    %v1676 = vmul.f32 %v1574, %v187
    %v1677 = vmul.f32 %v1579, %v187
    %v1678 = vmul.f32 %v1580, %v187
    %v1679 = vmul.f32 %v1581, %v187
    %v1680 = vmul.f32 %v1582, %v187
    %v1681 = vadd.f32 %v1665, %v1673
    %v1682 = vadd.f32 %v1666, %v1674
    %v1683 = vadd.f32 %v1667, %v1675
    %v1684 = vadd.f32 %v1668, %v1676
    %v1685 = vadd.f32 %v1669, %v1677
    %v1686 = vadd.f32 %v1670, %v1678
    %v1687 = vadd.f32 %v1671, %v1679
    %v1688 = vadd.f32 %v1672, %v1680
    %v1689 = vmul.f32 %v1523, %v207
    %v1690 = vmul.f32 %v1524, %v207
    %v1691 = vmul.f32 %v1525, %v207
    %v1692 = vmul.f32 %v1526, %v207
    %v1693 = vmul.f32 %v1531, %v207
    %v1694 = vmul.f32 %v1532, %v207
    %v1695 = vmul.f32 %v1533, %v207
    %v1696 = vmul.f32 %v1534, %v207
    %v1697 = vadd.f32 %v1681, %v1689
    %v1698 = vadd.f32 %v1682, %v1690
    %v1699 = vadd.f32 %v1683, %v1691
    %v1700 = vadd.f32 %v1684, %v1692
    %v1701 = vadd.f32 %v1685, %v1693
    %v1702 = vadd.f32 %v1686, %v1694
    %v1703 = vadd.f32 %v1687, %v1695
    %v1704 = vadd.f32 %v1688, %v1696
    %v1705 = vmul.f32 %v1619, %v227
    %v1706 = vmul.f32 %v1620, %v227
    %v1707 = vmul.f32 %v1621, %v227
    %v1708 = vmul.f32 %v1622, %v227
    %v1709 = vmul.f32 %v1627, %v227
    %v1710 = vmul.f32 %v1628, %v227
    %v1711 = vmul.f32 %v1629, %v227
    %v1712 = vmul.f32 %v1630, %v227
    %v1713 = vadd.f32 %v1697, %v1705
    %v1714 = vadd.f32 %v1698, %v1706
    %v1715 = vadd.f32 %v1699, %v1707
    %v1716 = vadd.f32 %v1700, %v1708
    %v1717 = vadd.f32 %v1701, %v1709
    %v1718 = vadd.f32 %v1702, %v1710
    %v1719 = vadd.f32 %v1703, %v1711
    %v1720 = vadd.f32 %v1704, %v1712
    %v1721 = vmul.f32 %v1573, %v247
    %v1722 = vmul.f32 %v1574, %v247
    %v1723 = vmul.f32 %v1575, %v247
    %v1724 = vmul.f32 %v1576, %v247
    %v1725 = vmul.f32 %v1581, %v247
    %v1726 = vmul.f32 %v1582, %v247
    %v1727 = vmul.f32 %v1583, %v247
    %v1728 = vmul.f32 %v1584, %v247
    %v1729 = vadd.f32 %v1713, %v1721
    %v1730 = vadd.f32 %v1714, %v1722
    %v1731 = vadd.f32 %v1715, %v1723
    %v1732 = vadd.f32 %v1716, %v1724
    %v1733 = vadd.f32 %v1717, %v1725
    %v1734 = vadd.f32 %v1718, %v1726
    %v1735 = vadd.f32 %v1719, %v1727
    %v1736 = vadd.f32 %v1720, %v1728
    %v1737 = vmul.f32 %v1525, %v267
    %v1738 = vmul.f32 %v1526, %v267
    %v1739 = vmul.f32 %v1527, %v267
    %v1740 = vmul.f32 %v1528, %v267
    %v1741 = vmul.f32 %v1533, %v267
    %v1742 = vmul.f32 %v1534, %v267
    %v1743 = vmul.f32 %v1535, %v267
    %v1744 = vmul.f32 %v1536, %v267
    %v1745 = vadd.f32 %v1729, %v1737
    %v1746 = vadd.f32 %v1730, %v1738
    %v1747 = vadd.f32 %v1731, %v1739
    %v1748 = vadd.f32 %v1732, %v1740
    %v1749 = vadd.f32 %v1733, %v1741
    %v1750 = vadd.f32 %v1734, %v1742
    %v1751 = vadd.f32 %v1735, %v1743
    %v1752 = vadd.f32 %v1736, %v1744
    %v1753 = vmul.f32 %v1621, %v287
    %v1754 = vmul.f32 %v1622, %v287
    %v1755 = vmul.f32 %v1623, %v287
    %v1756 = vmul.f32 %v1624, %v287
    %v1757 = vmul.f32 %v1629, %v287
    %v1758 = vmul.f32 %v1630, %v287
    %v1759 = vmul.f32 %v1631, %v287
    %v1760 = vmul.f32 %v1632, %v287
    %v1761 = vadd.f32 %v1745, %v1753
    %v1762 = vadd.f32 %v1746, %v1754
    %v1763 = vadd.f32 %v1747, %v1755
    %v1764 = vadd.f32 %v1748, %v1756
    %v1765 = vadd.f32 %v1749, %v1757
    %v1766 = vadd.f32 %v1750, %v1758
    %v1767 = vadd.f32 %v1751, %v1759
    %v1768 = vadd.f32 %v1752, %v1760
    %v1769 = vadd.f32 %v1761, %v1762
    %v1770 = vadd.f32 %v1769, %v1763
    %v1771 = vadd.f32 %v1770, %v1764
    %v1772 = vadd.f32 %v1771, %v1765
    %v1773 = vadd.f32 %v1772, %v1766
    %v1774 = vadd.f32 %v1773, %v1767
    %v1775 = vadd.f32 %v1774, %v1768
    %v1776 = vrot.slane %v1775, 4
    %v1777 = vadd.f32 %v1775, %v1776
    %v1778 = vrot.slane %v1777, 2
    %v1779 = vadd.f32 %v1777, %v1778
    %v1780 = vrot.slane %v1779, 1
    %v1781 = vadd.f32 %v1779, %v1780
    %v1782 = vadd.f32 %v1489, %v1781
    %v1783 = vmul.f32 %v1761, %v1761
    %v1784 = vmul.f32 %v1762, %v1762
    %v1785 = vmul.f32 %v1763, %v1763
    %v1786 = vmul.f32 %v1764, %v1764
    %v1787 = vmul.f32 %v1765, %v1765
    %v1788 = vmul.f32 %v1766, %v1766
    %v1789 = vmul.f32 %v1767, %v1767
    %v1790 = vmul.f32 %v1768, %v1768
    %v1791 = vadd.f32 %v1783, %v1784
    %v1792 = vadd.f32 %v1791, %v1785
    %v1793 = vadd.f32 %v1792, %v1786
    %v1794 = vadd.f32 %v1793, %v1787
    %v1795 = vadd.f32 %v1794, %v1788
    %v1796 = vadd.f32 %v1795, %v1789
    %v1797 = vadd.f32 %v1796, %v1790
    %v1798 = vrot.slane %v1797, 4
    %v1799 = vadd.f32 %v1797, %v1798
    %v1800 = vrot.slane %v1799, 2
    %v1801 = vadd.f32 %v1799, %v1800
    %v1802 = vrot.slane %v1801, 1
    %v1803 = vadd.f32 %v1801, %v1802
    %v1804 = vadd.f32 %v1511, %v1803
    %1805 = vst [vmem:[#allocation2 + $0x140] sm:$0xff] %v1761
    %1806 = vst [vmem:[#allocation2 + $0x148] sm:$0xff] %v1762
    %1807 = vst [vmem:[#allocation2 + $0x150] sm:$0xff] %v1763
    %1808 = vst [vmem:[#allocation2 + $0x158] sm:$0xff] %v1764
    %1809 = vst [vmem:[#allocation2 + $0x160] sm:$0xff] %v1765
    %1810 = vst [vmem:[#allocation2 + $0x168] sm:$0xff] %v1766
    %1811 = vst [vmem:[#allocation2 + $0x170] sm:$0xff] %v1767
    %1812 = vst [vmem:[#allocation2 + $0x178] sm:$0xff] %v1768
    %s1813 = scalar_lea.vmem [#allocation4], 176
    %v1814 = vld [vmem:[%s1813] sm:$0xff]
    %v1815 = vld [vmem:[%s1813 + $0x8] sm:$0xff]
    %v1816 = vld [vmem:[%s1813 + $0x10] sm:$0xff]
    %v1817 = vld [vmem:[%s1813 + $0x18] sm:$0xff]
    %v1818 = vld [vmem:[%s1813 + $0x20] sm:$0xff]
    %v1819 = vld [vmem:[%s1813 + $0x28] sm:$0xff]
    %v1820 = vld [vmem:[%s1813 + $0x30] sm:$0xff]
    %v1821 = vld [vmem:[%s1813 + $0x38] sm:$0xff]
    %v1822 = vld [vmem:[%s1813 + $0x100] sm:$0xff]
    %v1823 = vld [vmem:[%s1813 + $0x108] sm:$0xff]
    %v1824 = vld [vmem:[%s1813 + $0x110] sm:$0xff]
    %v1825 = vld [vmem:[%s1813 + $0x118] sm:$0xff]
    %v1826 = vld [vmem:[%s1813 + $0x120] sm:$0xff]
    %v1827 = vld [vmem:[%s1813 + $0x128] sm:$0xff]
    %v1828 = vld [vmem:[%s1813 + $0x130] sm:$0xff]
    %v1829 = vld [vmem:[%s1813 + $0x138] sm:$0xff]
    %v1830 = vrot.slane %v1814, 7
    %v1831 = vrot.slane %v1816, 7
    %v1832 = vrot.slane %v1818, 7
    %v1833 = vrot.slane %v1820, 7
    %v1834 = vrot.slane %v1822, 7
    %v1835 = vrot.slane %v1824, 7
    %v1836 = vrot.slane %v1826, 7
    %v1837 = vrot.slane %v1828, 7
    %v1838 = vrot.slane %v1815, 7
    %v1839 = vrot.slane %v1817, 7
    %v1840 = vrot.slane %v1819, 7
    %v1841 = vrot.slane %v1821, 7
    %v1842 = vrot.slane %v1823, 7
    %v1843 = vrot.slane %v1825, 7
    %v1844 = vrot.slane %v1827, 7
    %v1845 = vrot.slane %v1829, 7
    %v1846 = vsel %vm67, %v1830, %v1838
    %v1847 = vsel %vm67, %v1831, %v1839
    %v1848 = vsel %vm67, %v1832, %v1840
    %v1849 = vsel %vm67, %v1833, %v1841
    %v1850 = vsel %vm67, %v1834, %v1842
    %v1851 = vsel %vm67, %v1835, %v1843
    %v1852 = vsel %vm67, %v1836, %v1844
    %v1853 = vsel %vm67, %v1837, %v1845
    %v1854 = vsel %vm67, %v1838, %v1830
    %v1855 = vsel %vm67, %v1839, %v1831
    %v1856 = vsel %vm67, %v1840, %v1832
    %v1857 = vsel %vm67, %v1841, %v1833
    %v1858 = vsel %vm67, %v1842, %v1834
    %v1859 = vsel %vm67, %v1843, %v1835
    %v1860 = vsel %vm67, %v1844, %v1836
    %v1861 = vsel %vm67, %v1845, %v1837
    %v1862 = vsel %vm82, 0.0, %v1854
    %v1863 = vsel %vm83, 0.0, %v1846
    %v1864 = vsel %vm82, 0.0, %v1855
    %v1865 = vsel %vm83, 0.0, %v1847
    %v1866 = vsel %vm82, 0.0, %v1856
    %v1867 = vsel %vm83, 0.0, %v1848
    %v1868 = vsel %vm82, 0.0, %v1857
    %v1869 = vsel %vm83, 0.0, %v1849
    %v1870 = vsel %vm82, 0.0, %v1858
    %v1871 = vsel %vm83, 0.0, %v1850
    %v1872 = vsel %vm82, 0.0, %v1859
    %v1873 = vsel %vm83, 0.0, %v1851
    %v1874 = vsel %vm82, 0.0, %v1860
    %v1875 = vsel %vm83, 0.0, %v1852
    %v1876 = vsel %vm82, 0.0, %v1861
    %v1877 = vsel %vm83, 0.0, %v1853
    %v1878 = vrot.slane %v1814, 1
    %v1879 = vrot.slane %v1816, 1
    %v1880 = vrot.slane %v1818, 1
    %v1881 = vrot.slane %v1820, 1
    %v1882 = vrot.slane %v1822, 1
    %v1883 = vrot.slane %v1824, 1
    %v1884 = vrot.slane %v1826, 1
    %v1885 = vrot.slane %v1828, 1
    %v1886 = vrot.slane %v1815, 1
    %v1887 = vrot.slane %v1817, 1
    %v1888 = vrot.slane %v1819, 1
    %v1889 = vrot.slane %v1821, 1
    %v1890 = vrot.slane %v1823, 1
    %v1891 = vrot.slane %v1825, 1
    %v1892 = vrot.slane %v1827, 1
    %v1893 = vrot.slane %v1829, 1
    %v1894 = vsel %vm112, %v1878, %v1886
    %v1895 = vsel %vm112, %v1879, %v1887
    %v1896 = vsel %vm112, %v1880, %v1888
    %v1897 = vsel %vm112, %v1881, %v1889
    %v1898 = vsel %vm112, %v1882, %v1890
    %v1899 = vsel %vm112, %v1883, %v1891
    %v1900 = vsel %vm112, %v1884, %v1892
    %v1901 = vsel %vm112, %v1885, %v1893
    %v1902 = vsel %vm112, %v1886, %v1878
    %v1903 = vsel %vm112, %v1887, %v1879
    %v1904 = vsel %vm112, %v1888, %v1880
    %v1905 = vsel %vm112, %v1889, %v1881
    %v1906 = vsel %vm112, %v1890, %v1882
    %v1907 = vsel %vm112, %v1891, %v1883
    %v1908 = vsel %vm112, %v1892, %v1884
    %v1909 = vsel %vm112, %v1893, %v1885
    %v1910 = vsel %vm127, 0.0, %v1894
    %v1911 = vsel %vm128, 0.0, %v1902
    %v1912 = vsel %vm127, 0.0, %v1895
    %v1913 = vsel %vm128, 0.0, %v1903
    %v1914 = vsel %vm127, 0.0, %v1896
    %v1915 = vsel %vm128, 0.0, %v1904
    %v1916 = vsel %vm127, 0.0, %v1897
    %v1917 = vsel %vm128, 0.0, %v1905
    %v1918 = vsel %vm127, 0.0, %v1898
    %v1919 = vsel %vm128, 0.0, %v1906
    %v1920 = vsel %vm127, 0.0, %v1899
    %v1921 = vsel %vm128, 0.0, %v1907
    %v1922 = vsel %vm127, 0.0, %v1900
    %v1923 = vsel %vm128, 0.0, %v1908
    %v1924 = vsel %vm127, 0.0, %v1901
    %v1925 = vsel %vm128, 0.0, %v1909
    %v1926 = vmul.f32 %v1862, %v146
    %v1927 = vmul.f32 %v1863, %v146
    %v1928 = vmul.f32 %v1864, %v146
    %v1929 = vmul.f32 %v1865, %v146
    %v1930 = vmul.f32 %v1870, %v146
    %v1931 = vmul.f32 %v1871, %v146
    %v1932 = vmul.f32 %v1872, %v146
    %v1933 = vmul.f32 %v1873, %v146
    %v1934 = vmul.f32 %v1814, %v156
    %v1935 = vmul.f32 %v1815, %v156
    %v1936 = vmul.f32 %v1816, %v156
    %v1937 = vmul.f32 %v1817, %v156
    %v1938 = vmul.f32 %v1822, %v156
    %v1939 = vmul.f32 %v1823, %v156
    %v1940 = vmul.f32 %v1824, %v156
    %v1941 = vmul.f32 %v1825, %v156
    %v1942 = vadd.f32 %v1926, %v1934
    %v1943 = vadd.f32 %v1927, %v1935
    %v1944 = vadd.f32 %v1928, %v1936
    %v1945 = vadd.f32 %v1929, %v1937
    %v1946 = vadd.f32 %v1930, %v1938
    %v1947 = vadd.f32 %v1931, %v1939
    %v1948 = vadd.f32 %v1932, %v1940
    %v1949 = vadd.f32 %v1933, %v1941
    %v1950 = vmul.f32 %v1910, %v171
    %v1951 = vmul.f32 %v1911, %v171
    %v1952 = vmul.f32 %v1912, %v171
    %v1953 = vmul.f32 %v1913, %v171
    %v1954 = vmul.f32 %v1918, %v171
    %v1955 = vmul.f32 %v1919, %v171
    %v1956 = vmul.f32 %v1920, %v171
    %v1957 = vmul.f32 %v1921, %v171
    %v1958 = vadd.f32 %v1942, %v1950
    %v1959 = vadd.f32 %v1943, %v1951
    %v1960 = vadd.f32 %v1944, %v1952
    %v1961 = vadd.f32 %v1945, %v1953
    %v1962 = vadd.f32 %v1946, %v1954
    %v1963 = vadd.f32 %v1947, %v1955
    %v1964 = vadd.f32 %v1948, %v1956
    %v1965 = vadd.f32 %v1949, %v1957
    %v1966 = vmul.f32 %v1864, %v187
    %v1967 = vmul.f32 %v1865, %v187
    %v1968 = vmul.f32 %v1866, %v187
    %v1969 = vmul.f32 %v1867, %v187
    %v1970 = vmul.f32 %v1872, %v187
    %v1971 = vmul.f32 %v1873, %v187
    %v1972 = vmul.f32 %v1874, %v187
    %v1973 = vmul.f32 %v1875, %v187
    %v1974 = vadd.f32 %v1958, %v1966
    %v1975 = vadd.f32 %v1959, %v1967
    %v1976 = vadd.f32 %v1960, %v1968
    %v1977 = vadd.f32 %v1961, %v1969
    %v1978 = vadd.f32 %v1962, %v1970
    %v1979 = vadd.f32 %v1963, %v1971
    %v1980 = vadd.f32 %v1964, %v1972
    %v1981 = vadd.f32 %v1965, %v1973
    %v1982 = vmul.f32 %v1816, %v207
    %v1983 = vmul.f32 %v1817, %v207
    %v1984 = vmul.f32 %v1818, %v207
    %v1985 = vmul.f32 %v1819, %v207
    %v1986 = vmul.f32 %v1824, %v207
    %v1987 = vmul.f32 %v1825, %v207
    %v1988 = vmul.f32 %v1826, %v207
    %v1989 = vmul.f32 %v1827, %v207
    %v1990 = vadd.f32 %v1974, %v1982
    %v1991 = vadd.f32 %v1975, %v1983
    %v1992 = vadd.f32 %v1976, %v1984
    %v1993 = vadd.f32 %v1977, %v1985
    %v1994 = vadd.f32 %v1978, %v1986
    %v1995 = vadd.f32 %v1979, %v1987
    %v1996 = vadd.f32 %v1980, %v1988
    %v1997 = vadd.f32 %v1981, %v1989
    %v1998 = vmul.f32 %v1912, %v227
    %v1999 = vmul.f32 %v1913, %v227
    %v2000 = vmul.f32 %v1914, %v227
    %v2001 = vmul.f32 %v1915, %v227
    %v2002 = vmul.f32 %v1920, %v227
    %v2003 = vmul.f32 %v1921, %v227
    %v2004 = vmul.f32 %v1922, %v227
    %v2005 = vmul.f32 %v1923, %v227
    %v2006 = vadd.f32 %v1990, %v1998
    %v2007 = vadd.f32 %v1991, %v1999
    %v2008 = vadd.f32 %v1992, %v2000
    %v2009 = vadd.f32 %v1993, %v2001
    %v2010 = vadd.f32 %v1994, %v2002
    %v2011 = vadd.f32 %v1995, %v2003
    %v2012 = vadd.f32 %v1996, %v2004
    %v2013 = vadd.f32 %v1997, %v2005
    %v2014 = vmul.f32 %v1866, %v247
    %v2015 = vmul.f32 %v1867, %v247
    %v2016 = vmul.f32 %v1868, %v247
    %v2017 = vmul.f32 %v1869, %v247
    %v2018 = vmul.f32 %v1874, %v247
    %v2019 = vmul.f32 %v1875, %v247
    %v2020 = vmul.f32 %v1876, %v247
    %v2021 = vmul.f32 %v1877, %v247
    %v2022 = vadd.f32 %v2006, %v2014
    %v2023 = vadd.f32 %v2007, %v2015
    %v2024 = vadd.f32 %v2008, %v2016
    %v2025 = vadd.f32 %v2009, %v2017
    %v2026 = vadd.f32 %v2010, %v2018
    %v2027 = vadd.f32 %v2011, %v2019
    %v2028 = vadd.f32 %v2012, %v2020
    %v2029 = vadd.f32 %v2013, %v2021
    %v2030 = vmul.f32 %v1818, %v267
    %v2031 = vmul.f32 %v1819, %v267
    %v2032 = vmul.f32 %v1820, %v267
    %v2033 = vmul.f32 %v1821, %v267
    %v2034 = vmul.f32 %v1826, %v267
    %v2035 = vmul.f32 %v1827, %v267
    %v2036 = vmul.f32 %v1828, %v267
    %v2037 = vmul.f32 %v1829, %v267
    %v2038 = vadd.f32 %v2022, %v2030
    %v2039 = vadd.f32 %v2023, %v2031
    %v2040 = vadd.f32 %v2024, %v2032
    %v2041 = vadd.f32 %v2025, %v2033
    %v2042 = vadd.f32 %v2026, %v2034
    %v2043 = vadd.f32 %v2027, %v2035
    %v2044 = vadd.f32 %v2028, %v2036
    %v2045 = vadd.f32 %v2029, %v2037
    %v2046 = vmul.f32 %v1914, %v287
    %v2047 = vmul.f32 %v1915, %v287
    %v2048 = vmul.f32 %v1916, %v287
    %v2049 = vmul.f32 %v1917, %v287
    %v2050 = vmul.f32 %v1922, %v287
    %v2051 = vmul.f32 %v1923, %v287
    %v2052 = vmul.f32 %v1924, %v287
    %v2053 = vmul.f32 %v1925, %v287
    %v2054 = vadd.f32 %v2038, %v2046
    %v2055 = vadd.f32 %v2039, %v2047
    %v2056 = vadd.f32 %v2040, %v2048
    %v2057 = vadd.f32 %v2041, %v2049
    %v2058 = vadd.f32 %v2042, %v2050
    %v2059 = vadd.f32 %v2043, %v2051
    %v2060 = vadd.f32 %v2044, %v2052
    %v2061 = vadd.f32 %v2045, %v2053
    %v2062 = vadd.f32 %v2054, %v2055
    %v2063 = vadd.f32 %v2062, %v2056
    %v2064 = vadd.f32 %v2063, %v2057
    %v2065 = vadd.f32 %v2064, %v2058
    %v2066 = vadd.f32 %v2065, %v2059
    %v2067 = vadd.f32 %v2066, %v2060
    %v2068 = vadd.f32 %v2067, %v2061
    %v2069 = vrot.slane %v2068, 4
    %v2070 = vadd.f32 %v2068, %v2069
    %v2071 = vrot.slane %v2070, 2
    %v2072 = vadd.f32 %v2070, %v2071
    %v2073 = vrot.slane %v2072, 1
    %v2074 = vadd.f32 %v2072, %v2073
    %v2075 = vadd.f32 %v1782, %v2074
    %v2076 = vmul.f32 %v2054, %v2054
    %v2077 = vmul.f32 %v2055, %v2055
    %v2078 = vmul.f32 %v2056, %v2056
    %v2079 = vmul.f32 %v2057, %v2057
    %v2080 = vmul.f32 %v2058, %v2058
    %v2081 = vmul.f32 %v2059, %v2059
    %v2082 = vmul.f32 %v2060, %v2060
    %v2083 = vmul.f32 %v2061, %v2061
    %v2084 = vadd.f32 %v2076, %v2077
    %v2085 = vadd.f32 %v2084, %v2078
    %v2086 = vadd.f32 %v2085, %v2079
    %v2087 = vadd.f32 %v2086, %v2080
    %v2088 = vadd.f32 %v2087, %v2081
    %v2089 = vadd.f32 %v2088, %v2082
    %v2090 = vadd.f32 %v2089, %v2083
    %v2091 = vrot.slane %v2090, 4
    %v2092 = vadd.f32 %v2090, %v2091
    %v2093 = vrot.slane %v2092, 2
    %v2094 = vadd.f32 %v2092, %v2093
    %v2095 = vrot.slane %v2094, 1
    %v2096 = vadd.f32 %v2094, %v2095
    %v2097 = vadd.f32 %v1804, %v2096
    %2098 = vst [vmem:[#allocation2 + $0x180] sm:$0xff] %v2054
    %2099 = vst [vmem:[#allocation2 + $0x188] sm:$0xff] %v2055
    %2100 = vst [vmem:[#allocation2 + $0x190] sm:$0xff] %v2056
    %2101 = vst [vmem:[#allocation2 + $0x198] sm:$0xff] %v2057
    %2102 = vst [vmem:[#allocation2 + $0x1a0] sm:$0xff] %v2058
    %2103 = vst [vmem:[#allocation2 + $0x1a8] sm:$0xff] %v2059
    %2104 = vst [vmem:[#allocation2 + $0x1b0] sm:$0xff] %v2060
    %2105 = vst [vmem:[#allocation2 + $0x1b8] sm:$0xff] %v2061
    %s2106 = scalar_lea.vmem [#allocation4], 208
    %v2107 = vld [vmem:[%s2106] sm:$0xff]
    %v2108 = vld [vmem:[%s2106 + $0x8] sm:$0xff]
    %v2109 = vld [vmem:[%s2106 + $0x10] sm:$0xff]
    %v2110 = vld [vmem:[%s2106 + $0x18] sm:$0xff]
    %v2111 = vld [vmem:[%s2106 + $0x20] sm:$0xff]
    %v2112 = vld [vmem:[%s2106 + $0x28] sm:$0xff]
    %v2113 = vld [vmem:[%s2106 + $0x100] sm:$0xff]
    %v2114 = vld [vmem:[%s2106 + $0x108] sm:$0xff]
    %v2115 = vld [vmem:[%s2106 + $0x110] sm:$0xff]
    %v2116 = vld [vmem:[%s2106 + $0x118] sm:$0xff]
    %v2117 = vld [vmem:[%s2106 + $0x120] sm:$0xff]
    %v2118 = vld [vmem:[%s2106 + $0x128] sm:$0xff]
    %v2119 = vrot.slane %v2107, 7
    %v2120 = vrot.slane %v2109, 7
    %v2121 = vrot.slane %v2111, 7
    %v2122 = vrot.slane %v2113, 7
    %v2123 = vrot.slane %v2115, 7
    %v2124 = vrot.slane %v2117, 7
    %v2125 = vrot.slane %v2108, 7
    %v2126 = vrot.slane %v2110, 7
    %v2127 = vrot.slane %v2112, 7
    %v2128 = vrot.slane %v2114, 7
    %v2129 = vrot.slane %v2116, 7
    %v2130 = vrot.slane %v2118, 7
    %v2131 = vsel %vm67, %v2119, %v2125
    %v2132 = vsel %vm67, %v2120, %v2126
    %v2133 = vsel %vm67, %v2121, %v2127
    %v2134 = vsel %vm67, %v2122, %v2128
    %v2135 = vsel %vm67, %v2123, %v2129
    %v2136 = vsel %vm67, %v2124, %v2130
    %v2137 = vsel %vm67, %v2125, %v2119
    %v2138 = vsel %vm67, %v2126, %v2120
    %v2139 = vsel %vm67, %v2127, %v2121
    %v2140 = vsel %vm67, %v2128, %v2122
    %v2141 = vsel %vm67, %v2129, %v2123
    %v2142 = vsel %vm67, %v2130, %v2124
    %v2143 = vsel %vm82, 0.0, %v2137
    %v2144 = vsel %vm83, 0.0, %v2131
    %v2145 = vsel %vm82, 0.0, %v2138
    %v2146 = vsel %vm83, 0.0, %v2132
    %v2147 = vsel %vm82, 0.0, %v2139
    %v2148 = vsel %vm83, 0.0, %v2133
    %v2149 = vsel %vm82, 0.0, %v2140
    %v2150 = vsel %vm83, 0.0, %v2134
    %v2151 = vsel %vm82, 0.0, %v2141
    %v2152 = vsel %vm83, 0.0, %v2135
    %v2153 = vsel %vm82, 0.0, %v2142
    %v2154 = vsel %vm83, 0.0, %v2136
    %v2155 = vrot.slane %v2107, 1
    %v2156 = vrot.slane %v2109, 1
    %v2157 = vrot.slane %v2111, 1
    %v2158 = vrot.slane %v2113, 1
    %v2159 = vrot.slane %v2115, 1
    %v2160 = vrot.slane %v2117, 1
    %v2161 = vrot.slane %v2108, 1
    %v2162 = vrot.slane %v2110, 1
    %v2163 = vrot.slane %v2112, 1
    %v2164 = vrot.slane %v2114, 1
    %v2165 = vrot.slane %v2116, 1
    %v2166 = vrot.slane %v2118, 1
    %v2167 = vsel %vm112, %v2155, %v2161
    %v2168 = vsel %vm112, %v2156, %v2162
    %v2169 = vsel %vm112, %v2157, %v2163
    %v2170 = vsel %vm112, %v2158, %v2164
    %v2171 = vsel %vm112, %v2159, %v2165
    %v2172 = vsel %vm112, %v2160, %v2166
    %v2173 = vsel %vm112, %v2161, %v2155
    %v2174 = vsel %vm112, %v2162, %v2156
    %v2175 = vsel %vm112, %v2163, %v2157
    %v2176 = vsel %vm112, %v2164, %v2158
    %v2177 = vsel %vm112, %v2165, %v2159
    %v2178 = vsel %vm112, %v2166, %v2160
    %v2179 = vsel %vm127, 0.0, %v2167
    %v2180 = vsel %vm128, 0.0, %v2173
    %v2181 = vsel %vm127, 0.0, %v2168
    %v2182 = vsel %vm128, 0.0, %v2174
    %v2183 = vsel %vm127, 0.0, %v2169
    %v2184 = vsel %vm128, 0.0, %v2175
    %v2185 = vsel %vm127, 0.0, %v2170
    %v2186 = vsel %vm128, 0.0, %v2176
    %v2187 = vsel %vm127, 0.0, %v2171
    %v2188 = vsel %vm128, 0.0, %v2177
    %v2189 = vsel %vm127, 0.0, %v2172
    %v2190 = vsel %vm128, 0.0, %v2178
    %v2191 = vmul.f32 %v2143, %v146
    %v2192 = vmul.f32 %v2144, %v146
    %v2193 = vmul.f32 %v2145, %v146
    %v2194 = vmul.f32 %v2146, %v146
    %v2195 = vmul.f32 %v2149, %v146
    %v2196 = vmul.f32 %v2150, %v146
    %v2197 = vmul.f32 %v2151, %v146
    %v2198 = vmul.f32 %v2152, %v146
    %v2199 = vmul.f32 %v2107, %v156
    %v2200 = vmul.f32 %v2108, %v156
    %v2201 = vmul.f32 %v2109, %v156
    %v2202 = vmul.f32 %v2110, %v156
    %v2203 = vmul.f32 %v2113, %v156
    %v2204 = vmul.f32 %v2114, %v156
    %v2205 = vmul.f32 %v2115, %v156
    %v2206 = vmul.f32 %v2116, %v156
    %v2207 = vadd.f32 %v2191, %v2199
    %v2208 = vadd.f32 %v2192, %v2200
    %v2209 = vadd.f32 %v2193, %v2201
    %v2210 = vadd.f32 %v2194, %v2202
    %v2211 = vadd.f32 %v2195, %v2203
    %v2212 = vadd.f32 %v2196, %v2204
    %v2213 = vadd.f32 %v2197, %v2205
    %v2214 = vadd.f32 %v2198, %v2206
    %v2215 = vmul.f32 %v2179, %v171
    %v2216 = vmul.f32 %v2180, %v171
    %v2217 = vmul.f32 %v2181, %v171
    %v2218 = vmul.f32 %v2182, %v171
    %v2219 = vmul.f32 %v2185, %v171
    %v2220 = vmul.f32 %v2186, %v171
    %v2221 = vmul.f32 %v2187, %v171
    %v2222 = vmul.f32 %v2188, %v171
    %v2223 = vadd.f32 %v2207, %v2215
    %v2224 = vadd.f32 %v2208, %v2216
    %v2225 = vadd.f32 %v2209, %v2217
    %v2226 = vadd.f32 %v2210, %v2218
    %v2227 = vadd.f32 %v2211, %v2219
    %v2228 = vadd.f32 %v2212, %v2220
    %v2229 = vadd.f32 %v2213, %v2221
    %v2230 = vadd.f32 %v2214, %v2222
    %v2231 = vmul.f32 %v2145, %v187
    %v2232 = vmul.f32 %v2146, %v187
    %v2233 = vmul.f32 %v2147, %v187
    %v2234 = vmul.f32 %v2148, %v187
    %v2235 = vmul.f32 %v2151, %v187
    %v2236 = vmul.f32 %v2152, %v187
    %v2237 = vmul.f32 %v2153, %v187
    %v2238 = vmul.f32 %v2154, %v187
    %v2239 = vadd.f32 %v2223, %v2231
    %v2240 = vadd.f32 %v2224, %v2232
    %v2241 = vadd.f32 %v2225, %v2233
    %v2242 = vadd.f32 %v2226, %v2234
    %v2243 = vadd.f32 %v2227, %v2235
    %v2244 = vadd.f32 %v2228, %v2236
    %v2245 = vadd.f32 %v2229, %v2237
    %v2246 = vadd.f32 %v2230, %v2238
    %v2247 = vmul.f32 %v2109, %v207
    %v2248 = vmul.f32 %v2110, %v207
    %v2249 = vmul.f32 %v2111, %v207
    %v2250 = vmul.f32 %v2112, %v207
    %v2251 = vmul.f32 %v2115, %v207
    %v2252 = vmul.f32 %v2116, %v207
    %v2253 = vmul.f32 %v2117, %v207
    %v2254 = vmul.f32 %v2118, %v207
    %v2255 = vadd.f32 %v2239, %v2247
    %v2256 = vadd.f32 %v2240, %v2248
    %v2257 = vadd.f32 %v2241, %v2249
    %v2258 = vadd.f32 %v2242, %v2250
    %v2259 = vadd.f32 %v2243, %v2251
    %v2260 = vadd.f32 %v2244, %v2252
    %v2261 = vadd.f32 %v2245, %v2253
    %v2262 = vadd.f32 %v2246, %v2254
    %v2263 = vmul.f32 %v2181, %v227
    %v2264 = vmul.f32 %v2182, %v227
    %v2265 = vmul.f32 %v2183, %v227
    %v2266 = vmul.f32 %v2184, %v227
    %v2267 = vmul.f32 %v2187, %v227
    %v2268 = vmul.f32 %v2188, %v227
    %v2269 = vmul.f32 %v2189, %v227
    %v2270 = vmul.f32 %v2190, %v227
    %v2271 = vadd.f32 %v2255, %v2263
    %v2272 = vadd.f32 %v2256, %v2264
    %v2273 = vadd.f32 %v2257, %v2265
    %v2274 = vadd.f32 %v2258, %v2266
    %v2275 = vadd.f32 %v2259, %v2267
    %v2276 = vadd.f32 %v2260, %v2268
    %v2277 = vadd.f32 %v2261, %v2269
    %v2278 = vadd.f32 %v2262, %v2270
    %v2279 = vmul.f32 %v2147, %v247
    %v2280 = vmul.f32 %v2148, %v247
    %v2281 = vmul.f32 %v84, %v247
    %v2282 = vmul.f32 %v85, %v247
    %v2283 = vmul.f32 %v2153, %v247
    %v2284 = vmul.f32 %v2154, %v247
    %v2285 = vadd.f32 %v2271, %v2279
    %v2286 = vadd.f32 %v2272, %v2280
    %v2287 = vadd.f32 %v2273, %v2281
    %v2288 = vadd.f32 %v2274, %v2282
    %v2289 = vadd.f32 %v2275, %v2283
    %v2290 = vadd.f32 %v2276, %v2284
    %v2291 = vadd.f32 %v2277, %v2281
    %v2292 = vadd.f32 %v2278, %v2282
    %v2293 = vmul.f32 %v2111, %v267
    %v2294 = vmul.f32 %v2112, %v267
    %v2295 = vmul.f32 %v267, 0.0
    %v2296 = vmul.f32 %v2117, %v267
    %v2297 = vmul.f32 %v2118, %v267
    %v2298 = vadd.f32 %v2285, %v2293
    %v2299 = vadd.f32 %v2286, %v2294
    %v2300 = vadd.f32 %v2287, %v2295
    %v2301 = vadd.f32 %v2288, %v2295
    %v2302 = vadd.f32 %v2289, %v2296
    %v2303 = vadd.f32 %v2290, %v2297
    %v2304 = vadd.f32 %v2291, %v2295
    %v2305 = vadd.f32 %v2292, %v2295
    %v2306 = vmul.f32 %v2183, %v287
    %v2307 = vmul.f32 %v2184, %v287
    %v2308 = vmul.f32 %v129, %v287
    %v2309 = vmul.f32 %v130, %v287
    %v2310 = vmul.f32 %v2189, %v287
    %v2311 = vmul.f32 %v2190, %v287
    %v2312 = vadd.f32 %v2298, %v2306
    %v2313 = vadd.f32 %v2299, %v2307
    %v2314 = vadd.f32 %v2300, %v2308
    %v2315 = vadd.f32 %v2301, %v2309
    %v2316 = vadd.f32 %v2302, %v2310
    %v2317 = vadd.f32 %v2303, %v2311
    %v2318 = vadd.f32 %v2304, %v2308
    %v2319 = vadd.f32 %v2305, %v2309
    %v2320 = vadd.f32 %v2312, %v2313
    %v2321 = vadd.f32 %v2320, %v2314
    %v2322 = vadd.f32 %v2321, %v2315
    %v2323 = vadd.f32 %v2322, %v2316
    %v2324 = vadd.f32 %v2323, %v2317
    %v2325 = vadd.f32 %v2324, %v2318
    %v2326 = vadd.f32 %v2325, %v2319
    %v2327 = vrot.slane %v2326, 4
    %v2328 = vadd.f32 %v2326, %v2327
    %v2329 = vrot.slane %v2328, 2
    %v2330 = vadd.f32 %v2328, %v2329
    %v2331 = vrot.slane %v2330, 1
    %v2332 = vadd.f32 %v2330, %v2331
    %v2333 = vadd.f32 %v2075, %v2332
    %v2334 = vmul.f32 %v2312, %v2312
    %v2335 = vmul.f32 %v2313, %v2313
    %v2336 = vmul.f32 %v2314, %v2314
    %v2337 = vmul.f32 %v2315, %v2315
    %v2338 = vmul.f32 %v2316, %v2316
    %v2339 = vmul.f32 %v2317, %v2317
    %v2340 = vmul.f32 %v2318, %v2318
    %v2341 = vmul.f32 %v2319, %v2319
    %v2342 = vadd.f32 %v2334, %v2335
    %v2343 = vadd.f32 %v2342, %v2336
    %v2344 = vadd.f32 %v2343, %v2337
    %v2345 = vadd.f32 %v2344, %v2338
    %v2346 = vadd.f32 %v2345, %v2339
    %v2347 = vadd.f32 %v2346, %v2340
    %v2348 = vadd.f32 %v2347, %v2341
    %v2349 = vrot.slane %v2348, 4
    %v2350 = vadd.f32 %v2348, %v2349
    %v2351 = vrot.slane %v2350, 2
    %v2352 = vadd.f32 %v2350, %v2351
    %v2353 = vrot.slane %v2352, 1
    %v2354 = vadd.f32 %v2352, %v2353
    %v2355 = vadd.f32 %v2097, %v2354
    %2356 = vst [vmem:[#allocation2 + $0x1c0] sm:$0xff] %v2312
    %2357 = vst [vmem:[#allocation2 + $0x1c8] sm:$0xff] %v2313
    %2358 = vst [vmem:[#allocation2 + $0x1d0] sm:$0xff] %v2314
    %2359 = vst [vmem:[#allocation2 + $0x1d8] sm:$0xff] %v2315
    %2360 = vst [vmem:[#allocation2 + $0x1e0] sm:$0xff] %v2316
    %2361 = vst [vmem:[#allocation2 + $0x1e8] sm:$0xff] %v2317
    %2362 = vst [vmem:[#allocation2 + $0x1f0] sm:$0xff] %v2318
    %2363 = vst [vmem:[#allocation2 + $0x1f8] sm:$0xff] %v2319
    %v2364 = vmul.f32 %v2333, 0.001953125
    %v2365 = vmul.f32 %v2355, 0.001953125
    %v2366 = vmul.f32 %v2364, %v2364
    %v2367 = vsub.f32 %v2365, %v2366
    %v2368 = vmax.f32 %v2367, 0.0
    %v2369 = vadd.f32 %v2368, 1e-05
    %v2370 = vrsqrt.pop %v2369
    %v2371 = vld [vmem:[%s2] sm:$0xff]
    %v2372 = vld [vmem:[%s2 + $0x8] sm:$0xff]
    %v2373 = vld [vmem:[%s2 + $0x10] sm:$0xff]
    %v2374 = vld [vmem:[%s2 + $0x18] sm:$0xff]
    %v2375 = vld [vmem:[%s2 + $0x20] sm:$0xff]
    %v2376 = vld [vmem:[%s2 + $0x28] sm:$0xff]
    %v2377 = vld [vmem:[%s2 + $0x30] sm:$0xff]
    %v2378 = vld [vmem:[%s2 + $0x38] sm:$0xff]
    %v2379 = vld [vmem:[%s2 + $0x40] sm:$0xff]
    %v2380 = vld [vmem:[%s2 + $0x48] sm:$0xff]
    %v2381 = vld [vmem:[%s2 + $0x50] sm:$0xff]
    %v2382 = vld [vmem:[%s2 + $0x58] sm:$0xff]
    %v2383 = vld [vmem:[%s2 + $0x60] sm:$0xff]
    %v2384 = vld [vmem:[%s2 + $0x68] sm:$0xff]
    %v2385 = vld [vmem:[%s2 + $0x70] sm:$0xff]
    %v2386 = vld [vmem:[%s2 + $0x78] sm:$0xff]
    %v2387 = vld [vmem:[#allocation2] sm:$0xff]
    %v2388 = vld [vmem:[#allocation2 + $0x8] sm:$0xff]
    %v2389 = vld [vmem:[#allocation2 + $0x10] sm:$0xff]
    %v2390 = vld [vmem:[#allocation2 + $0x18] sm:$0xff]
    %v2391 = vld [vmem:[#allocation2 + $0x20] sm:$0xff]
    %v2392 = vld [vmem:[#allocation2 + $0x28] sm:$0xff]
    %v2393 = vld [vmem:[#allocation2 + $0x30] sm:$0xff]
    %v2394 = vld [vmem:[#allocation2 + $0x38] sm:$0xff]
    %v2395 = vsub.f32 %v2387, %v2364
    %v2396 = vsub.f32 %v2388, %v2364
    %v2397 = vsub.f32 %v2389, %v2364
    %v2398 = vsub.f32 %v2390, %v2364
    %v2399 = vsub.f32 %v2391, %v2364
    %v2400 = vsub.f32 %v2392, %v2364
    %v2401 = vsub.f32 %v2393, %v2364
    %v2402 = vsub.f32 %v2394, %v2364
    %v2403 = vmax.f32 %v2395, 0.0
    %v2404 = vmax.f32 %v2396, 0.0
    %v2405 = vmax.f32 %v2397, 0.0
    %v2406 = vmax.f32 %v2398, 0.0
    %v2407 = vmax.f32 %v2399, 0.0
    %v2408 = vmax.f32 %v2400, 0.0
    %v2409 = vmax.f32 %v2401, 0.0
    %v2410 = vmax.f32 %v2402, 0.0
    %v2411 = vmul.f32 %v2403, %v2370
    %v2412 = vmul.f32 %v2404, %v2370
    %v2413 = vmul.f32 %v2405, %v2370
    %v2414 = vmul.f32 %v2406, %v2370
    %v2415 = vmul.f32 %v2407, %v2370
    %v2416 = vmul.f32 %v2408, %v2370
    %v2417 = vmul.f32 %v2409, %v2370
    %v2418 = vmul.f32 %v2410, %v2370
    %2419 = vmatprep.subr.mxu0 0.0
    %2420 = vmatpush1.msra.mxu0 %v2371
    %2421 = vmatprep.subr.mxu0 0.0
    %2422 = vmatpush1.msra.mxu0 %v2372
    %2423 = vmatprep.subr.mxu0 0.0
    %2424 = vmatpush1.msra.mxu0 %v2373
    %2425 = vmatprep.subr.mxu0 0.0
    %2426 = vmatpush1.msra.mxu0 %v2374
    %2427 = vmatprep.subr.mxu0 0.0
    %2428 = vmatpush1.msra.mxu0 %v2375
    %2429 = vmatprep.subr.mxu0 0.0
    %2430 = vmatpush1.msra.mxu0 %v2376
    %2431 = vmatprep.subr.mxu0 0.0
    %2432 = vmatpush1.msra.mxu0 %v2377
    %2433 = vmatprep.subr.mxu0 0.0
    %2434 = vmatpush1.msra.mxu0 %v2378
    %2435 = vmatprep.subr.mxu0 0.0
    %2436 = vmatpush1.msra.mxu0 %v2379
    %2437 = vmatprep.subr.mxu0 0.0
    %2438 = vmatpush1.msra.mxu0 %v2380
    %2439 = vmatprep.subr.mxu0 0.0
    %2440 = vmatpush1.msra.mxu0 %v2381
    %2441 = vmatprep.subr.mxu0 0.0
    %2442 = vmatpush1.msra.mxu0 %v2382
    %2443 = vmatprep.subr.mxu0 0.0
    %2444 = vmatpush1.msra.mxu0 %v2383
    %2445 = vmatprep.subr.mxu0 0.0
    %2446 = vmatpush1.msra.mxu0 %v2384
    %2447 = vmatprep.subr.mxu0 0.0
    %2448 = vmatpush1.msra.mxu0 %v2385
    %2449 = vmatprep.subr.mxu0 0.0
    %2450 = vmatpush1.msra.mxu0 %v2386
    %2451 = vmatprep.subr.mxu0 0.0
    %2452 = vmatpush1.msra.mxu0 0.0
    %2453 = vmatprep.subr.mxu0 0.0
    %2454 = vmatpush1.msra.mxu0 0.0
    %2455 = vmatprep.subr.mxu0 0.0
    %2456 = vmatpush1.msra.mxu0 0.0
    %2457 = vmatprep.subr.mxu0 0.0
    %2458 = vmatpush1.msra.mxu0 0.0
    %2459 = vmatprep.subr.mxu0 0.0
    %2460 = vmatpush1.msra.mxu0 0.0
    %2461 = vmatprep.subr.mxu0 0.0
    %2462 = vmatpush1.msra.mxu0 0.0
    %2463 = vmatprep.subr.mxu0 0.0
    %2464 = vmatpush1.msra.mxu0 0.0
    %2465 = vmatprep.subr.mxu0 0.0
    %2466 = vmatpush1.msra.mxu0 0.0
    %2467 = vmatprep.subr.mxu0 0.0
    %2468 = vmatpush1.msra.mxu0 0.0
    %2469 = vmatprep.subr.mxu0 0.0
    %2470 = vmatpush1.msra.mxu0 0.0
    %2471 = vmatprep.subr.mxu0 0.0
    %2472 = vmatpush1.msra.mxu0 0.0
    %2473 = vmatprep.subr.mxu0 0.0
    %2474 = vmatpush1.msra.mxu0 0.0
    %2475 = vmatprep.subr.mxu0 0.0
    %2476 = vmatpush1.msra.mxu0 0.0
    %2477 = vmatprep.subr.mxu0 0.0
    %2478 = vmatpush1.msra.mxu0 0.0
    %2479 = vmatprep.subr.mxu0 0.0
    %2480 = vmatpush1.msra.mxu0 0.0
    %2481 = vmatprep.subr.mxu0 0.0
    %2482 = vmatpush1.msra.mxu0 0.0
    %2483 = vmatprep.mubr.f32.mxu0 0.0
    %2484 = vmatmul.mubr.f32.gmra.mrb[0].mxu0 %v2411
    %v2485 = vpop.f32.mrb[0].mxu0
    %v2486 = vadd.f32 0.0, %v2485
    %v2487 = vpop.f32.mrb[0].mxu0
    %2488 = vmatprep.mubr.f32.mxu0 0.0
    %2489 = vmatmul.mubr.f32.gmra.mrb[0].mxu0 %v2412
    %v2490 = vpop.f32.mrb[0].mxu0
    %v2491 = vadd.f32 0.0, %v2490
    %v2492 = vpop.f32.mrb[0].mxu0
    %2493 = vmatprep.mubr.f32.mxu0 0.0
    %2494 = vmatmul.mubr.f32.gmra.mrb[0].mxu0 %v2413
    %v2495 = vpop.f32.mrb[0].mxu0
    %v2496 = vadd.f32 0.0, %v2495
    %v2497 = vpop.f32.mrb[0].mxu0
    %2498 = vmatprep.mubr.f32.mxu0 0.0
    %2499 = vmatmul.mubr.f32.gmra.mrb[0].mxu0 %v2414
    %v2500 = vpop.f32.mrb[0].mxu0
    %v2501 = vadd.f32 0.0, %v2500
    %v2502 = vpop.f32.mrb[0].mxu0
    %2503 = vmatprep.mubr.f32.mxu0 0.0
    %2504 = vmatmul.mubr.f32.gmra.mrb[0].mxu0 %v2415
    %v2505 = vpop.f32.mrb[0].mxu0
    %v2506 = vadd.f32 0.0, %v2505
    %v2507 = vpop.f32.mrb[0].mxu0
    %2508 = vmatprep.mubr.f32.mxu0 0.0
    %2509 = vmatmul.mubr.f32.gmra.mrb[0].mxu0 %v2416
    %v2510 = vpop.f32.mrb[0].mxu0
    %v2511 = vadd.f32 0.0, %v2510
    %v2512 = vpop.f32.mrb[0].mxu0
    %2513 = vmatprep.mubr.f32.mxu0 0.0
    %2514 = vmatmul.mubr.f32.gmra.mrb[0].mxu0 %v2417
    %v2515 = vpop.f32.mrb[0].mxu0
    %v2516 = vadd.f32 0.0, %v2515
    %v2517 = vpop.f32.mrb[0].mxu0
    %2518 = vmatprep.mubr.f32.mxu0 0.0
    %2519 = vmatmul.mubr.f32.gmra.mrb[0].mxu0 %v2418
    %v2520 = vpop.f32.mrb[0].mxu0
    %v2521 = vadd.f32 0.0, %v2520
    %v2522 = vpop.f32.mrb[0].mxu0
    %2523 = vdwg.mxu0
    %v2524 = vadd.f32 %v2486, %v2491
    %v2525 = vadd.f32 %v2524, %v2496
    %v2526 = vadd.f32 %v2525, %v2501
    %v2527 = vadd.f32 %v2526, %v2506
    %v2528 = vadd.f32 %v2527, %v2511
    %v2529 = vadd.f32 %v2528, %v2516
    %v2530 = vadd.f32 %v2529, %v2521
    %v2531 = vrot.slane %v2530, 4
    %v2532 = vadd.f32 %v2530, %v2531
    %v2533 = vrot.slane %v2532, 2
    %v2534 = vadd.f32 %v2532, %v2533
    %v2535 = vrot.slane %v2534, 1
    %v2536 = vadd.f32 %v2534, %v2535
    %v2537 = vadd.f32 %v2536, 0.0
    %v2538 = vmul.f32 %v2486, %v2486
    %v2539 = vmul.f32 %v2491, %v2491
    %v2540 = vmul.f32 %v2496, %v2496
    %v2541 = vmul.f32 %v2501, %v2501
    %v2542 = vmul.f32 %v2506, %v2506
    %v2543 = vmul.f32 %v2511, %v2511
    %v2544 = vmul.f32 %v2516, %v2516
    %v2545 = vmul.f32 %v2521, %v2521
    %v2546 = vadd.f32 %v2538, %v2539
    %v2547 = vadd.f32 %v2546, %v2540
    %v2548 = vadd.f32 %v2547, %v2541
    %v2549 = vadd.f32 %v2548, %v2542
    %v2550 = vadd.f32 %v2549, %v2543
    %v2551 = vadd.f32 %v2550, %v2544
    %v2552 = vadd.f32 %v2551, %v2545
    %v2553 = vrot.slane %v2552, 4
    %v2554 = vadd.f32 %v2552, %v2553
    %v2555 = vrot.slane %v2554, 2
    %v2556 = vadd.f32 %v2554, %v2555
    %v2557 = vrot.slane %v2556, 1
    %v2558 = vadd.f32 %v2556, %v2557
    %v2559 = vadd.f32 %v2558, 0.0
    %2560 = vst [vmem:[#allocation3] sm:$0xff] %v2486
    %2561 = vst [vmem:[#allocation3 + $0x8] sm:$0xff] %v2491
    %2562 = vst [vmem:[#allocation3 + $0x10] sm:$0xff] %v2496
    %2563 = vst [vmem:[#allocation3 + $0x18] sm:$0xff] %v2501
    %2564 = vst [vmem:[#allocation3 + $0x20] sm:$0xff] %v2506
    %2565 = vst [vmem:[#allocation3 + $0x28] sm:$0xff] %v2511
    %2566 = vst [vmem:[#allocation3 + $0x30] sm:$0xff] %v2516
    %2567 = vst [vmem:[#allocation3 + $0x38] sm:$0xff] %v2521
    %v2568 = vld [vmem:[#allocation2 + $0x40] sm:$0xff]
    %v2569 = vld [vmem:[#allocation2 + $0x48] sm:$0xff]
    %v2570 = vld [vmem:[#allocation2 + $0x50] sm:$0xff]
    %v2571 = vld [vmem:[#allocation2 + $0x58] sm:$0xff]
    %v2572 = vld [vmem:[#allocation2 + $0x60] sm:$0xff]
    %v2573 = vld [vmem:[#allocation2 + $0x68] sm:$0xff]
    %v2574 = vld [vmem:[#allocation2 + $0x70] sm:$0xff]
    %v2575 = vld [vmem:[#allocation2 + $0x78] sm:$0xff]
    %v2576 = vsub.f32 %v2568, %v2364
    %v2577 = vsub.f32 %v2569, %v2364
    %v2578 = vsub.f32 %v2570, %v2364
    %v2579 = vsub.f32 %v2571, %v2364
    %v2580 = vsub.f32 %v2572, %v2364
    %v2581 = vsub.f32 %v2573, %v2364
    %v2582 = vsub.f32 %v2574, %v2364
    %v2583 = vsub.f32 %v2575, %v2364
    %v2584 = vmax.f32 %v2576, 0.0
    %v2585 = vmax.f32 %v2577, 0.0
    %v2586 = vmax.f32 %v2578, 0.0
    %v2587 = vmax.f32 %v2579, 0.0
    %v2588 = vmax.f32 %v2580, 0.0
    %v2589 = vmax.f32 %v2581, 0.0
    %v2590 = vmax.f32 %v2582, 0.0
    %v2591 = vmax.f32 %v2583, 0.0
    %v2592 = vmul.f32 %v2584, %v2370
    %v2593 = vmul.f32 %v2585, %v2370
    %v2594 = vmul.f32 %v2586, %v2370
    %v2595 = vmul.f32 %v2587, %v2370
    %v2596 = vmul.f32 %v2588, %v2370
    %v2597 = vmul.f32 %v2589, %v2370
    %v2598 = vmul.f32 %v2590, %v2370
    %v2599 = vmul.f32 %v2591, %v2370
    %2600 = vmatprep.subr.mxu0 0.0
    %2601 = vmatpush1.msra.mxu0 %v2371
    %2602 = vmatprep.subr.mxu0 0.0
    %2603 = vmatpush1.msra.mxu0 %v2372
    %2604 = vmatprep.subr.mxu0 0.0
    %2605 = vmatpush1.msra.mxu0 %v2373
    %2606 = vmatprep.subr.mxu0 0.0
    %2607 = vmatpush1.msra.mxu0 %v2374
    %2608 = vmatprep.subr.mxu0 0.0
    %2609 = vmatpush1.msra.mxu0 %v2375
    %2610 = vmatprep.subr.mxu0 0.0
    %2611 = vmatpush1.msra.mxu0 %v2376
    %2612 = vmatprep.subr.mxu0 0.0
    %2613 = vmatpush1.msra.mxu0 %v2377
    %2614 = vmatprep.subr.mxu0 0.0
    %2615 = vmatpush1.msra.mxu0 %v2378
    %2616 = vmatprep.subr.mxu0 0.0
    %2617 = vmatpush1.msra.mxu0 %v2379
    %2618 = vmatprep.subr.mxu0 0.0
    %2619 = vmatpush1.msra.mxu0 %v2380
    %2620 = vmatprep.subr.mxu0 0.0
    %2621 = vmatpush1.msra.mxu0 %v2381
    %2622 = vmatprep.subr.mxu0 0.0
    %2623 = vmatpush1.msra.mxu0 %v2382
    %2624 = vmatprep.subr.mxu0 0.0
    %2625 = vmatpush1.msra.mxu0 %v2383
    %2626 = vmatprep.subr.mxu0 0.0
    %2627 = vmatpush1.msra.mxu0 %v2384
    %2628 = vmatprep.subr.mxu0 0.0
    %2629 = vmatpush1.msra.mxu0 %v2385
    %2630 = vmatprep.subr.mxu0 0.0
    %2631 = vmatpush1.msra.mxu0 %v2386
    %2632 = vmatprep.subr.mxu0 0.0
    %2633 = vmatpush1.msra.mxu0 0.0
    %2634 = vmatprep.subr.mxu0 0.0
    %2635 = vmatpush1.msra.mxu0 0.0
    %2636 = vmatprep.subr.mxu0 0.0
    %2637 = vmatpush1.msra.mxu0 0.0
    %2638 = vmatprep.subr.mxu0 0.0
    %2639 = vmatpush1.msra.mxu0 0.0
    %2640 = vmatprep.subr.mxu0 0.0
    %2641 = vmatpush1.msra.mxu0 0.0
    %2642 = vmatprep.subr.mxu0 0.0
    %2643 = vmatpush1.msra.mxu0 0.0
    %2644 = vmatprep.subr.mxu0 0.0
    %2645 = vmatpush1.msra.mxu0 0.0
    %2646 = vmatprep.subr.mxu0 0.0
    %2647 = vmatpush1.msra.mxu0 0.0
    %2648 = vmatprep.subr.mxu0 0.0
    %2649 = vmatpush1.msra.mxu0 0.0
    %2650 = vmatprep.subr.mxu0 0.0
    %2651 = vmatpush1.msra.mxu0 0.0
    %2652 = vmatprep.subr.mxu0 0.0
    %2653 = vmatpush1.msra.mxu0 0.0
    %2654 = vmatprep.subr.mxu0 0.0
    %2655 = vmatpush1.msra.mxu0 0.0
    %2656 = vmatprep.subr.mxu0 0.0
    %2657 = vmatpush1.msra.mxu0 0.0
    %2658 = vmatprep.subr.mxu0 0.0
    %2659 = vmatpush1.msra.mxu0 0.0
    %2660 = vmatprep.subr.mxu0 0.0
    %2661 = vmatpush1.msra.mxu0 0.0
    %2662 = vmatprep.subr.mxu0 0.0
    %2663 = vmatpush1.msra.mxu0 0.0
    %2664 = vmatprep.mubr.f32.mxu0 0.0
    %2665 = vmatmul.mubr.f32.gmra.mrb[0].mxu0 %v2592
    %v2666 = vpop.f32.mrb[0].mxu0
    %v2667 = vadd.f32 0.0, %v2666
    %v2668 = vpop.f32.mrb[0].mxu0
    %2669 = vmatprep.mubr.f32.mxu0 0.0
    %2670 = vmatmul.mubr.f32.gmra.mrb[0].mxu0 %v2593
    %v2671 = vpop.f32.mrb[0].mxu0
    %v2672 = vadd.f32 0.0, %v2671
    %v2673 = vpop.f32.mrb[0].mxu0
    %2674 = vmatprep.mubr.f32.mxu0 0.0
    %2675 = vmatmul.mubr.f32.gmra.mrb[0].mxu0 %v2594
    %v2676 = vpop.f32.mrb[0].mxu0
    %v2677 = vadd.f32 0.0, %v2676
    %v2678 = vpop.f32.mrb[0].mxu0
    %2679 = vmatprep.mubr.f32.mxu0 0.0
    %2680 = vmatmul.mubr.f32.gmra.mrb[0].mxu0 %v2595
    %v2681 = vpop.f32.mrb[0].mxu0
    %v2682 = vadd.f32 0.0, %v2681
    %v2683 = vpop.f32.mrb[0].mxu0
    %2684 = vmatprep.mubr.f32.mxu0 0.0
    %2685 = vmatmul.mubr.f32.gmra.mrb[0].mxu0 %v2596
    %v2686 = vpop.f32.mrb[0].mxu0
    %v2687 = vadd.f32 0.0, %v2686
    %v2688 = vpop.f32.mrb[0].mxu0
    %2689 = vmatprep.mubr.f32.mxu0 0.0
    %2690 = vmatmul.mubr.f32.gmra.mrb[0].mxu0 %v2597
    %v2691 = vpop.f32.mrb[0].mxu0
    %v2692 = vadd.f32 0.0, %v2691
    %v2693 = vpop.f32.mrb[0].mxu0
    %2694 = vmatprep.mubr.f32.mxu0 0.0
    %2695 = vmatmul.mubr.f32.gmra.mrb[0].mxu0 %v2598
    %v2696 = vpop.f32.mrb[0].mxu0
    %v2697 = vadd.f32 0.0, %v2696
    %v2698 = vpop.f32.mrb[0].mxu0
    %2699 = vmatprep.mubr.f32.mxu0 0.0
    %2700 = vmatmul.mubr.f32.gmra.mrb[0].mxu0 %v2599
    %v2701 = vpop.f32.mrb[0].mxu0
    %v2702 = vadd.f32 0.0, %v2701
    %v2703 = vpop.f32.mrb[0].mxu0
    %2704 = vdwg.mxu0
    %v2705 = vadd.f32 %v2667, %v2672
    %v2706 = vadd.f32 %v2705, %v2677
    %v2707 = vadd.f32 %v2706, %v2682
    %v2708 = vadd.f32 %v2707, %v2687
    %v2709 = vadd.f32 %v2708, %v2692
    %v2710 = vadd.f32 %v2709, %v2697
    %v2711 = vadd.f32 %v2710, %v2702
    %v2712 = vrot.slane %v2711, 4
    %v2713 = vadd.f32 %v2711, %v2712
    %v2714 = vrot.slane %v2713, 2
    %v2715 = vadd.f32 %v2713, %v2714
    %v2716 = vrot.slane %v2715, 1
    %v2717 = vadd.f32 %v2715, %v2716
    %v2718 = vadd.f32 %v2537, %v2717
    %v2719 = vmul.f32 %v2667, %v2667
    %v2720 = vmul.f32 %v2672, %v2672
    %v2721 = vmul.f32 %v2677, %v2677
    %v2722 = vmul.f32 %v2682, %v2682
    %v2723 = vmul.f32 %v2687, %v2687
    %v2724 = vmul.f32 %v2692, %v2692
    %v2725 = vmul.f32 %v2697, %v2697
    %v2726 = vmul.f32 %v2702, %v2702
    %v2727 = vadd.f32 %v2719, %v2720
    %v2728 = vadd.f32 %v2727, %v2721
    %v2729 = vadd.f32 %v2728, %v2722
    %v2730 = vadd.f32 %v2729, %v2723
    %v2731 = vadd.f32 %v2730, %v2724
    %v2732 = vadd.f32 %v2731, %v2725
    %v2733 = vadd.f32 %v2732, %v2726
    %v2734 = vrot.slane %v2733, 4
    %v2735 = vadd.f32 %v2733, %v2734
    %v2736 = vrot.slane %v2735, 2
    %v2737 = vadd.f32 %v2735, %v2736
    %v2738 = vrot.slane %v2737, 1
    %v2739 = vadd.f32 %v2737, %v2738
    %v2740 = vadd.f32 %v2559, %v2739
    %2741 = vst [vmem:[#allocation3 + $0x40] sm:$0xff] %v2667
    %2742 = vst [vmem:[#allocation3 + $0x48] sm:$0xff] %v2672
    %2743 = vst [vmem:[#allocation3 + $0x50] sm:$0xff] %v2677
    %2744 = vst [vmem:[#allocation3 + $0x58] sm:$0xff] %v2682
    %2745 = vst [vmem:[#allocation3 + $0x60] sm:$0xff] %v2687
    %2746 = vst [vmem:[#allocation3 + $0x68] sm:$0xff] %v2692
    %2747 = vst [vmem:[#allocation3 + $0x70] sm:$0xff] %v2697
    %2748 = vst [vmem:[#allocation3 + $0x78] sm:$0xff] %v2702
    %v2749 = vld [vmem:[#allocation2 + $0x80] sm:$0xff]
    %v2750 = vld [vmem:[#allocation2 + $0x88] sm:$0xff]
    %v2751 = vld [vmem:[#allocation2 + $0x90] sm:$0xff]
    %v2752 = vld [vmem:[#allocation2 + $0x98] sm:$0xff]
    %v2753 = vld [vmem:[#allocation2 + $0xa0] sm:$0xff]
    %v2754 = vld [vmem:[#allocation2 + $0xa8] sm:$0xff]
    %v2755 = vld [vmem:[#allocation2 + $0xb0] sm:$0xff]
    %v2756 = vld [vmem:[#allocation2 + $0xb8] sm:$0xff]
    %v2757 = vsub.f32 %v2749, %v2364
    %v2758 = vsub.f32 %v2750, %v2364
    %v2759 = vsub.f32 %v2751, %v2364
    %v2760 = vsub.f32 %v2752, %v2364
    %v2761 = vsub.f32 %v2753, %v2364
    %v2762 = vsub.f32 %v2754, %v2364
    %v2763 = vsub.f32 %v2755, %v2364
    %v2764 = vsub.f32 %v2756, %v2364
    %v2765 = vmax.f32 %v2757, 0.0
    %v2766 = vmax.f32 %v2758, 0.0
    %v2767 = vmax.f32 %v2759, 0.0
    %v2768 = vmax.f32 %v2760, 0.0
    %v2769 = vmax.f32 %v2761, 0.0
    %v2770 = vmax.f32 %v2762, 0.0
    %v2771 = vmax.f32 %v2763, 0.0
    %v2772 = vmax.f32 %v2764, 0.0
    %v2773 = vmul.f32 %v2765, %v2370
    %v2774 = vmul.f32 %v2766, %v2370
    %v2775 = vmul.f32 %v2767, %v2370
    %v2776 = vmul.f32 %v2768, %v2370
    %v2777 = vmul.f32 %v2769, %v2370
    %v2778 = vmul.f32 %v2770, %v2370
    %v2779 = vmul.f32 %v2771, %v2370
    %v2780 = vmul.f32 %v2772, %v2370
    %2781 = vmatprep.subr.mxu0 0.0
    %2782 = vmatpush1.msra.mxu0 %v2371
    %2783 = vmatprep.subr.mxu0 0.0
    %2784 = vmatpush1.msra.mxu0 %v2372
    %2785 = vmatprep.subr.mxu0 0.0
    %2786 = vmatpush1.msra.mxu0 %v2373
    %2787 = vmatprep.subr.mxu0 0.0
    %2788 = vmatpush1.msra.mxu0 %v2374
    %2789 = vmatprep.subr.mxu0 0.0
    %2790 = vmatpush1.msra.mxu0 %v2375
    %2791 = vmatprep.subr.mxu0 0.0
    %2792 = vmatpush1.msra.mxu0 %v2376
    %2793 = vmatprep.subr.mxu0 0.0
    %2794 = vmatpush1.msra.mxu0 %v2377
    %2795 = vmatprep.subr.mxu0 0.0
    %2796 = vmatpush1.msra.mxu0 %v2378
    %2797 = vmatprep.subr.mxu0 0.0
    %2798 = vmatpush1.msra.mxu0 %v2379
    %2799 = vmatprep.subr.mxu0 0.0
    %2800 = vmatpush1.msra.mxu0 %v2380
    %2801 = vmatprep.subr.mxu0 0.0
    %2802 = vmatpush1.msra.mxu0 %v2381
    %2803 = vmatprep.subr.mxu0 0.0
    %2804 = vmatpush1.msra.mxu0 %v2382
    %2805 = vmatprep.subr.mxu0 0.0
    %2806 = vmatpush1.msra.mxu0 %v2383
    %2807 = vmatprep.subr.mxu0 0.0
    %2808 = vmatpush1.msra.mxu0 %v2384
    %2809 = vmatprep.subr.mxu0 0.0
    %2810 = vmatpush1.msra.mxu0 %v2385
    %2811 = vmatprep.subr.mxu0 0.0
    %2812 = vmatpush1.msra.mxu0 %v2386
    %2813 = vmatprep.subr.mxu0 0.0
    %2814 = vmatpush1.msra.mxu0 0.0
    %2815 = vmatprep.subr.mxu0 0.0
    %2816 = vmatpush1.msra.mxu0 0.0
    %2817 = vmatprep.subr.mxu0 0.0
    %2818 = vmatpush1.msra.mxu0 0.0
    %2819 = vmatprep.subr.mxu0 0.0
    %2820 = vmatpush1.msra.mxu0 0.0
    %2821 = vmatprep.subr.mxu0 0.0
    %2822 = vmatpush1.msra.mxu0 0.0
    %2823 = vmatprep.subr.mxu0 0.0
    %2824 = vmatpush1.msra.mxu0 0.0
    %2825 = vmatprep.subr.mxu0 0.0
    %2826 = vmatpush1.msra.mxu0 0.0
    %2827 = vmatprep.subr.mxu0 0.0
    %2828 = vmatpush1.msra.mxu0 0.0
    %2829 = vmatprep.subr.mxu0 0.0
    %2830 = vmatpush1.msra.mxu0 0.0
    %2831 = vmatprep.subr.mxu0 0.0
    %2832 = vmatpush1.msra.mxu0 0.0
    %2833 = vmatprep.subr.mxu0 0.0
    %2834 = vmatpush1.msra.mxu0 0.0
    %2835 = vmatprep.subr.mxu0 0.0
    %2836 = vmatpush1.msra.mxu0 0.0
    %2837 = vmatprep.subr.mxu0 0.0
    %2838 = vmatpush1.msra.mxu0 0.0
    %2839 = vmatprep.subr.mxu0 0.0
    %2840 = vmatpush1.msra.mxu0 0.0
    %2841 = vmatprep.subr.mxu0 0.0
    %2842 = vmatpush1.msra.mxu0 0.0
    %2843 = vmatprep.subr.mxu0 0.0
    %2844 = vmatpush1.msra.mxu0 0.0
    %2845 = vmatprep.mubr.f32.mxu0 0.0
    %2846 = vmatmul.mubr.f32.gmra.mrb[0].mxu0 %v2773
    %v2847 = vpop.f32.mrb[0].mxu0
    %v2848 = vadd.f32 0.0, %v2847
    %v2849 = vpop.f32.mrb[0].mxu0
    %2850 = vmatprep.mubr.f32.mxu0 0.0
    %2851 = vmatmul.mubr.f32.gmra.mrb[0].mxu0 %v2774
    %v2852 = vpop.f32.mrb[0].mxu0
    %v2853 = vadd.f32 0.0, %v2852
    %v2854 = vpop.f32.mrb[0].mxu0
    %2855 = vmatprep.mubr.f32.mxu0 0.0
    %2856 = vmatmul.mubr.f32.gmra.mrb[0].mxu0 %v2775
    %v2857 = vpop.f32.mrb[0].mxu0
    %v2858 = vadd.f32 0.0, %v2857
    %v2859 = vpop.f32.mrb[0].mxu0
    %2860 = vmatprep.mubr.f32.mxu0 0.0
    %2861 = vmatmul.mubr.f32.gmra.mrb[0].mxu0 %v2776
    %v2862 = vpop.f32.mrb[0].mxu0
    %v2863 = vadd.f32 0.0, %v2862
    %v2864 = vpop.f32.mrb[0].mxu0
    %2865 = vmatprep.mubr.f32.mxu0 0.0
    %2866 = vmatmul.mubr.f32.gmra.mrb[0].mxu0 %v2777
    %v2867 = vpop.f32.mrb[0].mxu0
    %v2868 = vadd.f32 0.0, %v2867
    %v2869 = vpop.f32.mrb[0].mxu0
    %2870 = vmatprep.mubr.f32.mxu0 0.0
    %2871 = vmatmul.mubr.f32.gmra.mrb[0].mxu0 %v2778
    %v2872 = vpop.f32.mrb[0].mxu0
    %v2873 = vadd.f32 0.0, %v2872
    %v2874 = vpop.f32.mrb[0].mxu0
    %2875 = vmatprep.mubr.f32.mxu0 0.0
    %2876 = vmatmul.mubr.f32.gmra.mrb[0].mxu0 %v2779
    %v2877 = vpop.f32.mrb[0].mxu0
    %v2878 = vadd.f32 0.0, %v2877
    %v2879 = vpop.f32.mrb[0].mxu0
    %2880 = vmatprep.mubr.f32.mxu0 0.0
    %2881 = vmatmul.mubr.f32.gmra.mrb[0].mxu0 %v2780
    %v2882 = vpop.f32.mrb[0].mxu0
    %v2883 = vadd.f32 0.0, %v2882
    %v2884 = vpop.f32.mrb[0].mxu0
    %2885 = vdwg.mxu0
    %v2886 = vadd.f32 %v2848, %v2853
    %v2887 = vadd.f32 %v2886, %v2858
    %v2888 = vadd.f32 %v2887, %v2863
    %v2889 = vadd.f32 %v2888, %v2868
    %v2890 = vadd.f32 %v2889, %v2873
    %v2891 = vadd.f32 %v2890, %v2878
    %v2892 = vadd.f32 %v2891, %v2883
    %v2893 = vrot.slane %v2892, 4
    %v2894 = vadd.f32 %v2892, %v2893
    %v2895 = vrot.slane %v2894, 2
    %v2896 = vadd.f32 %v2894, %v2895
    %v2897 = vrot.slane %v2896, 1
    %v2898 = vadd.f32 %v2896, %v2897
    %v2899 = vadd.f32 %v2718, %v2898
    %v2900 = vmul.f32 %v2848, %v2848
    %v2901 = vmul.f32 %v2853, %v2853
    %v2902 = vmul.f32 %v2858, %v2858
    %v2903 = vmul.f32 %v2863, %v2863
    %v2904 = vmul.f32 %v2868, %v2868
    %v2905 = vmul.f32 %v2873, %v2873
    %v2906 = vmul.f32 %v2878, %v2878
    %v2907 = vmul.f32 %v2883, %v2883
    %v2908 = vadd.f32 %v2900, %v2901
    %v2909 = vadd.f32 %v2908, %v2902
    %v2910 = vadd.f32 %v2909, %v2903
    %v2911 = vadd.f32 %v2910, %v2904
    %v2912 = vadd.f32 %v2911, %v2905
    %v2913 = vadd.f32 %v2912, %v2906
    %v2914 = vadd.f32 %v2913, %v2907
    %v2915 = vrot.slane %v2914, 4
    %v2916 = vadd.f32 %v2914, %v2915
    %v2917 = vrot.slane %v2916, 2
    %v2918 = vadd.f32 %v2916, %v2917
    %v2919 = vrot.slane %v2918, 1
    %v2920 = vadd.f32 %v2918, %v2919
    %v2921 = vadd.f32 %v2740, %v2920
    %2922 = vst [vmem:[#allocation3 + $0x80] sm:$0xff] %v2848
    %2923 = vst [vmem:[#allocation3 + $0x88] sm:$0xff] %v2853
    %2924 = vst [vmem:[#allocation3 + $0x90] sm:$0xff] %v2858
    %2925 = vst [vmem:[#allocation3 + $0x98] sm:$0xff] %v2863
    %2926 = vst [vmem:[#allocation3 + $0xa0] sm:$0xff] %v2868
    %2927 = vst [vmem:[#allocation3 + $0xa8] sm:$0xff] %v2873
    %2928 = vst [vmem:[#allocation3 + $0xb0] sm:$0xff] %v2878
    %2929 = vst [vmem:[#allocation3 + $0xb8] sm:$0xff] %v2883
    %v2930 = vld [vmem:[#allocation2 + $0xc0] sm:$0xff]
    %v2931 = vld [vmem:[#allocation2 + $0xc8] sm:$0xff]
    %v2932 = vld [vmem:[#allocation2 + $0xd0] sm:$0xff]
    %v2933 = vld [vmem:[#allocation2 + $0xd8] sm:$0xff]
    %v2934 = vld [vmem:[#allocation2 + $0xe0] sm:$0xff]
    %v2935 = vld [vmem:[#allocation2 + $0xe8] sm:$0xff]
    %v2936 = vld [vmem:[#allocation2 + $0xf0] sm:$0xff]
    %v2937 = vld [vmem:[#allocation2 + $0xf8] sm:$0xff]
    %v2938 = vsub.f32 %v2930, %v2364
    %v2939 = vsub.f32 %v2931, %v2364
    %v2940 = vsub.f32 %v2932, %v2364
    %v2941 = vsub.f32 %v2933, %v2364
    %v2942 = vsub.f32 %v2934, %v2364
    %v2943 = vsub.f32 %v2935, %v2364
    %v2944 = vsub.f32 %v2936, %v2364
    %v2945 = vsub.f32 %v2937, %v2364
    %v2946 = vmax.f32 %v2938, 0.0
    %v2947 = vmax.f32 %v2939, 0.0
    %v2948 = vmax.f32 %v2940, 0.0
    %v2949 = vmax.f32 %v2941, 0.0
    %v2950 = vmax.f32 %v2942, 0.0
    %v2951 = vmax.f32 %v2943, 0.0
    %v2952 = vmax.f32 %v2944, 0.0
    %v2953 = vmax.f32 %v2945, 0.0
    %v2954 = vmul.f32 %v2946, %v2370
    %v2955 = vmul.f32 %v2947, %v2370
    %v2956 = vmul.f32 %v2948, %v2370
    %v2957 = vmul.f32 %v2949, %v2370
    %v2958 = vmul.f32 %v2950, %v2370
    %v2959 = vmul.f32 %v2951, %v2370
    %v2960 = vmul.f32 %v2952, %v2370
    %v2961 = vmul.f32 %v2953, %v2370
    %2962 = vmatprep.subr.mxu0 0.0
    %2963 = vmatpush1.msra.mxu0 %v2371
    %2964 = vmatprep.subr.mxu0 0.0
    %2965 = vmatpush1.msra.mxu0 %v2372
    %2966 = vmatprep.subr.mxu0 0.0
    %2967 = vmatpush1.msra.mxu0 %v2373
    %2968 = vmatprep.subr.mxu0 0.0
    %2969 = vmatpush1.msra.mxu0 %v2374
    %2970 = vmatprep.subr.mxu0 0.0
    %2971 = vmatpush1.msra.mxu0 %v2375
    %2972 = vmatprep.subr.mxu0 0.0
    %2973 = vmatpush1.msra.mxu0 %v2376
    %2974 = vmatprep.subr.mxu0 0.0
    %2975 = vmatpush1.msra.mxu0 %v2377
    %2976 = vmatprep.subr.mxu0 0.0
    %2977 = vmatpush1.msra.mxu0 %v2378
    %2978 = vmatprep.subr.mxu0 0.0
    %2979 = vmatpush1.msra.mxu0 %v2379
    %2980 = vmatprep.subr.mxu0 0.0
    %2981 = vmatpush1.msra.mxu0 %v2380
    %2982 = vmatprep.subr.mxu0 0.0
    %2983 = vmatpush1.msra.mxu0 %v2381
    %2984 = vmatprep.subr.mxu0 0.0
    %2985 = vmatpush1.msra.mxu0 %v2382
    %2986 = vmatprep.subr.mxu0 0.0
    %2987 = vmatpush1.msra.mxu0 %v2383
    %2988 = vmatprep.subr.mxu0 0.0
    %2989 = vmatpush1.msra.mxu0 %v2384
    %2990 = vmatprep.subr.mxu0 0.0
    %2991 = vmatpush1.msra.mxu0 %v2385
    %2992 = vmatprep.subr.mxu0 0.0
    %2993 = vmatpush1.msra.mxu0 %v2386
    %2994 = vmatprep.subr.mxu0 0.0
    %2995 = vmatpush1.msra.mxu0 0.0
    %2996 = vmatprep.subr.mxu0 0.0
    %2997 = vmatpush1.msra.mxu0 0.0
    %2998 = vmatprep.subr.mxu0 0.0
    %2999 = vmatpush1.msra.mxu0 0.0
    %3000 = vmatprep.subr.mxu0 0.0
    %3001 = vmatpush1.msra.mxu0 0.0
    %3002 = vmatprep.subr.mxu0 0.0
    %3003 = vmatpush1.msra.mxu0 0.0
    %3004 = vmatprep.subr.mxu0 0.0
    %3005 = vmatpush1.msra.mxu0 0.0
    %3006 = vmatprep.subr.mxu0 0.0
    %3007 = vmatpush1.msra.mxu0 0.0
    %3008 = vmatprep.subr.mxu0 0.0
    %3009 = vmatpush1.msra.mxu0 0.0
    %3010 = vmatprep.subr.mxu0 0.0
    %3011 = vmatpush1.msra.mxu0 0.0
    %3012 = vmatprep.subr.mxu0 0.0
    %3013 = vmatpush1.msra.mxu0 0.0
    %3014 = vmatprep.subr.mxu0 0.0
    %3015 = vmatpush1.msra.mxu0 0.0
    %3016 = vmatprep.subr.mxu0 0.0
    %3017 = vmatpush1.msra.mxu0 0.0
    %3018 = vmatprep.subr.mxu0 0.0
    %3019 = vmatpush1.msra.mxu0 0.0
    %3020 = vmatprep.subr.mxu0 0.0
    %3021 = vmatpush1.msra.mxu0 0.0
    %3022 = vmatprep.subr.mxu0 0.0
    %3023 = vmatpush1.msra.mxu0 0.0
    %3024 = vmatprep.subr.mxu0 0.0
    %3025 = vmatpush1.msra.mxu0 0.0
    %3026 = vmatprep.mubr.f32.mxu0 0.0
    %3027 = vmatmul.mubr.f32.gmra.mrb[0].mxu0 %v2954
    %v3028 = vpop.f32.mrb[0].mxu0
    %v3029 = vadd.f32 0.0, %v3028
    %v3030 = vpop.f32.mrb[0].mxu0
    %3031 = vmatprep.mubr.f32.mxu0 0.0
    %3032 = vmatmul.mubr.f32.gmra.mrb[0].mxu0 %v2955
    %v3033 = vpop.f32.mrb[0].mxu0
    %v3034 = vadd.f32 0.0, %v3033
    %v3035 = vpop.f32.mrb[0].mxu0
    %3036 = vmatprep.mubr.f32.mxu0 0.0
    %3037 = vmatmul.mubr.f32.gmra.mrb[0].mxu0 %v2956
    %v3038 = vpop.f32.mrb[0].mxu0
    %v3039 = vadd.f32 0.0, %v3038
    %v3040 = vpop.f32.mrb[0].mxu0
    %3041 = vmatprep.mubr.f32.mxu0 0.0
    %3042 = vmatmul.mubr.f32.gmra.mrb[0].mxu0 %v2957
    %v3043 = vpop.f32.mrb[0].mxu0
    %v3044 = vadd.f32 0.0, %v3043
    %v3045 = vpop.f32.mrb[0].mxu0
    %3046 = vmatprep.mubr.f32.mxu0 0.0
    %3047 = vmatmul.mubr.f32.gmra.mrb[0].mxu0 %v2958
    %v3048 = vpop.f32.mrb[0].mxu0
    %v3049 = vadd.f32 0.0, %v3048
    %v3050 = vpop.f32.mrb[0].mxu0
    %3051 = vmatprep.mubr.f32.mxu0 0.0
    %3052 = vmatmul.mubr.f32.gmra.mrb[0].mxu0 %v2959
    %v3053 = vpop.f32.mrb[0].mxu0
    %v3054 = vadd.f32 0.0, %v3053
    %v3055 = vpop.f32.mrb[0].mxu0
    %3056 = vmatprep.mubr.f32.mxu0 0.0
    %3057 = vmatmul.mubr.f32.gmra.mrb[0].mxu0 %v2960
    %v3058 = vpop.f32.mrb[0].mxu0
    %v3059 = vadd.f32 0.0, %v3058
    %v3060 = vpop.f32.mrb[0].mxu0
    %3061 = vmatprep.mubr.f32.mxu0 0.0
    %3062 = vmatmul.mubr.f32.gmra.mrb[0].mxu0 %v2961
    %v3063 = vpop.f32.mrb[0].mxu0
    %v3064 = vadd.f32 0.0, %v3063
    %v3065 = vpop.f32.mrb[0].mxu0
    %3066 = vdwg.mxu0
    %v3067 = vadd.f32 %v3029, %v3034
    %v3068 = vadd.f32 %v3067, %v3039
    %v3069 = vadd.f32 %v3068, %v3044
    %v3070 = vadd.f32 %v3069, %v3049
    %v3071 = vadd.f32 %v3070, %v3054
    %v3072 = vadd.f32 %v3071, %v3059
    %v3073 = vadd.f32 %v3072, %v3064
    %v3074 = vrot.slane %v3073, 4
    %v3075 = vadd.f32 %v3073, %v3074
    %v3076 = vrot.slane %v3075, 2
    %v3077 = vadd.f32 %v3075, %v3076
    %v3078 = vrot.slane %v3077, 1
    %v3079 = vadd.f32 %v3077, %v3078
    %v3080 = vadd.f32 %v2899, %v3079
    %v3081 = vmul.f32 %v3029, %v3029
    %v3082 = vmul.f32 %v3034, %v3034
    %v3083 = vmul.f32 %v3039, %v3039
    %v3084 = vmul.f32 %v3044, %v3044
    %v3085 = vmul.f32 %v3049, %v3049
    %v3086 = vmul.f32 %v3054, %v3054
    %v3087 = vmul.f32 %v3059, %v3059
    %v3088 = vmul.f32 %v3064, %v3064
    %v3089 = vadd.f32 %v3081, %v3082
    %v3090 = vadd.f32 %v3089, %v3083
    %v3091 = vadd.f32 %v3090, %v3084
    %v3092 = vadd.f32 %v3091, %v3085
    %v3093 = vadd.f32 %v3092, %v3086
    %v3094 = vadd.f32 %v3093, %v3087
    %v3095 = vadd.f32 %v3094, %v3088
    %v3096 = vrot.slane %v3095, 4
    %v3097 = vadd.f32 %v3095, %v3096
    %v3098 = vrot.slane %v3097, 2
    %v3099 = vadd.f32 %v3097, %v3098
    %v3100 = vrot.slane %v3099, 1
    %v3101 = vadd.f32 %v3099, %v3100
    %v3102 = vadd.f32 %v2921, %v3101
    %3103 = vst [vmem:[#allocation3 + $0xc0] sm:$0xff] %v3029
    %3104 = vst [vmem:[#allocation3 + $0xc8] sm:$0xff] %v3034
    %3105 = vst [vmem:[#allocation3 + $0xd0] sm:$0xff] %v3039
    %3106 = vst [vmem:[#allocation3 + $0xd8] sm:$0xff] %v3044
    %3107 = vst [vmem:[#allocation3 + $0xe0] sm:$0xff] %v3049
    %3108 = vst [vmem:[#allocation3 + $0xe8] sm:$0xff] %v3054
    %3109 = vst [vmem:[#allocation3 + $0xf0] sm:$0xff] %v3059
    %3110 = vst [vmem:[#allocation3 + $0xf8] sm:$0xff] %v3064
    %v3111 = vld [vmem:[#allocation2 + $0x100] sm:$0xff]
    %v3112 = vld [vmem:[#allocation2 + $0x108] sm:$0xff]
    %v3113 = vld [vmem:[#allocation2 + $0x110] sm:$0xff]
    %v3114 = vld [vmem:[#allocation2 + $0x118] sm:$0xff]
    %v3115 = vld [vmem:[#allocation2 + $0x120] sm:$0xff]
    %v3116 = vld [vmem:[#allocation2 + $0x128] sm:$0xff]
    %v3117 = vld [vmem:[#allocation2 + $0x130] sm:$0xff]
    %v3118 = vld [vmem:[#allocation2 + $0x138] sm:$0xff]
    %v3119 = vsub.f32 %v3111, %v2364
    %v3120 = vsub.f32 %v3112, %v2364
    %v3121 = vsub.f32 %v3113, %v2364
    %v3122 = vsub.f32 %v3114, %v2364
    %v3123 = vsub.f32 %v3115, %v2364
    %v3124 = vsub.f32 %v3116, %v2364
    %v3125 = vsub.f32 %v3117, %v2364
    %v3126 = vsub.f32 %v3118, %v2364
    %v3127 = vmax.f32 %v3119, 0.0
    %v3128 = vmax.f32 %v3120, 0.0
    %v3129 = vmax.f32 %v3121, 0.0
    %v3130 = vmax.f32 %v3122, 0.0
    %v3131 = vmax.f32 %v3123, 0.0
    %v3132 = vmax.f32 %v3124, 0.0
    %v3133 = vmax.f32 %v3125, 0.0
    %v3134 = vmax.f32 %v3126, 0.0
    %v3135 = vmul.f32 %v3127, %v2370
    %v3136 = vmul.f32 %v3128, %v2370
    %v3137 = vmul.f32 %v3129, %v2370
    %v3138 = vmul.f32 %v3130, %v2370
    %v3139 = vmul.f32 %v3131, %v2370
    %v3140 = vmul.f32 %v3132, %v2370
    %v3141 = vmul.f32 %v3133, %v2370
    %v3142 = vmul.f32 %v3134, %v2370
    %3143 = vmatprep.subr.mxu0 0.0
    %3144 = vmatpush1.msra.mxu0 %v2371
    %3145 = vmatprep.subr.mxu0 0.0
    %3146 = vmatpush1.msra.mxu0 %v2372
    %3147 = vmatprep.subr.mxu0 0.0
    %3148 = vmatpush1.msra.mxu0 %v2373
    %3149 = vmatprep.subr.mxu0 0.0
    %3150 = vmatpush1.msra.mxu0 %v2374
    %3151 = vmatprep.subr.mxu0 0.0
    %3152 = vmatpush1.msra.mxu0 %v2375
    %3153 = vmatprep.subr.mxu0 0.0
    %3154 = vmatpush1.msra.mxu0 %v2376
    %3155 = vmatprep.subr.mxu0 0.0
    %3156 = vmatpush1.msra.mxu0 %v2377
    %3157 = vmatprep.subr.mxu0 0.0
    %3158 = vmatpush1.msra.mxu0 %v2378
    %3159 = vmatprep.subr.mxu0 0.0
    %3160 = vmatpush1.msra.mxu0 %v2379
    %3161 = vmatprep.subr.mxu0 0.0
    %3162 = vmatpush1.msra.mxu0 %v2380
    %3163 = vmatprep.subr.mxu0 0.0
    %3164 = vmatpush1.msra.mxu0 %v2381
    %3165 = vmatprep.subr.mxu0 0.0
    %3166 = vmatpush1.msra.mxu0 %v2382
    %3167 = vmatprep.subr.mxu0 0.0
    %3168 = vmatpush1.msra.mxu0 %v2383
    %3169 = vmatprep.subr.mxu0 0.0
    %3170 = vmatpush1.msra.mxu0 %v2384
    %3171 = vmatprep.subr.mxu0 0.0
    %3172 = vmatpush1.msra.mxu0 %v2385
    %3173 = vmatprep.subr.mxu0 0.0
    %3174 = vmatpush1.msra.mxu0 %v2386
    %3175 = vmatprep.subr.mxu0 0.0
    %3176 = vmatpush1.msra.mxu0 0.0
    %3177 = vmatprep.subr.mxu0 0.0
    %3178 = vmatpush1.msra.mxu0 0.0
    %3179 = vmatprep.subr.mxu0 0.0
    %3180 = vmatpush1.msra.mxu0 0.0
    %3181 = vmatprep.subr.mxu0 0.0
    %3182 = vmatpush1.msra.mxu0 0.0
    %3183 = vmatprep.subr.mxu0 0.0
    %3184 = vmatpush1.msra.mxu0 0.0
    %3185 = vmatprep.subr.mxu0 0.0
    %3186 = vmatpush1.msra.mxu0 0.0
    %3187 = vmatprep.subr.mxu0 0.0
    %3188 = vmatpush1.msra.mxu0 0.0
    %3189 = vmatprep.subr.mxu0 0.0
    %3190 = vmatpush1.msra.mxu0 0.0
    %3191 = vmatprep.subr.mxu0 0.0
    %3192 = vmatpush1.msra.mxu0 0.0
    %3193 = vmatprep.subr.mxu0 0.0
    %3194 = vmatpush1.msra.mxu0 0.0
    %3195 = vmatprep.subr.mxu0 0.0
    %3196 = vmatpush1.msra.mxu0 0.0
    %3197 = vmatprep.subr.mxu0 0.0
    %3198 = vmatpush1.msra.mxu0 0.0
    %3199 = vmatprep.subr.mxu0 0.0
    %3200 = vmatpush1.msra.mxu0 0.0
    %3201 = vmatprep.subr.mxu0 0.0
    %3202 = vmatpush1.msra.mxu0 0.0
    %3203 = vmatprep.subr.mxu0 0.0
    %3204 = vmatpush1.msra.mxu0 0.0
    %3205 = vmatprep.subr.mxu0 0.0
    %3206 = vmatpush1.msra.mxu0 0.0
    %3207 = vmatprep.mubr.f32.mxu0 0.0
    %3208 = vmatmul.mubr.f32.gmra.mrb[0].mxu0 %v3135
    %v3209 = vpop.f32.mrb[0].mxu0
    %v3210 = vadd.f32 0.0, %v3209
    %v3211 = vpop.f32.mrb[0].mxu0
    %3212 = vmatprep.mubr.f32.mxu0 0.0
    %3213 = vmatmul.mubr.f32.gmra.mrb[0].mxu0 %v3136
    %v3214 = vpop.f32.mrb[0].mxu0
    %v3215 = vadd.f32 0.0, %v3214
    %v3216 = vpop.f32.mrb[0].mxu0
    %3217 = vmatprep.mubr.f32.mxu0 0.0
    %3218 = vmatmul.mubr.f32.gmra.mrb[0].mxu0 %v3137
    %v3219 = vpop.f32.mrb[0].mxu0
    %v3220 = vadd.f32 0.0, %v3219
    %v3221 = vpop.f32.mrb[0].mxu0
    %3222 = vmatprep.mubr.f32.mxu0 0.0
    %3223 = vmatmul.mubr.f32.gmra.mrb[0].mxu0 %v3138
    %v3224 = vpop.f32.mrb[0].mxu0
    %v3225 = vadd.f32 0.0, %v3224
    %v3226 = vpop.f32.mrb[0].mxu0
    %3227 = vmatprep.mubr.f32.mxu0 0.0
    %3228 = vmatmul.mubr.f32.gmra.mrb[0].mxu0 %v3139
    %v3229 = vpop.f32.mrb[0].mxu0
    %v3230 = vadd.f32 0.0, %v3229
    %v3231 = vpop.f32.mrb[0].mxu0
    %3232 = vmatprep.mubr.f32.mxu0 0.0
    %3233 = vmatmul.mubr.f32.gmra.mrb[0].mxu0 %v3140
    %v3234 = vpop.f32.mrb[0].mxu0
    %v3235 = vadd.f32 0.0, %v3234
    %v3236 = vpop.f32.mrb[0].mxu0
    %3237 = vmatprep.mubr.f32.mxu0 0.0
    %3238 = vmatmul.mubr.f32.gmra.mrb[0].mxu0 %v3141
    %v3239 = vpop.f32.mrb[0].mxu0
    %v3240 = vadd.f32 0.0, %v3239
    %v3241 = vpop.f32.mrb[0].mxu0
    %3242 = vmatprep.mubr.f32.mxu0 0.0
    %3243 = vmatmul.mubr.f32.gmra.mrb[0].mxu0 %v3142
    %v3244 = vpop.f32.mrb[0].mxu0
    %v3245 = vadd.f32 0.0, %v3244
    %v3246 = vpop.f32.mrb[0].mxu0
    %3247 = vdwg.mxu0
    %v3248 = vadd.f32 %v3210, %v3215
    %v3249 = vadd.f32 %v3248, %v3220
    %v3250 = vadd.f32 %v3249, %v3225
    %v3251 = vadd.f32 %v3250, %v3230
    %v3252 = vadd.f32 %v3251, %v3235
    %v3253 = vadd.f32 %v3252, %v3240
    %v3254 = vadd.f32 %v3253, %v3245
    %v3255 = vrot.slane %v3254, 4
    %v3256 = vadd.f32 %v3254, %v3255
    %v3257 = vrot.slane %v3256, 2
    %v3258 = vadd.f32 %v3256, %v3257
    %v3259 = vrot.slane %v3258, 1
    %v3260 = vadd.f32 %v3258, %v3259
    %v3261 = vadd.f32 %v3080, %v3260
    %v3262 = vmul.f32 %v3210, %v3210
    %v3263 = vmul.f32 %v3215, %v3215
    %v3264 = vmul.f32 %v3220, %v3220
    %v3265 = vmul.f32 %v3225, %v3225
    %v3266 = vmul.f32 %v3230, %v3230
    %v3267 = vmul.f32 %v3235, %v3235
    %v3268 = vmul.f32 %v3240, %v3240
    %v3269 = vmul.f32 %v3245, %v3245
    %v3270 = vadd.f32 %v3262, %v3263
    %v3271 = vadd.f32 %v3270, %v3264
    %v3272 = vadd.f32 %v3271, %v3265
    %v3273 = vadd.f32 %v3272, %v3266
    %v3274 = vadd.f32 %v3273, %v3267
    %v3275 = vadd.f32 %v3274, %v3268
    %v3276 = vadd.f32 %v3275, %v3269
    %v3277 = vrot.slane %v3276, 4
    %v3278 = vadd.f32 %v3276, %v3277
    %v3279 = vrot.slane %v3278, 2
    %v3280 = vadd.f32 %v3278, %v3279
    %v3281 = vrot.slane %v3280, 1
    %v3282 = vadd.f32 %v3280, %v3281
    %v3283 = vadd.f32 %v3102, %v3282
    %3284 = vst [vmem:[#allocation3 + $0x100] sm:$0xff] %v3210
    %3285 = vst [vmem:[#allocation3 + $0x108] sm:$0xff] %v3215
    %3286 = vst [vmem:[#allocation3 + $0x110] sm:$0xff] %v3220
    %3287 = vst [vmem:[#allocation3 + $0x118] sm:$0xff] %v3225
    %3288 = vst [vmem:[#allocation3 + $0x120] sm:$0xff] %v3230
    %3289 = vst [vmem:[#allocation3 + $0x128] sm:$0xff] %v3235
    %3290 = vst [vmem:[#allocation3 + $0x130] sm:$0xff] %v3240
    %3291 = vst [vmem:[#allocation3 + $0x138] sm:$0xff] %v3245
    %v3292 = vld [vmem:[#allocation2 + $0x140] sm:$0xff]
    %v3293 = vld [vmem:[#allocation2 + $0x148] sm:$0xff]
    %v3294 = vld [vmem:[#allocation2 + $0x150] sm:$0xff]
    %v3295 = vld [vmem:[#allocation2 + $0x158] sm:$0xff]
    %v3296 = vld [vmem:[#allocation2 + $0x160] sm:$0xff]
    %v3297 = vld [vmem:[#allocation2 + $0x168] sm:$0xff]
    %v3298 = vld [vmem:[#allocation2 + $0x170] sm:$0xff]
    %v3299 = vld [vmem:[#allocation2 + $0x178] sm:$0xff]
    %v3300 = vsub.f32 %v3292, %v2364
    %v3301 = vsub.f32 %v3293, %v2364
    %v3302 = vsub.f32 %v3294, %v2364
    %v3303 = vsub.f32 %v3295, %v2364
    %v3304 = vsub.f32 %v3296, %v2364
    %v3305 = vsub.f32 %v3297, %v2364
    %v3306 = vsub.f32 %v3298, %v2364
    %v3307 = vsub.f32 %v3299, %v2364
    %v3308 = vmax.f32 %v3300, 0.0
    %v3309 = vmax.f32 %v3301, 0.0
    %v3310 = vmax.f32 %v3302, 0.0
    %v3311 = vmax.f32 %v3303, 0.0
    %v3312 = vmax.f32 %v3304, 0.0
    %v3313 = vmax.f32 %v3305, 0.0
    %v3314 = vmax.f32 %v3306, 0.0
    %v3315 = vmax.f32 %v3307, 0.0
    %v3316 = vmul.f32 %v3308, %v2370
    %v3317 = vmul.f32 %v3309, %v2370
    %v3318 = vmul.f32 %v3310, %v2370
    %v3319 = vmul.f32 %v3311, %v2370
    %v3320 = vmul.f32 %v3312, %v2370
    %v3321 = vmul.f32 %v3313, %v2370
    %v3322 = vmul.f32 %v3314, %v2370
    %v3323 = vmul.f32 %v3315, %v2370
    %3324 = vmatprep.subr.mxu0 0.0
    %3325 = vmatpush1.msra.mxu0 %v2371
    %3326 = vmatprep.subr.mxu0 0.0
    %3327 = vmatpush1.msra.mxu0 %v2372
    %3328 = vmatprep.subr.mxu0 0.0
    %3329 = vmatpush1.msra.mxu0 %v2373
    %3330 = vmatprep.subr.mxu0 0.0
    %3331 = vmatpush1.msra.mxu0 %v2374
    %3332 = vmatprep.subr.mxu0 0.0
    %3333 = vmatpush1.msra.mxu0 %v2375
    %3334 = vmatprep.subr.mxu0 0.0
    %3335 = vmatpush1.msra.mxu0 %v2376
    %3336 = vmatprep.subr.mxu0 0.0
    %3337 = vmatpush1.msra.mxu0 %v2377
    %3338 = vmatprep.subr.mxu0 0.0
    %3339 = vmatpush1.msra.mxu0 %v2378
    %3340 = vmatprep.subr.mxu0 0.0
    %3341 = vmatpush1.msra.mxu0 %v2379
    %3342 = vmatprep.subr.mxu0 0.0
    %3343 = vmatpush1.msra.mxu0 %v2380
    %3344 = vmatprep.subr.mxu0 0.0
    %3345 = vmatpush1.msra.mxu0 %v2381
    %3346 = vmatprep.subr.mxu0 0.0
    %3347 = vmatpush1.msra.mxu0 %v2382
    %3348 = vmatprep.subr.mxu0 0.0
    %3349 = vmatpush1.msra.mxu0 %v2383
    %3350 = vmatprep.subr.mxu0 0.0
    %3351 = vmatpush1.msra.mxu0 %v2384
    %3352 = vmatprep.subr.mxu0 0.0
    %3353 = vmatpush1.msra.mxu0 %v2385
    %3354 = vmatprep.subr.mxu0 0.0
    %3355 = vmatpush1.msra.mxu0 %v2386
    %3356 = vmatprep.subr.mxu0 0.0
    %3357 = vmatpush1.msra.mxu0 0.0
    %3358 = vmatprep.subr.mxu0 0.0
    %3359 = vmatpush1.msra.mxu0 0.0
    %3360 = vmatprep.subr.mxu0 0.0
    %3361 = vmatpush1.msra.mxu0 0.0
    %3362 = vmatprep.subr.mxu0 0.0
    %3363 = vmatpush1.msra.mxu0 0.0
    %3364 = vmatprep.subr.mxu0 0.0
    %3365 = vmatpush1.msra.mxu0 0.0
    %3366 = vmatprep.subr.mxu0 0.0
    %3367 = vmatpush1.msra.mxu0 0.0
    %3368 = vmatprep.subr.mxu0 0.0
    %3369 = vmatpush1.msra.mxu0 0.0
    %3370 = vmatprep.subr.mxu0 0.0
    %3371 = vmatpush1.msra.mxu0 0.0
    %3372 = vmatprep.subr.mxu0 0.0
    %3373 = vmatpush1.msra.mxu0 0.0
    %3374 = vmatprep.subr.mxu0 0.0
    %3375 = vmatpush1.msra.mxu0 0.0
    %3376 = vmatprep.subr.mxu0 0.0
    %3377 = vmatpush1.msra.mxu0 0.0
    %3378 = vmatprep.subr.mxu0 0.0
    %3379 = vmatpush1.msra.mxu0 0.0
    %3380 = vmatprep.subr.mxu0 0.0
    %3381 = vmatpush1.msra.mxu0 0.0
    %3382 = vmatprep.subr.mxu0 0.0
    %3383 = vmatpush1.msra.mxu0 0.0
    %3384 = vmatprep.subr.mxu0 0.0
    %3385 = vmatpush1.msra.mxu0 0.0
    %3386 = vmatprep.subr.mxu0 0.0
    %3387 = vmatpush1.msra.mxu0 0.0
    %3388 = vmatprep.mubr.f32.mxu0 0.0
    %3389 = vmatmul.mubr.f32.gmra.mrb[0].mxu0 %v3316
    %v3390 = vpop.f32.mrb[0].mxu0
    %v3391 = vadd.f32 0.0, %v3390
    %v3392 = vpop.f32.mrb[0].mxu0
    %3393 = vmatprep.mubr.f32.mxu0 0.0
    %3394 = vmatmul.mubr.f32.gmra.mrb[0].mxu0 %v3317
    %v3395 = vpop.f32.mrb[0].mxu0
    %v3396 = vadd.f32 0.0, %v3395
    %v3397 = vpop.f32.mrb[0].mxu0
    %3398 = vmatprep.mubr.f32.mxu0 0.0
    %3399 = vmatmul.mubr.f32.gmra.mrb[0].mxu0 %v3318
    %v3400 = vpop.f32.mrb[0].mxu0
    %v3401 = vadd.f32 0.0, %v3400
    %v3402 = vpop.f32.mrb[0].mxu0
    %3403 = vmatprep.mubr.f32.mxu0 0.0
    %3404 = vmatmul.mubr.f32.gmra.mrb[0].mxu0 %v3319
    %v3405 = vpop.f32.mrb[0].mxu0
    %v3406 = vadd.f32 0.0, %v3405
    %v3407 = vpop.f32.mrb[0].mxu0
    %3408 = vmatprep.mubr.f32.mxu0 0.0
    %3409 = vmatmul.mubr.f32.gmra.mrb[0].mxu0 %v3320
    %v3410 = vpop.f32.mrb[0].mxu0
    %v3411 = vadd.f32 0.0, %v3410
    %v3412 = vpop.f32.mrb[0].mxu0
    %3413 = vmatprep.mubr.f32.mxu0 0.0
    %3414 = vmatmul.mubr.f32.gmra.mrb[0].mxu0 %v3321
    %v3415 = vpop.f32.mrb[0].mxu0
    %v3416 = vadd.f32 0.0, %v3415
    %v3417 = vpop.f32.mrb[0].mxu0
    %3418 = vmatprep.mubr.f32.mxu0 0.0
    %3419 = vmatmul.mubr.f32.gmra.mrb[0].mxu0 %v3322
    %v3420 = vpop.f32.mrb[0].mxu0
    %v3421 = vadd.f32 0.0, %v3420
    %v3422 = vpop.f32.mrb[0].mxu0
    %3423 = vmatprep.mubr.f32.mxu0 0.0
    %3424 = vmatmul.mubr.f32.gmra.mrb[0].mxu0 %v3323
    %v3425 = vpop.f32.mrb[0].mxu0
    %v3426 = vadd.f32 0.0, %v3425
    %v3427 = vpop.f32.mrb[0].mxu0
    %3428 = vdwg.mxu0
    %v3429 = vadd.f32 %v3391, %v3396
    %v3430 = vadd.f32 %v3429, %v3401
    %v3431 = vadd.f32 %v3430, %v3406
    %v3432 = vadd.f32 %v3431, %v3411
    %v3433 = vadd.f32 %v3432, %v3416
    %v3434 = vadd.f32 %v3433, %v3421
    %v3435 = vadd.f32 %v3434, %v3426
    %v3436 = vrot.slane %v3435, 4
    %v3437 = vadd.f32 %v3435, %v3436
    %v3438 = vrot.slane %v3437, 2
    %v3439 = vadd.f32 %v3437, %v3438
    %v3440 = vrot.slane %v3439, 1
    %v3441 = vadd.f32 %v3439, %v3440
    %v3442 = vadd.f32 %v3261, %v3441
    %v3443 = vmul.f32 %v3391, %v3391
    %v3444 = vmul.f32 %v3396, %v3396
    %v3445 = vmul.f32 %v3401, %v3401
    %v3446 = vmul.f32 %v3406, %v3406
    %v3447 = vmul.f32 %v3411, %v3411
    %v3448 = vmul.f32 %v3416, %v3416
    %v3449 = vmul.f32 %v3421, %v3421
    %v3450 = vmul.f32 %v3426, %v3426
    %v3451 = vadd.f32 %v3443, %v3444
    %v3452 = vadd.f32 %v3451, %v3445
    %v3453 = vadd.f32 %v3452, %v3446
    %v3454 = vadd.f32 %v3453, %v3447
    %v3455 = vadd.f32 %v3454, %v3448
    %v3456 = vadd.f32 %v3455, %v3449
    %v3457 = vadd.f32 %v3456, %v3450
    %v3458 = vrot.slane %v3457, 4
    %v3459 = vadd.f32 %v3457, %v3458
    %v3460 = vrot.slane %v3459, 2
    %v3461 = vadd.f32 %v3459, %v3460
    %v3462 = vrot.slane %v3461, 1
    %v3463 = vadd.f32 %v3461, %v3462
    %v3464 = vadd.f32 %v3283, %v3463
    %3465 = vst [vmem:[#allocation3 + $0x140] sm:$0xff] %v3391
    %3466 = vst [vmem:[#allocation3 + $0x148] sm:$0xff] %v3396
    %3467 = vst [vmem:[#allocation3 + $0x150] sm:$0xff] %v3401
    %3468 = vst [vmem:[#allocation3 + $0x158] sm:$0xff] %v3406
    %3469 = vst [vmem:[#allocation3 + $0x160] sm:$0xff] %v3411
    %3470 = vst [vmem:[#allocation3 + $0x168] sm:$0xff] %v3416
    %3471 = vst [vmem:[#allocation3 + $0x170] sm:$0xff] %v3421
    %3472 = vst [vmem:[#allocation3 + $0x178] sm:$0xff] %v3426
    %v3473 = vld [vmem:[#allocation2 + $0x180] sm:$0xff]
    %v3474 = vld [vmem:[#allocation2 + $0x188] sm:$0xff]
    %v3475 = vld [vmem:[#allocation2 + $0x190] sm:$0xff]
    %v3476 = vld [vmem:[#allocation2 + $0x198] sm:$0xff]
    %v3477 = vld [vmem:[#allocation2 + $0x1a0] sm:$0xff]
    %v3478 = vld [vmem:[#allocation2 + $0x1a8] sm:$0xff]
    %v3479 = vld [vmem:[#allocation2 + $0x1b0] sm:$0xff]
    %v3480 = vld [vmem:[#allocation2 + $0x1b8] sm:$0xff]
    %v3481 = vsub.f32 %v3473, %v2364
    %v3482 = vsub.f32 %v3474, %v2364
    %v3483 = vsub.f32 %v3475, %v2364
    %v3484 = vsub.f32 %v3476, %v2364
    %v3485 = vsub.f32 %v3477, %v2364
    %v3486 = vsub.f32 %v3478, %v2364
    %v3487 = vsub.f32 %v3479, %v2364
    %v3488 = vsub.f32 %v3480, %v2364
    %v3489 = vmax.f32 %v3481, 0.0
    %v3490 = vmax.f32 %v3482, 0.0
    %v3491 = vmax.f32 %v3483, 0.0
    %v3492 = vmax.f32 %v3484, 0.0
    %v3493 = vmax.f32 %v3485, 0.0
    %v3494 = vmax.f32 %v3486, 0.0
    %v3495 = vmax.f32 %v3487, 0.0
    %v3496 = vmax.f32 %v3488, 0.0
    %v3497 = vmul.f32 %v3489, %v2370
    %v3498 = vmul.f32 %v3490, %v2370
    %v3499 = vmul.f32 %v3491, %v2370
    %v3500 = vmul.f32 %v3492, %v2370
    %v3501 = vmul.f32 %v3493, %v2370
    %v3502 = vmul.f32 %v3494, %v2370
    %v3503 = vmul.f32 %v3495, %v2370
    %v3504 = vmul.f32 %v3496, %v2370
    %3505 = vmatprep.subr.mxu0 0.0
    %3506 = vmatpush1.msra.mxu0 %v2371
    %3507 = vmatprep.subr.mxu0 0.0
    %3508 = vmatpush1.msra.mxu0 %v2372
    %3509 = vmatprep.subr.mxu0 0.0
    %3510 = vmatpush1.msra.mxu0 %v2373
    %3511 = vmatprep.subr.mxu0 0.0
    %3512 = vmatpush1.msra.mxu0 %v2374
    %3513 = vmatprep.subr.mxu0 0.0
    %3514 = vmatpush1.msra.mxu0 %v2375
    %3515 = vmatprep.subr.mxu0 0.0
    %3516 = vmatpush1.msra.mxu0 %v2376
    %3517 = vmatprep.subr.mxu0 0.0
    %3518 = vmatpush1.msra.mxu0 %v2377
    %3519 = vmatprep.subr.mxu0 0.0
    %3520 = vmatpush1.msra.mxu0 %v2378
    %3521 = vmatprep.subr.mxu0 0.0
    %3522 = vmatpush1.msra.mxu0 %v2379
    %3523 = vmatprep.subr.mxu0 0.0
    %3524 = vmatpush1.msra.mxu0 %v2380
    %3525 = vmatprep.subr.mxu0 0.0
    %3526 = vmatpush1.msra.mxu0 %v2381
    %3527 = vmatprep.subr.mxu0 0.0
    %3528 = vmatpush1.msra.mxu0 %v2382
    %3529 = vmatprep.subr.mxu0 0.0
    %3530 = vmatpush1.msra.mxu0 %v2383
    %3531 = vmatprep.subr.mxu0 0.0
    %3532 = vmatpush1.msra.mxu0 %v2384
    %3533 = vmatprep.subr.mxu0 0.0
    %3534 = vmatpush1.msra.mxu0 %v2385
    %3535 = vmatprep.subr.mxu0 0.0
    %3536 = vmatpush1.msra.mxu0 %v2386
    %3537 = vmatprep.subr.mxu0 0.0
    %3538 = vmatpush1.msra.mxu0 0.0
    %3539 = vmatprep.subr.mxu0 0.0
    %3540 = vmatpush1.msra.mxu0 0.0
    %3541 = vmatprep.subr.mxu0 0.0
    %3542 = vmatpush1.msra.mxu0 0.0
    %3543 = vmatprep.subr.mxu0 0.0
    %3544 = vmatpush1.msra.mxu0 0.0
    %3545 = vmatprep.subr.mxu0 0.0
    %3546 = vmatpush1.msra.mxu0 0.0
    %3547 = vmatprep.subr.mxu0 0.0
    %3548 = vmatpush1.msra.mxu0 0.0
    %3549 = vmatprep.subr.mxu0 0.0
    %3550 = vmatpush1.msra.mxu0 0.0
    %3551 = vmatprep.subr.mxu0 0.0
    %3552 = vmatpush1.msra.mxu0 0.0
    %3553 = vmatprep.subr.mxu0 0.0
    %3554 = vmatpush1.msra.mxu0 0.0
    %3555 = vmatprep.subr.mxu0 0.0
    %3556 = vmatpush1.msra.mxu0 0.0
    %3557 = vmatprep.subr.mxu0 0.0
    %3558 = vmatpush1.msra.mxu0 0.0
    %3559 = vmatprep.subr.mxu0 0.0
    %3560 = vmatpush1.msra.mxu0 0.0
    %3561 = vmatprep.subr.mxu0 0.0
    %3562 = vmatpush1.msra.mxu0 0.0
    %3563 = vmatprep.subr.mxu0 0.0
    %3564 = vmatpush1.msra.mxu0 0.0
    %3565 = vmatprep.subr.mxu0 0.0
    %3566 = vmatpush1.msra.mxu0 0.0
    %3567 = vmatprep.subr.mxu0 0.0
    %3568 = vmatpush1.msra.mxu0 0.0
    %3569 = vmatprep.mubr.f32.mxu0 0.0
    %3570 = vmatmul.mubr.f32.gmra.mrb[0].mxu0 %v3497
    %v3571 = vpop.f32.mrb[0].mxu0
    %v3572 = vadd.f32 0.0, %v3571
    %v3573 = vpop.f32.mrb[0].mxu0
    %3574 = vmatprep.mubr.f32.mxu0 0.0
    %3575 = vmatmul.mubr.f32.gmra.mrb[0].mxu0 %v3498
    %v3576 = vpop.f32.mrb[0].mxu0
    %v3577 = vadd.f32 0.0, %v3576
    %v3578 = vpop.f32.mrb[0].mxu0
    %3579 = vmatprep.mubr.f32.mxu0 0.0
    %3580 = vmatmul.mubr.f32.gmra.mrb[0].mxu0 %v3499
    %v3581 = vpop.f32.mrb[0].mxu0
    %v3582 = vadd.f32 0.0, %v3581
    %v3583 = vpop.f32.mrb[0].mxu0
    %3584 = vmatprep.mubr.f32.mxu0 0.0
    %3585 = vmatmul.mubr.f32.gmra.mrb[0].mxu0 %v3500
    %v3586 = vpop.f32.mrb[0].mxu0
    %v3587 = vadd.f32 0.0, %v3586
    %v3588 = vpop.f32.mrb[0].mxu0
    %3589 = vmatprep.mubr.f32.mxu0 0.0
    %3590 = vmatmul.mubr.f32.gmra.mrb[0].mxu0 %v3501
    %v3591 = vpop.f32.mrb[0].mxu0
    %v3592 = vadd.f32 0.0, %v3591
    %v3593 = vpop.f32.mrb[0].mxu0
    %3594 = vmatprep.mubr.f32.mxu0 0.0
    %3595 = vmatmul.mubr.f32.gmra.mrb[0].mxu0 %v3502
    %v3596 = vpop.f32.mrb[0].mxu0
    %v3597 = vadd.f32 0.0, %v3596
    %v3598 = vpop.f32.mrb[0].mxu0
    %3599 = vmatprep.mubr.f32.mxu0 0.0
    %3600 = vmatmul.mubr.f32.gmra.mrb[0].mxu0 %v3503
    %v3601 = vpop.f32.mrb[0].mxu0
    %v3602 = vadd.f32 0.0, %v3601
    %v3603 = vpop.f32.mrb[0].mxu0
    %3604 = vmatprep.mubr.f32.mxu0 0.0
    %3605 = vmatmul.mubr.f32.gmra.mrb[0].mxu0 %v3504
    %v3606 = vpop.f32.mrb[0].mxu0
    %v3607 = vadd.f32 0.0, %v3606
    %v3608 = vpop.f32.mrb[0].mxu0
    %3609 = vdwg.mxu0
    %v3610 = vadd.f32 %v3572, %v3577
    %v3611 = vadd.f32 %v3610, %v3582
    %v3612 = vadd.f32 %v3611, %v3587
    %v3613 = vadd.f32 %v3612, %v3592
    %v3614 = vadd.f32 %v3613, %v3597
    %v3615 = vadd.f32 %v3614, %v3602
    %v3616 = vadd.f32 %v3615, %v3607
    %v3617 = vrot.slane %v3616, 4
    %v3618 = vadd.f32 %v3616, %v3617
    %v3619 = vrot.slane %v3618, 2
    %v3620 = vadd.f32 %v3618, %v3619
    %v3621 = vrot.slane %v3620, 1
    %v3622 = vadd.f32 %v3620, %v3621
    %v3623 = vadd.f32 %v3442, %v3622
    %v3624 = vmul.f32 %v3572, %v3572
    %v3625 = vmul.f32 %v3577, %v3577
    %v3626 = vmul.f32 %v3582, %v3582
    %v3627 = vmul.f32 %v3587, %v3587
    %v3628 = vmul.f32 %v3592, %v3592
    %v3629 = vmul.f32 %v3597, %v3597
    %v3630 = vmul.f32 %v3602, %v3602
    %v3631 = vmul.f32 %v3607, %v3607
    %v3632 = vadd.f32 %v3624, %v3625
    %v3633 = vadd.f32 %v3632, %v3626
    %v3634 = vadd.f32 %v3633, %v3627
    %v3635 = vadd.f32 %v3634, %v3628
    %v3636 = vadd.f32 %v3635, %v3629
    %v3637 = vadd.f32 %v3636, %v3630
    %v3638 = vadd.f32 %v3637, %v3631
    %v3639 = vrot.slane %v3638, 4
    %v3640 = vadd.f32 %v3638, %v3639
    %v3641 = vrot.slane %v3640, 2
    %v3642 = vadd.f32 %v3640, %v3641
    %v3643 = vrot.slane %v3642, 1
    %v3644 = vadd.f32 %v3642, %v3643
    %v3645 = vadd.f32 %v3464, %v3644
    %3646 = vst [vmem:[#allocation3 + $0x180] sm:$0xff] %v3572
    %3647 = vst [vmem:[#allocation3 + $0x188] sm:$0xff] %v3577
    %3648 = vst [vmem:[#allocation3 + $0x190] sm:$0xff] %v3582
    %3649 = vst [vmem:[#allocation3 + $0x198] sm:$0xff] %v3587
    %3650 = vst [vmem:[#allocation3 + $0x1a0] sm:$0xff] %v3592
    %3651 = vst [vmem:[#allocation3 + $0x1a8] sm:$0xff] %v3597
    %3652 = vst [vmem:[#allocation3 + $0x1b0] sm:$0xff] %v3602
    %3653 = vst [vmem:[#allocation3 + $0x1b8] sm:$0xff] %v3607
    %v3654 = vld [vmem:[#allocation2 + $0x1c0] sm:$0xff]
    %v3655 = vld [vmem:[#allocation2 + $0x1c8] sm:$0xff]
    %v3656 = vld [vmem:[#allocation2 + $0x1d0] sm:$0xff]
    %v3657 = vld [vmem:[#allocation2 + $0x1d8] sm:$0xff]
    %v3658 = vld [vmem:[#allocation2 + $0x1e0] sm:$0xff]
    %v3659 = vld [vmem:[#allocation2 + $0x1e8] sm:$0xff]
    %v3660 = vld [vmem:[#allocation2 + $0x1f0] sm:$0xff]
    %v3661 = vld [vmem:[#allocation2 + $0x1f8] sm:$0xff]
    %v3662 = vsub.f32 %v3654, %v2364
    %v3663 = vsub.f32 %v3655, %v2364
    %v3664 = vsub.f32 %v3656, %v2364
    %v3665 = vsub.f32 %v3657, %v2364
    %v3666 = vsub.f32 %v3658, %v2364
    %v3667 = vsub.f32 %v3659, %v2364
    %v3668 = vsub.f32 %v3660, %v2364
    %v3669 = vsub.f32 %v3661, %v2364
    %v3670 = vmax.f32 %v3662, 0.0
    %v3671 = vmax.f32 %v3663, 0.0
    %v3672 = vmax.f32 %v3664, 0.0
    %v3673 = vmax.f32 %v3665, 0.0
    %v3674 = vmax.f32 %v3666, 0.0
    %v3675 = vmax.f32 %v3667, 0.0
    %v3676 = vmax.f32 %v3668, 0.0
    %v3677 = vmax.f32 %v3669, 0.0
    %v3678 = vmul.f32 %v3670, %v2370
    %v3679 = vmul.f32 %v3671, %v2370
    %v3680 = vmul.f32 %v3672, %v2370
    %v3681 = vmul.f32 %v3673, %v2370
    %v3682 = vmul.f32 %v3674, %v2370
    %v3683 = vmul.f32 %v3675, %v2370
    %v3684 = vmul.f32 %v3676, %v2370
    %v3685 = vmul.f32 %v3677, %v2370
    %3686 = vmatprep.subr.mxu0 0.0
    %3687 = vmatpush1.msra.mxu0 %v2371
    %3688 = vmatprep.subr.mxu0 0.0
    %3689 = vmatpush1.msra.mxu0 %v2372
    %3690 = vmatprep.subr.mxu0 0.0
    %3691 = vmatpush1.msra.mxu0 %v2373
    %3692 = vmatprep.subr.mxu0 0.0
    %3693 = vmatpush1.msra.mxu0 %v2374
    %3694 = vmatprep.subr.mxu0 0.0
    %3695 = vmatpush1.msra.mxu0 %v2375
    %3696 = vmatprep.subr.mxu0 0.0
    %3697 = vmatpush1.msra.mxu0 %v2376
    %3698 = vmatprep.subr.mxu0 0.0
    %3699 = vmatpush1.msra.mxu0 %v2377
    %3700 = vmatprep.subr.mxu0 0.0
    %3701 = vmatpush1.msra.mxu0 %v2378
    %3702 = vmatprep.subr.mxu0 0.0
    %3703 = vmatpush1.msra.mxu0 %v2379
    %3704 = vmatprep.subr.mxu0 0.0
    %3705 = vmatpush1.msra.mxu0 %v2380
    %3706 = vmatprep.subr.mxu0 0.0
    %3707 = vmatpush1.msra.mxu0 %v2381
    %3708 = vmatprep.subr.mxu0 0.0
    %3709 = vmatpush1.msra.mxu0 %v2382
    %3710 = vmatprep.subr.mxu0 0.0
    %3711 = vmatpush1.msra.mxu0 %v2383
    %3712 = vmatprep.subr.mxu0 0.0
    %3713 = vmatpush1.msra.mxu0 %v2384
    %3714 = vmatprep.subr.mxu0 0.0
    %3715 = vmatpush1.msra.mxu0 %v2385
    %3716 = vmatprep.subr.mxu0 0.0
    %3717 = vmatpush1.msra.mxu0 %v2386
    %3718 = vmatprep.subr.mxu0 0.0
    %3719 = vmatpush1.msra.mxu0 0.0
    %3720 = vmatprep.subr.mxu0 0.0
    %3721 = vmatpush1.msra.mxu0 0.0
    %3722 = vmatprep.subr.mxu0 0.0
    %3723 = vmatpush1.msra.mxu0 0.0
    %3724 = vmatprep.subr.mxu0 0.0
    %3725 = vmatpush1.msra.mxu0 0.0
    %3726 = vmatprep.subr.mxu0 0.0
    %3727 = vmatpush1.msra.mxu0 0.0
    %3728 = vmatprep.subr.mxu0 0.0
    %3729 = vmatpush1.msra.mxu0 0.0
    %3730 = vmatprep.subr.mxu0 0.0
    %3731 = vmatpush1.msra.mxu0 0.0
    %3732 = vmatprep.subr.mxu0 0.0
    %3733 = vmatpush1.msra.mxu0 0.0
    %3734 = vmatprep.subr.mxu0 0.0
    %3735 = vmatpush1.msra.mxu0 0.0
    %3736 = vmatprep.subr.mxu0 0.0
    %3737 = vmatpush1.msra.mxu0 0.0
    %3738 = vmatprep.subr.mxu0 0.0
    %3739 = vmatpush1.msra.mxu0 0.0
    %3740 = vmatprep.subr.mxu0 0.0
    %3741 = vmatpush1.msra.mxu0 0.0
    %3742 = vmatprep.subr.mxu0 0.0
    %3743 = vmatpush1.msra.mxu0 0.0
    %3744 = vmatprep.subr.mxu0 0.0
    %3745 = vmatpush1.msra.mxu0 0.0
    %3746 = vmatprep.subr.mxu0 0.0
    %3747 = vmatpush1.msra.mxu0 0.0
    %3748 = vmatprep.subr.mxu0 0.0
    %3749 = vmatpush1.msra.mxu0 0.0
    %3750 = vmatprep.mubr.f32.mxu0 0.0
    %3751 = vmatmul.mubr.f32.gmra.mrb[0].mxu0 %v3678
    %v3752 = vpop.f32.mrb[0].mxu0
    %v3753 = vadd.f32 0.0, %v3752
    %v3754 = vpop.f32.mrb[0].mxu0
    %3755 = vmatprep.mubr.f32.mxu0 0.0
    %3756 = vmatmul.mubr.f32.gmra.mrb[0].mxu0 %v3679
    %v3757 = vpop.f32.mrb[0].mxu0
    %v3758 = vadd.f32 0.0, %v3757
    %v3759 = vpop.f32.mrb[0].mxu0
    %3760 = vmatprep.mubr.f32.mxu0 0.0
    %3761 = vmatmul.mubr.f32.gmra.mrb[0].mxu0 %v3680
    %v3762 = vpop.f32.mrb[0].mxu0
    %v3763 = vadd.f32 0.0, %v3762
    %v3764 = vpop.f32.mrb[0].mxu0
    %3765 = vmatprep.mubr.f32.mxu0 0.0
    %3766 = vmatmul.mubr.f32.gmra.mrb[0].mxu0 %v3681
    %v3767 = vpop.f32.mrb[0].mxu0
    %v3768 = vadd.f32 0.0, %v3767
    %v3769 = vpop.f32.mrb[0].mxu0
    %3770 = vmatprep.mubr.f32.mxu0 0.0
    %3771 = vmatmul.mubr.f32.gmra.mrb[0].mxu0 %v3682
    %v3772 = vpop.f32.mrb[0].mxu0
    %v3773 = vadd.f32 0.0, %v3772
    %v3774 = vpop.f32.mrb[0].mxu0
    %3775 = vmatprep.mubr.f32.mxu0 0.0
    %3776 = vmatmul.mubr.f32.gmra.mrb[0].mxu0 %v3683
    %v3777 = vpop.f32.mrb[0].mxu0
    %v3778 = vadd.f32 0.0, %v3777
    %v3779 = vpop.f32.mrb[0].mxu0
    %3780 = vmatprep.mubr.f32.mxu0 0.0
    %3781 = vmatmul.mubr.f32.gmra.mrb[0].mxu0 %v3684
    %v3782 = vpop.f32.mrb[0].mxu0
    %v3783 = vadd.f32 0.0, %v3782
    %v3784 = vpop.f32.mrb[0].mxu0
    %3785 = vmatprep.mubr.f32.mxu0 0.0
    %3786 = vmatmul.mubr.f32.gmra.mrb[0].mxu0 %v3685
    %v3787 = vpop.f32.mrb[0].mxu0
    %v3788 = vadd.f32 0.0, %v3787
    %v3789 = vpop.f32.mrb[0].mxu0
    %3790 = vdwg.mxu0
    %v3791 = vadd.f32 %v3753, %v3758
    %v3792 = vadd.f32 %v3791, %v3763
    %v3793 = vadd.f32 %v3792, %v3768
    %v3794 = vadd.f32 %v3793, %v3773
    %v3795 = vadd.f32 %v3794, %v3778
    %v3796 = vadd.f32 %v3795, %v3783
    %v3797 = vadd.f32 %v3796, %v3788
    %v3798 = vrot.slane %v3797, 4
    %v3799 = vadd.f32 %v3797, %v3798
    %v3800 = vrot.slane %v3799, 2
    %v3801 = vadd.f32 %v3799, %v3800
    %v3802 = vrot.slane %v3801, 1
    %v3803 = vadd.f32 %v3801, %v3802
    %v3804 = vadd.f32 %v3623, %v3803
    %v3805 = vmul.f32 %v3753, %v3753
    %v3806 = vmul.f32 %v3758, %v3758
    %v3807 = vmul.f32 %v3763, %v3763
    %v3808 = vmul.f32 %v3768, %v3768
    %v3809 = vmul.f32 %v3773, %v3773
    %v3810 = vmul.f32 %v3778, %v3778
    %v3811 = vmul.f32 %v3783, %v3783
    %v3812 = vmul.f32 %v3788, %v3788
    %v3813 = vadd.f32 %v3805, %v3806
    %v3814 = vadd.f32 %v3813, %v3807
    %v3815 = vadd.f32 %v3814, %v3808
    %v3816 = vadd.f32 %v3815, %v3809
    %v3817 = vadd.f32 %v3816, %v3810
    %v3818 = vadd.f32 %v3817, %v3811
    %v3819 = vadd.f32 %v3818, %v3812
    %v3820 = vrot.slane %v3819, 4
    %v3821 = vadd.f32 %v3819, %v3820
    %v3822 = vrot.slane %v3821, 2
    %v3823 = vadd.f32 %v3821, %v3822
    %v3824 = vrot.slane %v3823, 1
    %v3825 = vadd.f32 %v3823, %v3824
    %v3826 = vadd.f32 %v3645, %v3825
    %3827 = vst [vmem:[#allocation3 + $0x1c0] sm:$0xff] %v3753
    %3828 = vst [vmem:[#allocation3 + $0x1c8] sm:$0xff] %v3758
    %3829 = vst [vmem:[#allocation3 + $0x1d0] sm:$0xff] %v3763
    %3830 = vst [vmem:[#allocation3 + $0x1d8] sm:$0xff] %v3768
    %3831 = vst [vmem:[#allocation3 + $0x1e0] sm:$0xff] %v3773
    %3832 = vst [vmem:[#allocation3 + $0x1e8] sm:$0xff] %v3778
    %3833 = vst [vmem:[#allocation3 + $0x1f0] sm:$0xff] %v3783
    %3834 = vst [vmem:[#allocation3 + $0x1f8] sm:$0xff] %v3788
    %v3835 = vmul.f32 %v3804, 0.001953125
    %v3836 = vmul.f32 %v3826, 0.001953125
    %v3837 = vmul.f32 %v3835, %v3835
    %v3838 = vsub.f32 %v3836, %v3837
    %v3839 = vmax.f32 %v3838, 0.0
    %v3840 = vadd.f32 %v3839, 1e-05
    %v3841 = vrsqrt.pop %v3840
    %v3842 = vld [vmem:[#allocation3] sm:$0xff]
    %v3843 = vld [vmem:[#allocation3 + $0x8] sm:$0xff]
    %v3844 = vld [vmem:[#allocation3 + $0x10] sm:$0xff]
    %v3845 = vld [vmem:[#allocation3 + $0x18] sm:$0xff]
    %v3846 = vld [vmem:[#allocation3 + $0x20] sm:$0xff]
    %v3847 = vld [vmem:[#allocation3 + $0x28] sm:$0xff]
    %v3848 = vld [vmem:[#allocation3 + $0x30] sm:$0xff]
    %v3849 = vld [vmem:[#allocation3 + $0x38] sm:$0xff]
    %v3850 = vsub.f32 %v3842, %v3835
    %v3851 = vsub.f32 %v3843, %v3835
    %v3852 = vsub.f32 %v3844, %v3835
    %v3853 = vsub.f32 %v3845, %v3835
    %v3854 = vsub.f32 %v3846, %v3835
    %v3855 = vsub.f32 %v3847, %v3835
    %v3856 = vsub.f32 %v3848, %v3835
    %v3857 = vsub.f32 %v3849, %v3835
    %v3858 = vmax.f32 %v3850, 0.0
    %v3859 = vmax.f32 %v3851, 0.0
    %v3860 = vmax.f32 %v3852, 0.0
    %v3861 = vmax.f32 %v3853, 0.0
    %v3862 = vmax.f32 %v3854, 0.0
    %v3863 = vmax.f32 %v3855, 0.0
    %v3864 = vmax.f32 %v3856, 0.0
    %v3865 = vmax.f32 %v3857, 0.0
    %v3866 = vmul.f32 %v3858, %v3841
    %v3867 = vmul.f32 %v3859, %v3841
    %v3868 = vmul.f32 %v3860, %v3841
    %v3869 = vmul.f32 %v3861, %v3841
    %v3870 = vmul.f32 %v3862, %v3841
    %v3871 = vmul.f32 %v3863, %v3841
    %v3872 = vmul.f32 %v3864, %v3841
    %v3873 = vmul.f32 %v3865, %v3841
    %3874 = vst [vmem:[#allocation7] sm:$0xff] %v3866
    %3875 = vst [vmem:[#allocation7 + $0x8] sm:$0xff] %v3867
    %3876 = vst [vmem:[#allocation7 + $0x10] sm:$0xff] %v3868
    %3877 = vst [vmem:[#allocation7 + $0x18] sm:$0xff] %v3869
    %3878 = vst [vmem:[#allocation7 + $0x100] sm:$0xff] %v3870
    %3879 = vst [vmem:[#allocation7 + $0x108] sm:$0xff] %v3871
    %3880 = vst [vmem:[#allocation7 + $0x110] sm:$0xff] %v3872
    %3881 = vst [vmem:[#allocation7 + $0x118] sm:$0xff] %v3873
    %v3882 = vld [vmem:[#allocation3 + $0x40] sm:$0xff]
    %v3883 = vld [vmem:[#allocation3 + $0x48] sm:$0xff]
    %v3884 = vld [vmem:[#allocation3 + $0x50] sm:$0xff]
    %v3885 = vld [vmem:[#allocation3 + $0x58] sm:$0xff]
    %v3886 = vld [vmem:[#allocation3 + $0x60] sm:$0xff]
    %v3887 = vld [vmem:[#allocation3 + $0x68] sm:$0xff]
    %v3888 = vld [vmem:[#allocation3 + $0x70] sm:$0xff]
    %v3889 = vld [vmem:[#allocation3 + $0x78] sm:$0xff]
    %v3890 = vsub.f32 %v3882, %v3835
    %v3891 = vsub.f32 %v3883, %v3835
    %v3892 = vsub.f32 %v3884, %v3835
    %v3893 = vsub.f32 %v3885, %v3835
    %v3894 = vsub.f32 %v3886, %v3835
    %v3895 = vsub.f32 %v3887, %v3835
    %v3896 = vsub.f32 %v3888, %v3835
    %v3897 = vsub.f32 %v3889, %v3835
    %v3898 = vmax.f32 %v3890, 0.0
    %v3899 = vmax.f32 %v3891, 0.0
    %v3900 = vmax.f32 %v3892, 0.0
    %v3901 = vmax.f32 %v3893, 0.0
    %v3902 = vmax.f32 %v3894, 0.0
    %v3903 = vmax.f32 %v3895, 0.0
    %v3904 = vmax.f32 %v3896, 0.0
    %v3905 = vmax.f32 %v3897, 0.0
    %v3906 = vmul.f32 %v3898, %v3841
    %v3907 = vmul.f32 %v3899, %v3841
    %v3908 = vmul.f32 %v3900, %v3841
    %v3909 = vmul.f32 %v3901, %v3841
    %v3910 = vmul.f32 %v3902, %v3841
    %v3911 = vmul.f32 %v3903, %v3841
    %v3912 = vmul.f32 %v3904, %v3841
    %v3913 = vmul.f32 %v3905, %v3841
    %s3914 = scalar_lea.vmem [#allocation7], 32
    %3915 = vst [vmem:[%s3914] sm:$0xff] %v3906
    %3916 = vst [vmem:[%s3914 + $0x8] sm:$0xff] %v3907
    %3917 = vst [vmem:[%s3914 + $0x10] sm:$0xff] %v3908
    %3918 = vst [vmem:[%s3914 + $0x18] sm:$0xff] %v3909
    %3919 = vst [vmem:[%s3914 + $0x100] sm:$0xff] %v3910
    %3920 = vst [vmem:[%s3914 + $0x108] sm:$0xff] %v3911
    %3921 = vst [vmem:[%s3914 + $0x110] sm:$0xff] %v3912
    %3922 = vst [vmem:[%s3914 + $0x118] sm:$0xff] %v3913
    %v3923 = vld [vmem:[#allocation3 + $0x80] sm:$0xff]
    %v3924 = vld [vmem:[#allocation3 + $0x88] sm:$0xff]
    %v3925 = vld [vmem:[#allocation3 + $0x90] sm:$0xff]
    %v3926 = vld [vmem:[#allocation3 + $0x98] sm:$0xff]
    %v3927 = vld [vmem:[#allocation3 + $0xa0] sm:$0xff]
    %v3928 = vld [vmem:[#allocation3 + $0xa8] sm:$0xff]
    %v3929 = vld [vmem:[#allocation3 + $0xb0] sm:$0xff]
    %v3930 = vld [vmem:[#allocation3 + $0xb8] sm:$0xff]
    %v3931 = vsub.f32 %v3923, %v3835
    %v3932 = vsub.f32 %v3924, %v3835
    %v3933 = vsub.f32 %v3925, %v3835
    %v3934 = vsub.f32 %v3926, %v3835
    %v3935 = vsub.f32 %v3927, %v3835
    %v3936 = vsub.f32 %v3928, %v3835
    %v3937 = vsub.f32 %v3929, %v3835
    %v3938 = vsub.f32 %v3930, %v3835
    %v3939 = vmax.f32 %v3931, 0.0
    %v3940 = vmax.f32 %v3932, 0.0
    %v3941 = vmax.f32 %v3933, 0.0
    %v3942 = vmax.f32 %v3934, 0.0
    %v3943 = vmax.f32 %v3935, 0.0
    %v3944 = vmax.f32 %v3936, 0.0
    %v3945 = vmax.f32 %v3937, 0.0
    %v3946 = vmax.f32 %v3938, 0.0
    %v3947 = vmul.f32 %v3939, %v3841
    %v3948 = vmul.f32 %v3940, %v3841
    %v3949 = vmul.f32 %v3941, %v3841
    %v3950 = vmul.f32 %v3942, %v3841
    %v3951 = vmul.f32 %v3943, %v3841
    %v3952 = vmul.f32 %v3944, %v3841
    %v3953 = vmul.f32 %v3945, %v3841
    %v3954 = vmul.f32 %v3946, %v3841
    %s3955 = scalar_lea.vmem [#allocation7], 64
    %3956 = vst [vmem:[%s3955] sm:$0xff] %v3947
    %3957 = vst [vmem:[%s3955 + $0x8] sm:$0xff] %v3948
    %3958 = vst [vmem:[%s3955 + $0x10] sm:$0xff] %v3949
    %3959 = vst [vmem:[%s3955 + $0x18] sm:$0xff] %v3950
    %3960 = vst [vmem:[%s3955 + $0x100] sm:$0xff] %v3951
    %3961 = vst [vmem:[%s3955 + $0x108] sm:$0xff] %v3952
    %3962 = vst [vmem:[%s3955 + $0x110] sm:$0xff] %v3953
    %3963 = vst [vmem:[%s3955 + $0x118] sm:$0xff] %v3954
    %v3964 = vld [vmem:[#allocation3 + $0xc0] sm:$0xff]
    %v3965 = vld [vmem:[#allocation3 + $0xc8] sm:$0xff]
    %v3966 = vld [vmem:[#allocation3 + $0xd0] sm:$0xff]
    %v3967 = vld [vmem:[#allocation3 + $0xd8] sm:$0xff]
    %v3968 = vld [vmem:[#allocation3 + $0xe0] sm:$0xff]
    %v3969 = vld [vmem:[#allocation3 + $0xe8] sm:$0xff]
    %v3970 = vld [vmem:[#allocation3 + $0xf0] sm:$0xff]
    %v3971 = vld [vmem:[#allocation3 + $0xf8] sm:$0xff]
    %v3972 = vsub.f32 %v3964, %v3835
    %v3973 = vsub.f32 %v3965, %v3835
    %v3974 = vsub.f32 %v3966, %v3835
    %v3975 = vsub.f32 %v3967, %v3835
    %v3976 = vsub.f32 %v3968, %v3835
    %v3977 = vsub.f32 %v3969, %v3835
    %v3978 = vsub.f32 %v3970, %v3835
    %v3979 = vsub.f32 %v3971, %v3835
    %v3980 = vmax.f32 %v3972, 0.0
    %v3981 = vmax.f32 %v3973, 0.0
    %v3982 = vmax.f32 %v3974, 0.0
    %v3983 = vmax.f32 %v3975, 0.0
    %v3984 = vmax.f32 %v3976, 0.0
    %v3985 = vmax.f32 %v3977, 0.0
    %v3986 = vmax.f32 %v3978, 0.0
    %v3987 = vmax.f32 %v3979, 0.0
    %v3988 = vmul.f32 %v3980, %v3841
    %v3989 = vmul.f32 %v3981, %v3841
    %v3990 = vmul.f32 %v3982, %v3841
    %v3991 = vmul.f32 %v3983, %v3841
    %v3992 = vmul.f32 %v3984, %v3841
    %v3993 = vmul.f32 %v3985, %v3841
    %v3994 = vmul.f32 %v3986, %v3841
    %v3995 = vmul.f32 %v3987, %v3841
    %s3996 = scalar_lea.vmem [#allocation7], 96
    %3997 = vst [vmem:[%s3996] sm:$0xff] %v3988
    %3998 = vst [vmem:[%s3996 + $0x8] sm:$0xff] %v3989
    %3999 = vst [vmem:[%s3996 + $0x10] sm:$0xff] %v3990
    %4000 = vst [vmem:[%s3996 + $0x18] sm:$0xff] %v3991
    %4001 = vst [vmem:[%s3996 + $0x100] sm:$0xff] %v3992
    %4002 = vst [vmem:[%s3996 + $0x108] sm:$0xff] %v3993
    %4003 = vst [vmem:[%s3996 + $0x110] sm:$0xff] %v3994
    %4004 = vst [vmem:[%s3996 + $0x118] sm:$0xff] %v3995
    %v4005 = vld [vmem:[#allocation3 + $0x100] sm:$0xff]
    %v4006 = vld [vmem:[#allocation3 + $0x108] sm:$0xff]
    %v4007 = vld [vmem:[#allocation3 + $0x110] sm:$0xff]
    %v4008 = vld [vmem:[#allocation3 + $0x118] sm:$0xff]
    %v4009 = vld [vmem:[#allocation3 + $0x120] sm:$0xff]
    %v4010 = vld [vmem:[#allocation3 + $0x128] sm:$0xff]
    %v4011 = vld [vmem:[#allocation3 + $0x130] sm:$0xff]
    %v4012 = vld [vmem:[#allocation3 + $0x138] sm:$0xff]
    %v4013 = vsub.f32 %v4005, %v3835
    %v4014 = vsub.f32 %v4006, %v3835
    %v4015 = vsub.f32 %v4007, %v3835
    %v4016 = vsub.f32 %v4008, %v3835
    %v4017 = vsub.f32 %v4009, %v3835
    %v4018 = vsub.f32 %v4010, %v3835
    %v4019 = vsub.f32 %v4011, %v3835
    %v4020 = vsub.f32 %v4012, %v3835
    %v4021 = vmax.f32 %v4013, 0.0
    %v4022 = vmax.f32 %v4014, 0.0
    %v4023 = vmax.f32 %v4015, 0.0
    %v4024 = vmax.f32 %v4016, 0.0
    %v4025 = vmax.f32 %v4017, 0.0
    %v4026 = vmax.f32 %v4018, 0.0
    %v4027 = vmax.f32 %v4019, 0.0
    %v4028 = vmax.f32 %v4020, 0.0
    %v4029 = vmul.f32 %v4021, %v3841
    %v4030 = vmul.f32 %v4022, %v3841
    %v4031 = vmul.f32 %v4023, %v3841
    %v4032 = vmul.f32 %v4024, %v3841
    %v4033 = vmul.f32 %v4025, %v3841
    %v4034 = vmul.f32 %v4026, %v3841
    %v4035 = vmul.f32 %v4027, %v3841
    %v4036 = vmul.f32 %v4028, %v3841
    %s4037 = scalar_lea.vmem [#allocation7], 128
    %4038 = vst [vmem:[%s4037] sm:$0xff] %v4029
    %4039 = vst [vmem:[%s4037 + $0x8] sm:$0xff] %v4030
    %4040 = vst [vmem:[%s4037 + $0x10] sm:$0xff] %v4031
    %4041 = vst [vmem:[%s4037 + $0x18] sm:$0xff] %v4032
    %4042 = vst [vmem:[%s4037 + $0x100] sm:$0xff] %v4033
    %4043 = vst [vmem:[%s4037 + $0x108] sm:$0xff] %v4034
    %4044 = vst [vmem:[%s4037 + $0x110] sm:$0xff] %v4035
    %4045 = vst [vmem:[%s4037 + $0x118] sm:$0xff] %v4036
    %v4046 = vld [vmem:[#allocation3 + $0x140] sm:$0xff]
    %v4047 = vld [vmem:[#allocation3 + $0x148] sm:$0xff]
    %v4048 = vld [vmem:[#allocation3 + $0x150] sm:$0xff]
    %v4049 = vld [vmem:[#allocation3 + $0x158] sm:$0xff]
    %v4050 = vld [vmem:[#allocation3 + $0x160] sm:$0xff]
    %v4051 = vld [vmem:[#allocation3 + $0x168] sm:$0xff]
    %v4052 = vld [vmem:[#allocation3 + $0x170] sm:$0xff]
    %v4053 = vld [vmem:[#allocation3 + $0x178] sm:$0xff]
    %v4054 = vsub.f32 %v4046, %v3835
    %v4055 = vsub.f32 %v4047, %v3835
    %v4056 = vsub.f32 %v4048, %v3835
    %v4057 = vsub.f32 %v4049, %v3835
    %v4058 = vsub.f32 %v4050, %v3835
    %v4059 = vsub.f32 %v4051, %v3835
    %v4060 = vsub.f32 %v4052, %v3835
    %v4061 = vsub.f32 %v4053, %v3835
    %v4062 = vmax.f32 %v4054, 0.0
    %v4063 = vmax.f32 %v4055, 0.0
    %v4064 = vmax.f32 %v4056, 0.0
    %v4065 = vmax.f32 %v4057, 0.0
    %v4066 = vmax.f32 %v4058, 0.0
    %v4067 = vmax.f32 %v4059, 0.0
    %v4068 = vmax.f32 %v4060, 0.0
    %v4069 = vmax.f32 %v4061, 0.0
    %v4070 = vmul.f32 %v4062, %v3841
    %v4071 = vmul.f32 %v4063, %v3841
    %v4072 = vmul.f32 %v4064, %v3841
    %v4073 = vmul.f32 %v4065, %v3841
    %v4074 = vmul.f32 %v4066, %v3841
    %v4075 = vmul.f32 %v4067, %v3841
    %v4076 = vmul.f32 %v4068, %v3841
    %v4077 = vmul.f32 %v4069, %v3841
    %s4078 = scalar_lea.vmem [#allocation7], 160
    %4079 = vst [vmem:[%s4078] sm:$0xff] %v4070
    %4080 = vst [vmem:[%s4078 + $0x8] sm:$0xff] %v4071
    %4081 = vst [vmem:[%s4078 + $0x10] sm:$0xff] %v4072
    %4082 = vst [vmem:[%s4078 + $0x18] sm:$0xff] %v4073
    %4083 = vst [vmem:[%s4078 + $0x100] sm:$0xff] %v4074
    %4084 = vst [vmem:[%s4078 + $0x108] sm:$0xff] %v4075
    %4085 = vst [vmem:[%s4078 + $0x110] sm:$0xff] %v4076
    %4086 = vst [vmem:[%s4078 + $0x118] sm:$0xff] %v4077
    %v4087 = vld [vmem:[#allocation3 + $0x180] sm:$0xff]
    %v4088 = vld [vmem:[#allocation3 + $0x188] sm:$0xff]
    %v4089 = vld [vmem:[#allocation3 + $0x190] sm:$0xff]
    %v4090 = vld [vmem:[#allocation3 + $0x198] sm:$0xff]
    %v4091 = vld [vmem:[#allocation3 + $0x1a0] sm:$0xff]
    %v4092 = vld [vmem:[#allocation3 + $0x1a8] sm:$0xff]
    %v4093 = vld [vmem:[#allocation3 + $0x1b0] sm:$0xff]
    %v4094 = vld [vmem:[#allocation3 + $0x1b8] sm:$0xff]
    %v4095 = vsub.f32 %v4087, %v3835
    %v4096 = vsub.f32 %v4088, %v3835
    %v4097 = vsub.f32 %v4089, %v3835
    %v4098 = vsub.f32 %v4090, %v3835
    %v4099 = vsub.f32 %v4091, %v3835
    %v4100 = vsub.f32 %v4092, %v3835
    %v4101 = vsub.f32 %v4093, %v3835
    %v4102 = vsub.f32 %v4094, %v3835
    %v4103 = vmax.f32 %v4095, 0.0
    %v4104 = vmax.f32 %v4096, 0.0
    %v4105 = vmax.f32 %v4097, 0.0
    %v4106 = vmax.f32 %v4098, 0.0
    %v4107 = vmax.f32 %v4099, 0.0
    %v4108 = vmax.f32 %v4100, 0.0
    %v4109 = vmax.f32 %v4101, 0.0
    %v4110 = vmax.f32 %v4102, 0.0
    %v4111 = vmul.f32 %v4103, %v3841
    %v4112 = vmul.f32 %v4104, %v3841
    %v4113 = vmul.f32 %v4105, %v3841
    %v4114 = vmul.f32 %v4106, %v3841
    %v4115 = vmul.f32 %v4107, %v3841
    %v4116 = vmul.f32 %v4108, %v3841
    %v4117 = vmul.f32 %v4109, %v3841
    %v4118 = vmul.f32 %v4110, %v3841
    %s4119 = scalar_lea.vmem [#allocation7], 192
    %4120 = vst [vmem:[%s4119] sm:$0xff] %v4111
    %4121 = vst [vmem:[%s4119 + $0x8] sm:$0xff] %v4112
    %4122 = vst [vmem:[%s4119 + $0x10] sm:$0xff] %v4113
    %4123 = vst [vmem:[%s4119 + $0x18] sm:$0xff] %v4114
    %4124 = vst [vmem:[%s4119 + $0x100] sm:$0xff] %v4115
    %4125 = vst [vmem:[%s4119 + $0x108] sm:$0xff] %v4116
    %4126 = vst [vmem:[%s4119 + $0x110] sm:$0xff] %v4117
    %4127 = vst [vmem:[%s4119 + $0x118] sm:$0xff] %v4118
    %v4128 = vld [vmem:[#allocation3 + $0x1c0] sm:$0xff]
    %v4129 = vld [vmem:[#allocation3 + $0x1c8] sm:$0xff]
    %v4130 = vld [vmem:[#allocation3 + $0x1d0] sm:$0xff]
    %v4131 = vld [vmem:[#allocation3 + $0x1d8] sm:$0xff]
    %v4132 = vld [vmem:[#allocation3 + $0x1e0] sm:$0xff]
    %v4133 = vld [vmem:[#allocation3 + $0x1e8] sm:$0xff]
    %v4134 = vld [vmem:[#allocation3 + $0x1f0] sm:$0xff]
    %v4135 = vld [vmem:[#allocation3 + $0x1f8] sm:$0xff]
    %v4136 = vsub.f32 %v4128, %v3835
    %v4137 = vsub.f32 %v4129, %v3835
    %v4138 = vsub.f32 %v4130, %v3835
    %v4139 = vsub.f32 %v4131, %v3835
    %v4140 = vsub.f32 %v4132, %v3835
    %v4141 = vsub.f32 %v4133, %v3835
    %v4142 = vsub.f32 %v4134, %v3835
    %v4143 = vsub.f32 %v4135, %v3835
    %v4144 = vmax.f32 %v4136, 0.0
    %v4145 = vmax.f32 %v4137, 0.0
    %v4146 = vmax.f32 %v4138, 0.0
    %v4147 = vmax.f32 %v4139, 0.0
    %v4148 = vmax.f32 %v4140, 0.0
    %v4149 = vmax.f32 %v4141, 0.0
    %v4150 = vmax.f32 %v4142, 0.0
    %v4151 = vmax.f32 %v4143, 0.0
    %v4152 = vmul.f32 %v4144, %v3841
    %v4153 = vmul.f32 %v4145, %v3841
    %v4154 = vmul.f32 %v4146, %v3841
    %v4155 = vmul.f32 %v4147, %v3841
    %v4156 = vmul.f32 %v4148, %v3841
    %v4157 = vmul.f32 %v4149, %v3841
    %v4158 = vmul.f32 %v4150, %v3841
    %v4159 = vmul.f32 %v4151, %v3841
    %s4160 = scalar_lea.vmem [#allocation7], 224
    %4161 = vst [vmem:[%s4160] sm:$0xff] %v4152
    %4162 = vst [vmem:[%s4160 + $0x8] sm:$0xff] %v4153
    %4163 = vst [vmem:[%s4160 + $0x10] sm:$0xff] %v4154
    %4164 = vst [vmem:[%s4160 + $0x18] sm:$0xff] %v4155
    %4165 = vst [vmem:[%s4160 + $0x100] sm:$0xff] %v4156
    %4166 = vst [vmem:[%s4160 + $0x108] sm:$0xff] %v4157
    %4167 = vst [vmem:[%s4160 + $0x110] sm:$0xff] %v4158
    %4168 = vst [vmem:[%s4160 + $0x118] sm:$0xff] %v4159
    // Predicated region
    $region18: #{depthwise_separable_forward.1} parent=1 // pred_check
      _
    $region19: #{depthwise_separable_forward.1} parent=1 // pred_check_branch
      %4170 = sbr.rel (0) target = $region21
    $region20: #{depthwise_separable_forward.1} parent=1 // pred_region
      %s4172 = ssub.s32 8192, 8192
      %4173 = vsyncadd [#allocation6], %s4172
      %s4174 = sshll.u32 [#allocation7], 4
      %s4175 = int_to_ptr.vmem [resolvable:$true] %s4174
      %4180 = dma.vmem_to_hbm [thread:$0]  %s4175, 8192, %s3, [#allocation6], 128, 128, 8
    $region21: #{depthwise_separable_forward.1} parent=1 // pred_fallthru
      _
    // Predicated region
    $region22: #{depthwise_separable_forward.1} parent=1 // pred_check
      _
    $region23: #{depthwise_separable_forward.1} parent=1 // pred_check_branch
      %4182 = sbr.rel (0) target = $region25
    $region24: #{depthwise_separable_forward.1} parent=1 // pred_region
      %4183 = dma.done [#allocation6], 8192
    $region25: #{depthwise_separable_forward.1} parent=1 // pred_fallthru
      _
    %4184 = vsyncpa [#allocation5], 1
    %4185 = vsyncpa [#allocation6], 1

</llo_original>
